<compile_context>
chip_gen: v5e
topology: v5e:2x2
jax: 0.10.0
libtpu: 0.0.40
codegen_flags: <defaults>
</compile_context>

<pallas_src>
import functools as ft

import jax
import jax.numpy as jnp
from jax.experimental import pallas as pl
from jax.experimental.pallas import tpu as pltpu


def _round_up(x, m):
    return (x + m - 1) // m * m


# ---------------------------------------------------------------------------
# Fused GEMM kernel:  o = post(act(sum_i(a_i) @ w + bias + add), skip, parm)
# ---------------------------------------------------------------------------

def _gemm_fused_kernel(*refs, n_a, has_bias, has_add, has_skip, slope):
    a_refs = refs[:n_a]
    pos = n_a
    w_ref = refs[pos]; pos += 1
    bias_ref = add_ref = skip_ref = parm_ref = None
    if has_bias:
        bias_ref = refs[pos]; pos += 1
    if has_add:
        add_ref = refs[pos]; pos += 1
    if has_skip:
        skip_ref = refs[pos]; parm_ref = refs[pos + 1]; pos += 2
    o_ref = refs[pos]
    acc_ref = refs[pos + 1]

    k = pl.program_id(1)

    @pl.when(k == 0)
    def _init():
        acc_ref[...] = jnp.zeros_like(acc_ref)

    if n_a == 1:
        a = a_refs[0][...]
    else:
        # Sum of the 4 pooling taps (weights are pre-scaled by 0.25 outside).
        s = a_refs[0][...].astype(jnp.float32)
        for r in a_refs[1:]:
            s = s + r[...].astype(jnp.float32)
        a = s.astype(a_refs[0].dtype)

    acc_ref[...] += jnp.dot(a, w_ref[...], preferred_element_type=jnp.float32)

    @pl.when(k == pl.num_programs(1) - 1)
    def _finalize():
        acc = acc_ref[...]
        if has_bias:
            acc = acc + bias_ref[...].astype(jnp.float32)
        if has_add:
            acc = acc + add_ref[...].astype(jnp.float32)
        if slope is not None:
            acc = jnp.where(acc > 0, acc, slope * acc)
        if has_skip:
            acc = skip_ref[...].astype(jnp.float32) + parm_ref[...] * acc
        o_ref[...] = acc.astype(o_ref.dtype)


_TM_MAX = 512        # big M tiles: K,N are small here, amortize grid overhead
_TK_TILE = 512       # K tile (only used when K is large)


def pallas_gemm(a_list, w, *, bias=None, add=None, skip=None, parm=None,
                slope=None, out_dtype=jnp.bfloat16):
    """out = post(act(sum(a_list) @ w + bias + add), skip, parm).

    a_list: list of (M, K) activation matrices (summed in-kernel).
    w: (K, N).  bias: (N,).  add/skip: (M, N).  parm: scalar array.
    bf16 MXU operands, fp32 VMEM accumulator, fused epilogue.
    """
    M, K = a_list[0].shape
    N = w.shape[1]

    Mp = _round_up(M, 8)
    TM = min(Mp, _TM_MAX)
    Mp = _round_up(Mp, TM)

    if K > 2 * _TK_TILE:
        TK = _TK_TILE
        Kp = _round_up(K, TK)
    else:
        TK = K
        Kp = K

    def pad_rows(x):
        return jnp.pad(x, ((0, Mp - x.shape[0]), (0, 0))) if Mp != x.shape[0] else x

    a_list = [pad_rows(a.astype(jnp.bfloat16)) for a in a_list]
    w = w.astype(jnp.bfloat16)
    if Kp != K:
        a_list = [jnp.pad(a, ((0, 0), (0, Kp - K))) for a in a_list]
        w = jnp.pad(w, ((0, Kp - K), (0, 0)))

    grid = (Mp // TM, Kp // TK)

    operands = list(a_list)
    in_specs = [pl.BlockSpec((TM, TK), lambda i, k: (i, k)) for _ in a_list]
    operands.append(w)
    in_specs.append(pl.BlockSpec((TK, N), lambda i, k: (k, 0)))

    has_bias = bias is not None
    has_add = add is not None
    has_skip = skip is not None
    if has_bias:
        operands.append(bias.reshape(1, N).astype(jnp.float32))
        in_specs.append(pl.BlockSpec((1, N), lambda i, k: (0, 0)))
    if has_add:
        operands.append(pad_rows(add.astype(jnp.float32)))
        in_specs.append(pl.BlockSpec((TM, N), lambda i, k: (i, 0)))
    if has_skip:
        operands.append(pad_rows(skip))
        in_specs.append(pl.BlockSpec((TM, N), lambda i, k: (i, 0)))
        operands.append(parm.reshape(1, 1).astype(jnp.float32))
        in_specs.append(pl.BlockSpec((1, 1), lambda i, k: (0, 0)))

    kernel = ft.partial(_gemm_fused_kernel, n_a=len(a_list), has_bias=has_bias,
                        has_add=has_add, has_skip=has_skip, slope=slope)

    out = pl.pallas_call(
        kernel,
        out_shape=jax.ShapeDtypeStruct((Mp, N), out_dtype),
        grid_spec=pltpu.PrefetchScalarGridSpec(
            num_scalar_prefetch=0,
            grid=grid,
            in_specs=in_specs,
            out_specs=pl.BlockSpec((TM, N), lambda i, k: (i, 0)),
            scratch_shapes=[pltpu.VMEM((TM, N), jnp.float32)]),
        compiler_params=pltpu.CompilerParams(
            dimension_semantics=("parallel", "arbitrary")),
    )(*operands)
    return out[:M]


# ---------------------------------------------------------------------------
# Lane-dense elementwise AvgPool2d(2)  (identity-head skip path)
# ---------------------------------------------------------------------------

def _avgpool_kernel(a_ref, b_ref, c_ref, d_ref, o_ref):
    s = (a_ref[...].astype(jnp.float32) + b_ref[...].astype(jnp.float32)
         + c_ref[...].astype(jnp.float32) + d_ref[...].astype(jnp.float32))
    o_ref[...] = (0.25 * s).astype(o_ref.dtype)


def pallas_avgpool2(x):
    """nn.AvgPool2d(2) (floor semantics) on NHWC, lane-dense (rows, 128)."""
    N, H, W, C = x.shape
    Ho, Wo = H // 2, W // 2
    xc = x[:, :2 * Ho, :2 * Wo, :]          # crop (handles odd H/W like torch)
    flat_views = [xc[:, di::2, dj::2, :].reshape(-1)
                  for di in (0, 1) for dj in (0, 1)]
    n = N * Ho * Wo * C
    LANE = 128
    MAX_ROWS = 1024
    n_pad = _round_up(n, 8 * LANE)
    rows = n_pad // LANE
    if rows > MAX_ROWS:
        n_pad = _round_up(n, MAX_ROWS * LANE)
        rows = n_pad // LANE
        tr = MAX_ROWS
    else:
        tr = rows

    def prep(v):
        if n_pad != n:
            v = jnp.concatenate([v, jnp.zeros((n_pad - n,), v.dtype)])
        return v.reshape(rows, LANE)

    a, b, c, d = (prep(v) for v in flat_views)
    out = pl.pallas_call(
        _avgpool_kernel,
        out_shape=jax.ShapeDtypeStruct((rows, LANE), x.dtype),
        grid=(rows // tr,),
        in_specs=[pl.BlockSpec((tr, LANE), lambda i: (i, 0)) for _ in range(4)],
        out_specs=pl.BlockSpec((tr, LANE), lambda i: (i, 0)),
        compiler_params=pltpu.CompilerParams(dimension_semantics=("parallel",)),
    )(a, b, c, d)
    return out.reshape(-1)[:n].reshape(N, Ho, Wo, C)


# ---------------------------------------------------------------------------
# Conv2d = im2col (JAX glue) + fused Pallas GEMM
# ---------------------------------------------------------------------------

def _im2col(x, kh, kw, stride, pad):
    if pad > 0:
        x = jnp.pad(x, ((0, 0), (pad, pad), (pad, pad), (0, 0)))
    N, Hp, Wp, C = x.shape
    Ho = (Hp - kh) // stride + 1
    Wo = (Wp - kw) // stride + 1
    cols = []
    for i in range(kh):
        for j in range(kw):
            cols.append(x[:, i:i + (Ho - 1) * stride + 1:stride,
                           j:j + (Wo - 1) * stride + 1:stride, :])
    patches = jnp.stack(cols, axis=3)                  # (N, Ho, Wo, kh*kw, C)
    return patches.reshape(N * Ho * Wo, kh * kw * C), (N, Ho, Wo)


def conv2d(x, w_oihw, bias=None, *, stride, pad, slope=None,
           add=None, skip=None, parm=None, out_dtype=jnp.bfloat16):
    """x: NHWC; w_oihw: PyTorch layout (Cout, Cin, KH, KW).  Epilogue fusions
    (bias, add, LeakyReLU, skip + parm * body) are handled by pallas_gemm."""
    Cout, Cin, KH, KW = w_oihw.shape
    if KH == 1 and KW == 1 and stride == 1 and pad == 0:
        N, H, W, _ = x.shape
        a = x.reshape(N * H * W, Cin)
        Ho, Wo = H, W
    else:
        a, (N, Ho, Wo) = _im2col(x, KH, KW, stride, pad)
    wmat = jnp.transpose(w_oihw, (2, 3, 1, 0)).reshape(KH * KW * Cin, Cout)
    out = pallas_gemm([a], wmat, bias=bias, add=add, skip=skip, parm=parm,
                      slope=slope, out_dtype=out_dtype)
    return out.reshape(N, Ho, Wo, Cout)


def pool_conv1x1(x, w_oihw, bias, *, out_dtype=jnp.bfloat16):
    """AvgPool2d(2) -> Conv1x1 fused into one GEMM.  Pooling and a 1x1 conv
    commute, so the 0.25 scale is folded into the weights and the 4 pooling
    taps are summed inside the kernel."""
    N, H, W, C = x.shape
    Cout = w_oihw.shape[0]
    Ho, Wo = H // 2, W // 2
    xc = x[:, :2 * Ho, :2 * Wo, :]
    views = [xc[:, di::2, dj::2, :].reshape(N * Ho * Wo, C)
             for di in (0, 1) for dj in (0, 1)]
    wmat = 0.25 * jnp.transpose(w_oihw, (2, 3, 1, 0)).reshape(C, Cout).astype(jnp.float32)
    out = pallas_gemm(views, wmat, bias=bias, out_dtype=out_dtype)
    return out.reshape(N, Ho, Wo, Cout)


# ---------------------------------------------------------------------------
# CONCATBLOCK tail helper: exact per-position contribution of the broadcast T
# channels to the 3x3 conv (no (B,H,W,tdf) broadcast / concat materialized).
# ---------------------------------------------------------------------------

def _t_contribution(t, w_s_oihw, H, W):
    """t: (B, tdf); w_s_oihw: (oc, tdf, 3, 3) — the T-channel part of tail_w1.
    Returns (B*H*W, oc) fp32, exact including zero-padding borders."""
    oc, tdf, KH, KW = w_s_oihw.shape
    ph = pw = 1
    ho = jnp.arange(H); wo = jnp.arange(W)
    ii = jnp.arange(KH); jj = jnp.arange(KW)
    vh = ((ho[:, None] + ii[None, :] - ph) >= 0) & ((ho[:, None] + ii[None, :] - ph) < H)
    vw = ((wo[:, None] + jj[None, :] - pw) >= 0) & ((wo[:, None] + jj[None, :] - pw) < W)
    mask = (vh[:, None, :, None] & vw[None, :, None, :]).astype(jnp.float32)  # (H,W,KH,KW)
    wtap = jnp.transpose(w_s_oihw, (2, 3, 1, 0)).astype(jnp.float32)          # (KH,KW,tdf,oc)
    Mtab = jnp.einsum('hwij,ijco->hwco', mask, wtap)                          # (H,W,tdf,oc)
    contrib = jnp.einsum('bc,hwco->bhwo', t.astype(jnp.float32), Mtab)        # (B,H,W,oc)
    return contrib.reshape(-1, oc)


# ---------------------------------------------------------------------------
# Module forward (DOWNBLOCK / CONCATBLOCK / DISCRIMINATOR)
# ---------------------------------------------------------------------------

def downblock_forward(x, blk):
    oc = blk["body_w1"].shape[0]
    # skip path: head (1x1 conv or identity) -> AvgPool2d(2), fused when conv.
    if blk["head_w"] is not None:
        skip = pool_conv1x1(x, blk["head_w"], blk["head_b"])
    else:
        skip = pallas_avgpool2(x)
    # body path: Conv4x4 s2 p1 -> LReLU -> Conv3x3 s1 p1 -> LReLU,
    # with the residual merge (skip + parm * body) fused into the 2nd GEMM.
    b = conv2d(x, blk["body_w1"], stride=2, pad=1, slope=0.2)
    N, Ho, Wo, _ = b.shape
    out = conv2d(b, blk["body_w2"], stride=1, pad=1, slope=0.2,
                 skip=skip.reshape(N * Ho * Wo, oc), parm=blk["parm"])
    return out


def discriminator_forward(params, X_nchw, T):
    x = jnp.transpose(X_nchw, (0, 2, 3, 1)).astype(jnp.bfloat16)   # NCHW -> NHWC
    t = T.T.astype(jnp.float32)                                     # (tdf,B) -> (B,tdf)

    # head: Conv3x3 s1 p1 (with bias, no activation)
    x = conv2d(x, params["head_w"], bias=params["head_b"], stride=1, pad=1)

    # body: DOWNBLOCKs
    for blk in params["blocks"]:
        x = downblock_forward(x, blk)

    # tail: CONCATBLOCK.  conv3x3([x ; S]) = conv3x3(x, w_x) + contribution(t)
    # (S is spatially constant per batch), then LReLU, then Conv4x4 p0.
    B, H, W, C = x.shape
    w1 = params["tail_w1"]
    w1_x = w1[:, :C, :, :]
    w1_s = w1[:, C:, :, :]
    contrib = _t_contribution(t, w1_s, H, W)                        # (B*H*W, oc)
    y = conv2d(x, w1_x, stride=1, pad=1, slope=0.2, add=contrib)
    y = conv2d(y, params["tail_w2"], stride=1, pad=0, out_dtype=jnp.float32)
    return jnp.transpose(y, (0, 3, 1, 2))                           # back to NCHW


# ---------------------------------------------------------------------------
# Deterministic parameter init (matches the module's __init__ shapes)
# ---------------------------------------------------------------------------

def _conv_init(key, cout, cin, kh, kw, scale=0.1):
    return scale * jax.random.normal(key, (cout, cin, kh, kw), jnp.float32)


def init_params(key, icn, ndf, tdf, min_idx, nb_dblocks):
    keys = iter(jax.random.split(key, 4 + 4 * nb_dblocks))
    params = {}
    params["head_w"] = _conv_init(next(keys), ndf, icn, 3, 3)
    params["head_b"] = 0.1 * jax.random.normal(next(keys), (ndf,), jnp.float32)

    blocks = []
    for idx in range(nb_dblocks):
        ic = ndf * 2 ** min(min_idx, idx)
        oc = ndf * 2 ** min(min_idx, idx + 1)
        blk = {}
        if ic != oc:
            blk["head_w"] = _conv_init(next(keys), oc, ic, 1, 1)
            blk["head_b"] = 0.1 * jax.random.normal(next(keys), (oc,), jnp.float32)
        else:  # nn.Identity
            blk["head_w"] = None
            blk["head_b"] = None
            next(keys); next(keys)
        blk["body_w1"] = _conv_init(next(keys), oc, ic, 4, 4)
        blk["body_w2"] = _conv_init(next(keys), oc, oc, 3, 3)
        blk["parm"] = jnp.zeros((1,), jnp.float32)   # nn.Parameter(th.zeros(1))
        blocks.append(blk)
    params["blocks"] = blocks

    ic_t = ndf * 2 ** min_idx
    oc_t = ndf * 2
    params["tail_w1"] = _conv_init(next(keys), oc_t, ic_t + tdf, 3, 3)
    params["tail_w2"] = _conv_init(next(keys), 1, oc_t, 4, 4)
    return params


# ---------------------------------------------------------------------------

if __name__ == "__main__":
    icn, ndf, tdf, min_idx, nb_dblocks = 3, 4, 4, 1, 2
    B, H, W = 2, 16, 16

    key = jax.random.PRNGKey(0)
    kp, kx, kt = jax.random.split(key, 3)

    params = init_params(kp, icn, ndf, tdf, min_idx, nb_dblocks)
    X = jax.random.normal(kx, (B, icn, H, W), jnp.float32)   # NCHW, like PyTorch
    T = jax.random.normal(kt, (tdf, B), jnp.float32)         # forward transposes -> (B, tdf)

    fwd = jax.jit(discriminator_forward)
    out = fwd(params, X, T)
    out = jax.block_until_ready(out)

    # 16 -> (two downblocks) -> 4 spatial; tail Conv4x4 p0 -> 1x1, 1 channel
    assert out.shape == (B, 1, 1, 1), out.shape
    assert bool(jnp.all(jnp.isfinite(out)))
    print("KERNEL_OK")
</pallas_src>

<mosaic_0001>
module attributes {stable_mosaic.version = 11 : i64} {
  func.func @_gemm_fused_kernel(%arg0: i32, %arg1: i32, %arg2: memref<512x27xbf16, #tpu.memory_space<vmem>>, %arg3: memref<27x4xbf16, #tpu.memory_space<vmem>>, %arg4: memref<1x4xf32, #tpu.memory_space<vmem>>, %arg5: memref<512x4xbf16, #tpu.memory_space<vmem>>, %arg6: memref<512x4xf32, #tpu.memory_space<vmem>>) attributes {dimension_semantics = [#tpu.dimension_semantics<parallel>, #tpu.dimension_semantics<arbitrary>], iteration_bounds = array<i64: 1, 1>, scalar_prefetch = 0 : i64, scratch_operands = 1 : i64, tpu.core_type = #tpu.core_type<tc>, window_params = [{transform_indices = @transform_0, window_bounds = array<i64: 512, 27>}, {transform_indices = @transform_1, window_bounds = array<i64: 27, 4>}, {pipeline_mode = #tpu.pipeline_mode<synchronous>, transform_indices = @transform_2, window_bounds = array<i64: 1, 4>}, {transform_indices = @transform_3, window_bounds = array<i64: 512, 4>}]} {
    %c0_i32 = arith.constant 0 : i32
    %0 = arith.cmpi eq, %arg1, %c0_i32 : i32
    %1 = arith.extui %0 : i1 to i32
    %c0_i32_0 = arith.constant 0 : i32
    %2 = arith.cmpi ne, %1, %c0_i32_0 : i32
    scf.if %2 {
      %cst_10 = arith.constant 0.000000e+00 : f32
      %12 = vector.broadcast %cst_10 : f32 to vector<512x4xf32>
      %c0_11 = arith.constant 0 : index
      %c0_12 = arith.constant 0 : index
      %13 = vector.load %arg6[%c0_11, %c0_12] : memref<512x4xf32, #tpu.memory_space<vmem>>, vector<512x4xf32>
      tpu.vector_store %arg6[%c0_11, %c0_12], %12 {strides = array<i32>} : memref<512x4xf32, #tpu.memory_space<vmem>>, vector<512x4xf32>,
    } else {
    }
    %c0 = arith.constant 0 : index
    %c0_1 = arith.constant 0 : index
    %3 = vector.load %arg2[%c0, %c0_1] : memref<512x27xbf16, #tpu.memory_space<vmem>>, vector<512x27xbf16>
    %c0_2 = arith.constant 0 : index
    %c0_3 = arith.constant 0 : index
    %4 = vector.load %arg6[%c0_2, %c0_3] : memref<512x4xf32, #tpu.memory_space<vmem>>, vector<512x4xf32>
    %c0_4 = arith.constant 0 : index
    %c0_5 = arith.constant 0 : index
    %5 = vector.load %arg3[%c0_4, %c0_5] : memref<27x4xbf16, #tpu.memory_space<vmem>>, vector<27x4xbf16>
    %cst = arith.constant dense<0.000000e+00> : vector<512x4xf32>
    %6 = tpu.matmul %3, %5, %cst {dimension_numbers = #tpu.dot_dimension_numbers<[1], [0], [0], [1], [0, 0, 1, 1], [], []>} : vector<512x27xbf16>, vector<27x4xbf16>, vector<512x4xf32> -> vector<512x4xf32>
    %7 = arith.addf %4, %6 : vector<512x4xf32>
    %c0_6 = arith.constant 0 : index
    %c0_7 = arith.constant 0 : index
    %8 = vector.load %arg6[%c0_6, %c0_7] : memref<512x4xf32, #tpu.memory_space<vmem>>, vector<512x4xf32>
    tpu.vector_store %arg6[%c0_6, %c0_7], %7 {strides = array<i32>} : memref<512x4xf32, #tpu.memory_space<vmem>>, vector<512x4xf32>,
    %c0_i32_8 = arith.constant 0 : i32
    %9 = arith.cmpi eq, %arg1, %c0_i32_8 : i32
    %10 = arith.extui %9 : i1 to i32
    %c0_i32_9 = arith.constant 0 : i32
    %11 = arith.cmpi ne, %10, %c0_i32_9 : i32
    scf.if %11 {
      %c0_10 = arith.constant 0 : index
      %c0_11 = arith.constant 0 : index
      %12 = vector.load %arg6[%c0_10, %c0_11] : memref<512x4xf32, #tpu.memory_space<vmem>>, vector<512x4xf32>
      %c0_12 = arith.constant 0 : index
      %c0_13 = arith.constant 0 : index
      %13 = vector.load %arg4[%c0_12, %c0_13] : memref<1x4xf32, #tpu.memory_space<vmem>>, vector<1x4xf32>
      %14 = vector.broadcast %13 : vector<1x4xf32> to vector<512x4xf32>
      %15 = arith.addf %12, %14 : vector<512x4xf32>
      %16 = arith.truncf %15 : vector<512x4xf32> to vector<512x4xbf16>
      %c0_14 = arith.constant 0 : index
      %c0_15 = arith.constant 0 : index
      %17 = vector.load %arg5[%c0_14, %c0_15] : memref<512x4xbf16, #tpu.memory_space<vmem>>, vector<512x4xbf16>
      tpu.vector_store %arg5[%c0_14, %c0_15], %16 {strides = array<i32>} : memref<512x4xbf16, #tpu.memory_space<vmem>>, vector<512x4xbf16>,
    } else {
    }
    return
  }
  func.func @transform_0(%arg0: i32, %arg1: i32) -> (i32, i32) {
    %c0_i32 = arith.constant 0 : i32
    return %arg0, %arg1 : i32, i32
  }
  func.func @transform_1(%arg0: i32, %arg1: i32) -> (i32, i32) {
    %c0_i32 = arith.constant 0 : i32
    %c0_i32_0 = arith.constant 0 : i32
    return %arg1, %c0_i32 : i32, i32
  }
  func.func @transform_2(%arg0: i32, %arg1: i32) -> (i32, i32) {
    %c0_i32 = arith.constant 0 : i32
    %c0_i32_0 = arith.constant 0 : i32
    %c0_i32_1 = arith.constant 0 : i32
    return %c0_i32, %c0_i32_0 : i32, i32
  }
  func.func @transform_3(%arg0: i32, %arg1: i32) -> (i32, i32) {
    %c0_i32 = arith.constant 0 : i32
    %c0_i32_0 = arith.constant 0 : i32
    return %arg0, %c0_i32 : i32, i32
  }
}

module attributes {stable_mosaic.version = 11 : i64} {
  func.func @_gemm_fused_kernel(%arg0: i32, %arg1: i32, %arg2: memref<128x4xbf16, #tpu.memory_space<vmem>>, %arg3: memref<128x4xbf16, #tpu.memory_space<vmem>>, %arg4: memref<128x4xbf16, #tpu.memory_space<vmem>>, %arg5: memref<128x4xbf16, #tpu.memory_space<vmem>>, %arg6: memref<4x8xbf16, #tpu.memory_space<vmem>>, %arg7: memref<1x8xf32, #tpu.memory_space<vmem>>, %arg8: memref<128x8xbf16, #tpu.memory_space<vmem>>, %arg9: memref<128x8xf32, #tpu.memory_space<vmem>>) attributes {dimension_semantics = [#tpu.dimension_semantics<parallel>, #tpu.dimension_semantics<arbitrary>], iteration_bounds = array<i64: 1, 1>, scalar_prefetch = 0 : i64, scratch_operands = 1 : i64, tpu.core_type = #tpu.core_type<tc>, window_params = [{transform_indices = @transform_0, window_bounds = array<i64: 128, 4>}, {transform_indices = @transform_1, window_bounds = array<i64: 128, 4>}, {transform_indices = @transform_2, window_bounds = array<i64: 128, 4>}, {transform_indices = @transform_3, window_bounds = array<i64: 128, 4>}, {transform_indices = @transform_4, window_bounds = array<i64: 4, 8>}, {pipeline_mode = #tpu.pipeline_mode<synchronous>, transform_indices = @transform_5, window_bounds = array<i64: 1, 8>}, {transform_indices = @transform_6, window_bounds = array<i64: 128, 8>}]} {
    %c0_i32 = arith.constant 0 : i32
    %0 = arith.cmpi eq, %arg1, %c0_i32 : i32
    %1 = arith.extui %0 : i1 to i32
    %c0_i32_0 = arith.constant 0 : i32
    %2 = arith.cmpi ne, %1, %c0_i32_0 : i32
    scf.if %2 {
      %cst_16 = arith.constant 0.000000e+00 : f32
      %23 = vector.broadcast %cst_16 : f32 to vector<128x8xf32>
      %c0_17 = arith.constant 0 : index
      %c0_18 = arith.constant 0 : index
      %24 = vector.load %arg9[%c0_17, %c0_18] : memref<128x8xf32, #tpu.memory_space<vmem>>, vector<128x8xf32>
      tpu.vector_store %arg9[%c0_17, %c0_18], %23 {strides = array<i32>} : memref<128x8xf32, #tpu.memory_space<vmem>>, vector<128x8xf32>,
    } else {
    }
    %c0 = arith.constant 0 : index
    %c0_1 = arith.constant 0 : index
    %3 = vector.load %arg2[%c0, %c0_1] : memref<128x4xbf16, #tpu.memory_space<vmem>>, vector<128x4xbf16>
    %4 = arith.extf %3 : vector<128x4xbf16> to vector<128x4xf32>
    %c0_2 = arith.constant 0 : index
    %c0_3 = arith.constant 0 : index
    %5 = vector.load %arg3[%c0_2, %c0_3] : memref<128x4xbf16, #tpu.memory_space<vmem>>, vector<128x4xbf16>
    %6 = arith.extf %5 : vector<128x4xbf16> to vector<128x4xf32>
    %7 = arith.addf %4, %6 : vector<128x4xf32>
    %c0_4 = arith.constant 0 : index
    %c0_5 = arith.constant 0 : index
    %8 = vector.load %arg4[%c0_4, %c0_5] : memref<128x4xbf16, #tpu.memory_space<vmem>>, vector<128x4xbf16>
    %9 = arith.extf %8 : vector<128x4xbf16> to vector<128x4xf32>
    %10 = arith.addf %7, %9 : vector<128x4xf32>
    %c0_6 = arith.constant 0 : index
    %c0_7 = arith.constant 0 : index
    %11 = vector.load %arg5[%c0_6, %c0_7] : memref<128x4xbf16, #tpu.memory_space<vmem>>, vector<128x4xbf16>
    %12 = arith.extf %11 : vector<128x4xbf16> to vector<128x4xf32>
    %13 = arith.addf %10, %12 : vector<128x4xf32>
    %14 = arith.truncf %13 : vector<128x4xf32> to vector<128x4xbf16>
    %c0_8 = arith.constant 0 : index
    %c0_9 = arith.constant 0 : index
    %15 = vector.load %arg9[%c0_8, %c0_9] : memref<128x8xf32, #tpu.memory_space<vmem>>, vector<128x8xf32>
    %c0_10 = arith.constant 0 : index
    %c0_11 = arith.constant 0 : index
    %16 = vector.load %arg6[%c0_10, %c0_11] : memref<4x8xbf16, #tpu.memory_space<vmem>>, vector<4x8xbf16>
    %cst = arith.constant dense<0.000000e+00> : vector<128x8xf32>
    %17 = tpu.matmul %14, %16, %cst {dimension_numbers = #tpu.dot_dimension_numbers<[1], [0], [0], [1], [0, 0, 1, 1], [], []>} : vector<128x4xbf16>, vector<4x8xbf16>, vector<128x8xf32> -> vector<128x8xf32>
    %18 = arith.addf %15, %17 : vector<128x8xf32>
    %c0_12 = arith.constant 0 : index
    %c0_13 = arith.constant 0 : index
    %19 = vector.load %arg9[%c0_12, %c0_13] : memref<128x8xf32, #tpu.memory_space<vmem>>, vector<128x8xf32>
    tpu.vector_store %arg9[%c0_12, %c0_13], %18 {strides = array<i32>} : memref<128x8xf32, #tpu.memory_space<vmem>>, vector<128x8xf32>,
    %c0_i32_14 = arith.constant 0 : i32
    %20 = arith.cmpi eq, %arg1, %c0_i32_14 : i32
    %21 = arith.extui %20 : i1 to i32
    %c0_i32_15 = arith.constant 0 : i32
    %22 = arith.cmpi ne, %21, %c0_i32_15 : i32
    scf.if %22 {
      %c0_16 = arith.constant 0 : index
      %c0_17 = arith.constant 0 : index
      %23 = vector.load %arg9[%c0_16, %c0_17] : memref<128x8xf32, #tpu.memory_space<vmem>>, vector<128x8xf32>
      %c0_18 = arith.constant 0 : index
      %c0_19 = arith.constant 0 : index
      %24 = vector.load %arg7[%c0_18, %c0_19] : memref<1x8xf32, #tpu.memory_space<vmem>>, vector<1x8xf32>
      %25 = vector.broadcast %24 : vector<1x8xf32> to vector<128x8xf32>
      %26 = arith.addf %23, %25 : vector<128x8xf32>
      %27 = arith.truncf %26 : vector<128x8xf32> to vector<128x8xbf16>
      %c0_20 = arith.constant 0 : index
      %c0_21 = arith.constant 0 : index
      %28 = vector.load %arg8[%c0_20, %c0_21] : memref<128x8xbf16, #tpu.memory_space<vmem>>, vector<128x8xbf16>
      tpu.vector_store %arg8[%c0_20, %c0_21], %27 {strides = array<i32>} : memref<128x8xbf16, #tpu.memory_space<vmem>>, vector<128x8xbf16>,
    } else {
    }
    return
  }
  func.func @transform_0(%arg0: i32, %arg1: i32) -> (i32, i32) {
    %c0_i32 = arith.constant 0 : i32
    return %arg0, %arg1 : i32, i32
  }
  func.func @transform_1(%arg0: i32, %arg1: i32) -> (i32, i32) {
    %c0_i32 = arith.constant 0 : i32
    return %arg0, %arg1 : i32, i32
  }
  func.func @transform_2(%arg0: i32, %arg1: i32) -> (i32, i32) {
    %c0_i32 = arith.constant 0 : i32
    return %arg0, %arg1 : i32, i32
  }
  func.func @transform_3(%arg0: i32, %arg1: i32) -> (i32, i32) {
    %c0_i32 = arith.constant 0 : i32
    return %arg0, %arg1 : i32, i32
  }
  func.func @transform_4(%arg0: i32, %arg1: i32) -> (i32, i32) {
    %c0_i32 = arith.constant 0 : i32
    %c0_i32_0 = arith.constant 0 : i32
    return %arg1, %c0_i32 : i32, i32
  }
  func.func @transform_5(%arg0: i32, %arg1: i32) -> (i32, i32) {
    %c0_i32 = arith.constant 0 : i32
    %c0_i32_0 = arith.constant 0 : i32
    %c0_i32_1 = arith.constant 0 : i32
    return %c0_i32, %c0_i32_0 : i32, i32
  }
  func.func @transform_6(%arg0: i32, %arg1: i32) -> (i32, i32) {
    %c0_i32 = arith.constant 0 : i32
    %c0_i32_0 = arith.constant 0 : i32
    return %arg0, %c0_i32 : i32, i32
  }
}

module attributes {stable_mosaic.version = 11 : i64} {
  func.func @_gemm_fused_kernel(%arg0: i32, %arg1: i32, %arg2: memref<128x64xbf16, #tpu.memory_space<vmem>>, %arg3: memref<64x8xbf16, #tpu.memory_space<vmem>>, %arg4: memref<128x8xbf16, #tpu.memory_space<vmem>>, %arg5: memref<128x8xf32, #tpu.memory_space<vmem>>) attributes {dimension_semantics = [#tpu.dimension_semantics<parallel>, #tpu.dimension_semantics<arbitrary>], iteration_bounds = array<i64: 1, 1>, scalar_prefetch = 0 : i64, scratch_operands = 1 : i64, tpu.core_type = #tpu.core_type<tc>, window_params = [{transform_indices = @transform_0, window_bounds = array<i64: 128, 64>}, {transform_indices = @transform_1, window_bounds = array<i64: 64, 8>}, {transform_indices = @transform_2, window_bounds = array<i64: 128, 8>}]} {
    %c0_i32 = arith.constant 0 : i32
    %0 = arith.cmpi eq, %arg1, %c0_i32 : i32
    %1 = arith.extui %0 : i1 to i32
    %c0_i32_0 = arith.constant 0 : i32
    %2 = arith.cmpi ne, %1, %c0_i32_0 : i32
    scf.if %2 {
      %cst_10 = arith.constant 0.000000e+00 : f32
      %12 = vector.broadcast %cst_10 : f32 to vector<128x8xf32>
      %c0_11 = arith.constant 0 : index
      %c0_12 = arith.constant 0 : index
      %13 = vector.load %arg5[%c0_11, %c0_12] : memref<128x8xf32, #tpu.memory_space<vmem>>, vector<128x8xf32>
      tpu.vector_store %arg5[%c0_11, %c0_12], %12 {strides = array<i32>} : memref<128x8xf32, #tpu.memory_space<vmem>>, vector<128x8xf32>,
    } else {
    }
    %c0 = arith.constant 0 : index
    %c0_1 = arith.constant 0 : index
    %3 = vector.load %arg2[%c0, %c0_1] : memref<128x64xbf16, #tpu.memory_space<vmem>>, vector<128x64xbf16>
    %c0_2 = arith.constant 0 : index
    %c0_3 = arith.constant 0 : index
    %4 = vector.load %arg5[%c0_2, %c0_3] : memref<128x8xf32, #tpu.memory_space<vmem>>, vector<128x8xf32>
    %c0_4 = arith.constant 0 : index
    %c0_5 = arith.constant 0 : index
    %5 = vector.load %arg3[%c0_4, %c0_5] : memref<64x8xbf16, #tpu.memory_space<vmem>>, vector<64x8xbf16>
    %cst = arith.constant dense<0.000000e+00> : vector<128x8xf32>
    %6 = tpu.matmul %3, %5, %cst {dimension_numbers = #tpu.dot_dimension_numbers<[1], [0], [0], [1], [0, 0, 1, 1], [], []>} : vector<128x64xbf16>, vector<64x8xbf16>, vector<128x8xf32> -> vector<128x8xf32>
    %7 = arith.addf %4, %6 : vector<128x8xf32>
    %c0_6 = arith.constant 0 : index
    %c0_7 = arith.constant 0 : index
    %8 = vector.load %arg5[%c0_6, %c0_7] : memref<128x8xf32, #tpu.memory_space<vmem>>, vector<128x8xf32>
    tpu.vector_store %arg5[%c0_6, %c0_7], %7 {strides = array<i32>} : memref<128x8xf32, #tpu.memory_space<vmem>>, vector<128x8xf32>,
    %c0_i32_8 = arith.constant 0 : i32
    %9 = arith.cmpi eq, %arg1, %c0_i32_8 : i32
    %10 = arith.extui %9 : i1 to i32
    %c0_i32_9 = arith.constant 0 : i32
    %11 = arith.cmpi ne, %10, %c0_i32_9 : i32
    scf.if %11 {
      %c0_10 = arith.constant 0 : index
      %c0_11 = arith.constant 0 : index
      %12 = vector.load %arg5[%c0_10, %c0_11] : memref<128x8xf32, #tpu.memory_space<vmem>>, vector<128x8xf32>
      %cst_12 = arith.constant 0.000000e+00 : f32
      %13 = vector.broadcast %cst_12 : f32 to vector<128x8xf32>
      %14 = arith.cmpf ogt, %12, %13 : vector<128x8xf32>
      %cst_13 = arith.constant 2.000000e-01 : f32
      %15 = vector.broadcast %cst_13 : f32 to vector<128x8xf32>
      %16 = arith.mulf %15, %12 : vector<128x8xf32>
      %17 = arith.select %14, %12, %16 : vector<128x8xi1>, vector<128x8xf32>
      %18 = arith.truncf %17 : vector<128x8xf32> to vector<128x8xbf16>
      %c0_14 = arith.constant 0 : index
      %c0_15 = arith.constant 0 : index
      %19 = vector.load %arg4[%c0_14, %c0_15] : memref<128x8xbf16, #tpu.memory_space<vmem>>, vector<128x8xbf16>
      tpu.vector_store %arg4[%c0_14, %c0_15], %18 {strides = array<i32>} : memref<128x8xbf16, #tpu.memory_space<vmem>>, vector<128x8xbf16>,
    } else {
    }
    return
  }
  func.func @transform_0(%arg0: i32, %arg1: i32) -> (i32, i32) {
    %c0_i32 = arith.constant 0 : i32
    return %arg0, %arg1 : i32, i32
  }
  func.func @transform_1(%arg0: i32, %arg1: i32) -> (i32, i32) {
    %c0_i32 = arith.constant 0 : i32
    %c0_i32_0 = arith.constant 0 : i32
    return %arg1, %c0_i32 : i32, i32
  }
  func.func @transform_2(%arg0: i32, %arg1: i32) -> (i32, i32) {
    %c0_i32 = arith.constant 0 : i32
    %c0_i32_0 = arith.constant 0 : i32
    return %arg0, %c0_i32 : i32, i32
  }
}

module attributes {stable_mosaic.version = 11 : i64} {
  func.func @_gemm_fused_kernel(%arg0: i32, %arg1: i32, %arg2: memref<128x72xbf16, #tpu.memory_space<vmem>>, %arg3: memref<72x8xbf16, #tpu.memory_space<vmem>>, %arg4: memref<128x8xbf16, #tpu.memory_space<vmem>>, %arg5: memref<1x1xf32, #tpu.memory_space<vmem>>, %arg6: memref<128x8xbf16, #tpu.memory_space<vmem>>, %arg7: memref<128x8xf32, #tpu.memory_space<vmem>>) attributes {dimension_semantics = [#tpu.dimension_semantics<parallel>, #tpu.dimension_semantics<arbitrary>], iteration_bounds = array<i64: 1, 1>, scalar_prefetch = 0 : i64, scratch_operands = 1 : i64, tpu.core_type = #tpu.core_type<tc>, window_params = [{transform_indices = @transform_0, window_bounds = array<i64: 128, 72>}, {transform_indices = @transform_1, window_bounds = array<i64: 72, 8>}, {transform_indices = @transform_2, window_bounds = array<i64: 128, 8>}, {pipeline_mode = #tpu.pipeline_mode<synchronous>, transform_indices = @transform_3, window_bounds = array<i64: 1, 1>}, {transform_indices = @transform_4, window_bounds = array<i64: 128, 8>}]} {
    %c0_i32 = arith.constant 0 : i32
    %0 = arith.cmpi eq, %arg1, %c0_i32 : i32
    %1 = arith.extui %0 : i1 to i32
    %c0_i32_0 = arith.constant 0 : i32
    %2 = arith.cmpi ne, %1, %c0_i32_0 : i32
    scf.if %2 {
      %cst_10 = arith.constant 0.000000e+00 : f32
      %12 = vector.broadcast %cst_10 : f32 to vector<128x8xf32>
      %c0_11 = arith.constant 0 : index
      %c0_12 = arith.constant 0 : index
      %13 = vector.load %arg7[%c0_11, %c0_12] : memref<128x8xf32, #tpu.memory_space<vmem>>, vector<128x8xf32>
      tpu.vector_store %arg7[%c0_11, %c0_12], %12 {strides = array<i32>} : memref<128x8xf32, #tpu.memory_space<vmem>>, vector<128x8xf32>,
    } else {
    }
    %c0 = arith.constant 0 : index
    %c0_1 = arith.constant 0 : index
    %3 = vector.load %arg2[%c0, %c0_1] : memref<128x72xbf16, #tpu.memory_space<vmem>>, vector<128x72xbf16>
    %c0_2 = arith.constant 0 : index
    %c0_3 = arith.constant 0 : index
    %4 = vector.load %arg7[%c0_2, %c0_3] : memref<128x8xf32, #tpu.memory_space<vmem>>, vector<128x8xf32>
    %c0_4 = arith.constant 0 : index
    %c0_5 = arith.constant 0 : index
    %5 = vector.load %arg3[%c0_4, %c0_5] : memref<72x8xbf16, #tpu.memory_space<vmem>>, vector<72x8xbf16>
    %cst = arith.constant dense<0.000000e+00> : vector<128x8xf32>
    %6 = tpu.matmul %3, %5, %cst {dimension_numbers = #tpu.dot_dimension_numbers<[1], [0], [0], [1], [0, 0, 1, 1], [], []>} : vector<128x72xbf16>, vector<72x8xbf16>, vector<128x8xf32> -> vector<128x8xf32>
    %7 = arith.addf %4, %6 : vector<128x8xf32>
    %c0_6 = arith.constant 0 : index
    %c0_7 = arith.constant 0 : index
    %8 = vector.load %arg7[%c0_6, %c0_7] : memref<128x8xf32, #tpu.memory_space<vmem>>, vector<128x8xf32>
    tpu.vector_store %arg7[%c0_6, %c0_7], %7 {strides = array<i32>} : memref<128x8xf32, #tpu.memory_space<vmem>>, vector<128x8xf32>,
    %c0_i32_8 = arith.constant 0 : i32
    %9 = arith.cmpi eq, %arg1, %c0_i32_8 : i32
    %10 = arith.extui %9 : i1 to i32
    %c0_i32_9 = arith.constant 0 : i32
    %11 = arith.cmpi ne, %10, %c0_i32_9 : i32
    scf.if %11 {
      %c0_10 = arith.constant 0 : index
      %c0_11 = arith.constant 0 : index
      %12 = vector.load %arg7[%c0_10, %c0_11] : memref<128x8xf32, #tpu.memory_space<vmem>>, vector<128x8xf32>
      %cst_12 = arith.constant 0.000000e+00 : f32
      %13 = vector.broadcast %cst_12 : f32 to vector<128x8xf32>
      %14 = arith.cmpf ogt, %12, %13 : vector<128x8xf32>
      %cst_13 = arith.constant 2.000000e-01 : f32
      %15 = vector.broadcast %cst_13 : f32 to vector<128x8xf32>
      %16 = arith.mulf %15, %12 : vector<128x8xf32>
      %17 = arith.select %14, %12, %16 : vector<128x8xi1>, vector<128x8xf32>
      %c0_14 = arith.constant 0 : index
      %c0_15 = arith.constant 0 : index
      %18 = vector.load %arg4[%c0_14, %c0_15] : memref<128x8xbf16, #tpu.memory_space<vmem>>, vector<128x8xbf16>
      %19 = arith.extf %18 : vector<128x8xbf16> to vector<128x8xf32>
      %c0_16 = arith.constant 0 : index
      %c0_17 = arith.constant 0 : index
      %20 = vector.load %arg5[%c0_16, %c0_17] : memref<1x1xf32, #tpu.memory_space<vmem>>, vector<1x1xf32>
      %21 = vector.broadcast %20 : vector<1x1xf32> to vector<128x8xf32>
      %22 = arith.mulf %21, %17 : vector<128x8xf32>
      %23 = arith.addf %19, %22 : vector<128x8xf32>
      %24 = arith.truncf %23 : vector<128x8xf32> to vector<128x8xbf16>
      %c0_18 = arith.constant 0 : index
      %c0_19 = arith.constant 0 : index
      %25 = vector.load %arg6[%c0_18, %c0_19] : memref<128x8xbf16, #tpu.memory_space<vmem>>, vector<128x8xbf16>
      tpu.vector_store %arg6[%c0_18, %c0_19], %24 {strides = array<i32>} : memref<128x8xbf16, #tpu.memory_space<vmem>>, vector<128x8xbf16>,
    } else {
    }
    return
  }
  func.func @transform_0(%arg0: i32, %arg1: i32) -> (i32, i32) {
    %c0_i32 = arith.constant 0 : i32
    return %arg0, %arg1 : i32, i32
  }
  func.func @transform_1(%arg0: i32, %arg1: i32) -> (i32, i32) {
    %c0_i32 = arith.constant 0 : i32
    %c0_i32_0 = arith.constant 0 : i32
    return %arg1, %c0_i32 : i32, i32
  }
  func.func @transform_2(%arg0: i32, %arg1: i32) -> (i32, i32) {
    %c0_i32 = arith.constant 0 : i32
    %c0_i32_0 = arith.constant 0 : i32
    return %arg0, %c0_i32 : i32, i32
  }
  func.func @transform_3(%arg0: i32, %arg1: i32) -> (i32, i32) {
    %c0_i32 = arith.constant 0 : i32
    %c0_i32_0 = arith.constant 0 : i32
    %c0_i32_1 = arith.constant 0 : i32
    return %c0_i32, %c0_i32_0 : i32, i32
  }
  func.func @transform_4(%arg0: i32, %arg1: i32) -> (i32, i32) {
    %c0_i32 = arith.constant 0 : i32
    %c0_i32_0 = arith.constant 0 : i32
    return %arg0, %c0_i32 : i32, i32
  }
}

module attributes {stable_mosaic.version = 11 : i64} {
  func.func @_avgpool_kernel(%arg0: i32, %arg1: memref<8x128xbf16, #tpu.memory_space<vmem>>, %arg2: memref<8x128xbf16, #tpu.memory_space<vmem>>, %arg3: memref<8x128xbf16, #tpu.memory_space<vmem>>, %arg4: memref<8x128xbf16, #tpu.memory_space<vmem>>, %arg5: memref<8x128xbf16, #tpu.memory_space<vmem>>) attributes {dimension_semantics = [#tpu.dimension_semantics<parallel>], iteration_bounds = array<i64: 1>, scalar_prefetch = 0 : i64, scratch_operands = 0 : i64, tpu.core_type = #tpu.core_type<tc>, window_params = [{transform_indices = @transform_0, window_bounds = array<i64: 8, 128>}, {transform_indices = @transform_1, window_bounds = array<i64: 8, 128>}, {transform_indices = @transform_2, window_bounds = array<i64: 8, 128>}, {transform_indices = @transform_3, window_bounds = array<i64: 8, 128>}, {transform_indices = @transform_4, window_bounds = array<i64: 8, 128>}]} {
    %c0 = arith.constant 0 : index
    %c0_0 = arith.constant 0 : index
    %0 = vector.load %arg1[%c0, %c0_0] : memref<8x128xbf16, #tpu.memory_space<vmem>>, vector<8x128xbf16>
    %1 = arith.extf %0 : vector<8x128xbf16> to vector<8x128xf32>
    %c0_1 = arith.constant 0 : index
    %c0_2 = arith.constant 0 : index
    %2 = vector.load %arg2[%c0_1, %c0_2] : memref<8x128xbf16, #tpu.memory_space<vmem>>, vector<8x128xbf16>
    %3 = arith.extf %2 : vector<8x128xbf16> to vector<8x128xf32>
    %4 = arith.addf %1, %3 : vector<8x128xf32>
    %c0_3 = arith.constant 0 : index
    %c0_4 = arith.constant 0 : index
    %5 = vector.load %arg3[%c0_3, %c0_4] : memref<8x128xbf16, #tpu.memory_space<vmem>>, vector<8x128xbf16>
    %6 = arith.extf %5 : vector<8x128xbf16> to vector<8x128xf32>
    %7 = arith.addf %4, %6 : vector<8x128xf32>
    %c0_5 = arith.constant 0 : index
    %c0_6 = arith.constant 0 : index
    %8 = vector.load %arg4[%c0_5, %c0_6] : memref<8x128xbf16, #tpu.memory_space<vmem>>, vector<8x128xbf16>
    %9 = arith.extf %8 : vector<8x128xbf16> to vector<8x128xf32>
    %10 = arith.addf %7, %9 : vector<8x128xf32>
    %cst = arith.constant 2.500000e-01 : f32
    %11 = vector.broadcast %cst : f32 to vector<8x128xf32>
    %12 = arith.mulf %11, %10 : vector<8x128xf32>
    %13 = arith.truncf %12 : vector<8x128xf32> to vector<8x128xbf16>
    %c0_7 = arith.constant 0 : index
    %c0_8 = arith.constant 0 : index
    %14 = vector.load %arg5[%c0_7, %c0_8] : memref<8x128xbf16, #tpu.memory_space<vmem>>, vector<8x128xbf16>
    tpu.vector_store %arg5[%c0_7, %c0_8], %13 {strides = array<i32>} : memref<8x128xbf16, #tpu.memory_space<vmem>>, vector<8x128xbf16>,
    return
  }
  func.func @transform_0(%arg0: i32) -> (i32, i32) {
    %c0_i32 = arith.constant 0 : i32
    %c0_i32_0 = arith.constant 0 : i32
    return %arg0, %c0_i32 : i32, i32
  }
  func.func @transform_1(%arg0: i32) -> (i32, i32) {
    %c0_i32 = arith.constant 0 : i32
    %c0_i32_0 = arith.constant 0 : i32
    return %arg0, %c0_i32 : i32, i32
  }
  func.func @transform_2(%arg0: i32) -> (i32, i32) {
    %c0_i32 = arith.constant 0 : i32
    %c0_i32_0 = arith.constant 0 : i32
    return %arg0, %c0_i32 : i32, i32
  }
  func.func @transform_3(%arg0: i32) -> (i32, i32) {
    %c0_i32 = arith.constant 0 : i32
    %c0_i32_0 = arith.constant 0 : i32
    return %arg0, %c0_i32 : i32, i32
  }
  func.func @transform_4(%arg0: i32) -> (i32, i32) {
    %c0_i32 = arith.constant 0 : i32
    %c0_i32_0 = arith.constant 0 : i32
    return %arg0, %c0_i32 : i32, i32
  }
}

module attributes {stable_mosaic.version = 11 : i64} {
  func.func @_gemm_fused_kernel(%arg0: i32, %arg1: i32, %arg2: memref<32x128xbf16, #tpu.memory_space<vmem>>, %arg3: memref<128x8xbf16, #tpu.memory_space<vmem>>, %arg4: memref<32x8xbf16, #tpu.memory_space<vmem>>, %arg5: memref<32x8xf32, #tpu.memory_space<vmem>>) attributes {dimension_semantics = [#tpu.dimension_semantics<parallel>, #tpu.dimension_semantics<arbitrary>], iteration_bounds = array<i64: 1, 1>, scalar_prefetch = 0 : i64, scratch_operands = 1 : i64, tpu.core_type = #tpu.core_type<tc>, window_params = [{transform_indices = @transform_0, window_bounds = array<i64: 32, 128>}, {transform_indices = @transform_1, window_bounds = array<i64: 128, 8>}, {transform_indices = @transform_2, window_bounds = array<i64: 32, 8>}]} {
    %c0_i32 = arith.constant 0 : i32
    %0 = arith.cmpi eq, %arg1, %c0_i32 : i32
    %1 = arith.extui %0 : i1 to i32
    %c0_i32_0 = arith.constant 0 : i32
    %2 = arith.cmpi ne, %1, %c0_i32_0 : i32
    scf.if %2 {
      %cst_10 = arith.constant 0.000000e+00 : f32
      %12 = vector.broadcast %cst_10 : f32 to vector<32x8xf32>
      %c0_11 = arith.constant 0 : index
      %c0_12 = arith.constant 0 : index
      %13 = vector.load %arg5[%c0_11, %c0_12] : memref<32x8xf32, #tpu.memory_space<vmem>>, vector<32x8xf32>
      tpu.vector_store %arg5[%c0_11, %c0_12], %12 {strides = array<i32>} : memref<32x8xf32, #tpu.memory_space<vmem>>, vector<32x8xf32>,
    } else {
    }
    %c0 = arith.constant 0 : index
    %c0_1 = arith.constant 0 : index
    %3 = vector.load %arg2[%c0, %c0_1] : memref<32x128xbf16, #tpu.memory_space<vmem>>, vector<32x128xbf16>
    %c0_2 = arith.constant 0 : index
    %c0_3 = arith.constant 0 : index
    %4 = vector.load %arg5[%c0_2, %c0_3] : memref<32x8xf32, #tpu.memory_space<vmem>>, vector<32x8xf32>
    %c0_4 = arith.constant 0 : index
    %c0_5 = arith.constant 0 : index
    %5 = vector.load %arg3[%c0_4, %c0_5] : memref<128x8xbf16, #tpu.memory_space<vmem>>, vector<128x8xbf16>
    %cst = arith.constant dense<0.000000e+00> : vector<32x8xf32>
    %6 = tpu.matmul %3, %5, %cst {dimension_numbers = #tpu.dot_dimension_numbers<[1], [0], [0], [1], [0, 0, 1, 1], [], []>} : vector<32x128xbf16>, vector<128x8xbf16>, vector<32x8xf32> -> vector<32x8xf32>
    %7 = arith.addf %4, %6 : vector<32x8xf32>
    %c0_6 = arith.constant 0 : index
    %c0_7 = arith.constant 0 : index
    %8 = vector.load %arg5[%c0_6, %c0_7] : memref<32x8xf32, #tpu.memory_space<vmem>>, vector<32x8xf32>
    tpu.vector_store %arg5[%c0_6, %c0_7], %7 {strides = array<i32>} : memref<32x8xf32, #tpu.memory_space<vmem>>, vector<32x8xf32>,
    %c0_i32_8 = arith.constant 0 : i32
    %9 = arith.cmpi eq, %arg1, %c0_i32_8 : i32
    %10 = arith.extui %9 : i1 to i32
    %c0_i32_9 = arith.constant 0 : i32
    %11 = arith.cmpi ne, %10, %c0_i32_9 : i32
    scf.if %11 {
      %c0_10 = arith.constant 0 : index
      %c0_11 = arith.constant 0 : index
      %12 = vector.load %arg5[%c0_10, %c0_11] : memref<32x8xf32, #tpu.memory_space<vmem>>, vector<32x8xf32>
      %cst_12 = arith.constant 0.000000e+00 : f32
      %13 = vector.broadcast %cst_12 : f32 to vector<32x8xf32>
      %14 = arith.cmpf ogt, %12, %13 : vector<32x8xf32>
      %cst_13 = arith.constant 2.000000e-01 : f32
      %15 = vector.broadcast %cst_13 : f32 to vector<32x8xf32>
      %16 = arith.mulf %15, %12 : vector<32x8xf32>
      %17 = arith.select %14, %12, %16 : vector<32x8xi1>, vector<32x8xf32>
      %18 = arith.truncf %17 : vector<32x8xf32> to vector<32x8xbf16>
      %c0_14 = arith.constant 0 : index
      %c0_15 = arith.constant 0 : index
      %19 = vector.load %arg4[%c0_14, %c0_15] : memref<32x8xbf16, #tpu.memory_space<vmem>>, vector<32x8xbf16>
      tpu.vector_store %arg4[%c0_14, %c0_15], %18 {strides = array<i32>} : memref<32x8xbf16, #tpu.memory_space<vmem>>, vector<32x8xbf16>,
    } else {
    }
    return
  }
  func.func @transform_0(%arg0: i32, %arg1: i32) -> (i32, i32) {
    %c0_i32 = arith.constant 0 : i32
    return %arg0, %arg1 : i32, i32
  }
  func.func @transform_1(%arg0: i32, %arg1: i32) -> (i32, i32) {
    %c0_i32 = arith.constant 0 : i32
    %c0_i32_0 = arith.constant 0 : i32
    return %arg1, %c0_i32 : i32, i32
  }
  func.func @transform_2(%arg0: i32, %arg1: i32) -> (i32, i32) {
    %c0_i32 = arith.constant 0 : i32
    %c0_i32_0 = arith.constant 0 : i32
    return %arg0, %c0_i32 : i32, i32
  }
}

module attributes {stable_mosaic.version = 11 : i64} {
  func.func @_gemm_fused_kernel(%arg0: i32, %arg1: i32, %arg2: memref<32x72xbf16, #tpu.memory_space<vmem>>, %arg3: memref<72x8xbf16, #tpu.memory_space<vmem>>, %arg4: memref<32x8xbf16, #tpu.memory_space<vmem>>, %arg5: memref<1x1xf32, #tpu.memory_space<vmem>>, %arg6: memref<32x8xbf16, #tpu.memory_space<vmem>>, %arg7: memref<32x8xf32, #tpu.memory_space<vmem>>) attributes {dimension_semantics = [#tpu.dimension_semantics<parallel>, #tpu.dimension_semantics<arbitrary>], iteration_bounds = array<i64: 1, 1>, scalar_prefetch = 0 : i64, scratch_operands = 1 : i64, tpu.core_type = #tpu.core_type<tc>, window_params = [{transform_indices = @transform_0, window_bounds = array<i64: 32, 72>}, {transform_indices = @transform_1, window_bounds = array<i64: 72, 8>}, {transform_indices = @transform_2, window_bounds = array<i64: 32, 8>}, {pipeline_mode = #tpu.pipeline_mode<synchronous>, transform_indices = @transform_3, window_bounds = array<i64: 1, 1>}, {transform_indices = @transform_4, window_bounds = array<i64: 32, 8>}]} {
    %c0_i32 = arith.constant 0 : i32
    %0 = arith.cmpi eq, %arg1, %c0_i32 : i32
    %1 = arith.extui %0 : i1 to i32
    %c0_i32_0 = arith.constant 0 : i32
    %2 = arith.cmpi ne, %1, %c0_i32_0 : i32
    scf.if %2 {
      %cst_10 = arith.constant 0.000000e+00 : f32
      %12 = vector.broadcast %cst_10 : f32 to vector<32x8xf32>
      %c0_11 = arith.constant 0 : index
      %c0_12 = arith.constant 0 : index
      %13 = vector.load %arg7[%c0_11, %c0_12] : memref<32x8xf32, #tpu.memory_space<vmem>>, vector<32x8xf32>
      tpu.vector_store %arg7[%c0_11, %c0_12], %12 {strides = array<i32>} : memref<32x8xf32, #tpu.memory_space<vmem>>, vector<32x8xf32>,
    } else {
    }
    %c0 = arith.constant 0 : index
    %c0_1 = arith.constant 0 : index
    %3 = vector.load %arg2[%c0, %c0_1] : memref<32x72xbf16, #tpu.memory_space<vmem>>, vector<32x72xbf16>
    %c0_2 = arith.constant 0 : index
    %c0_3 = arith.constant 0 : index
    %4 = vector.load %arg7[%c0_2, %c0_3] : memref<32x8xf32, #tpu.memory_space<vmem>>, vector<32x8xf32>
    %c0_4 = arith.constant 0 : index
    %c0_5 = arith.constant 0 : index
    %5 = vector.load %arg3[%c0_4, %c0_5] : memref<72x8xbf16, #tpu.memory_space<vmem>>, vector<72x8xbf16>
    %cst = arith.constant dense<0.000000e+00> : vector<32x8xf32>
    %6 = tpu.matmul %3, %5, %cst {dimension_numbers = #tpu.dot_dimension_numbers<[1], [0], [0], [1], [0, 0, 1, 1], [], []>} : vector<32x72xbf16>, vector<72x8xbf16>, vector<32x8xf32> -> vector<32x8xf32>
    %7 = arith.addf %4, %6 : vector<32x8xf32>
    %c0_6 = arith.constant 0 : index
    %c0_7 = arith.constant 0 : index
    %8 = vector.load %arg7[%c0_6, %c0_7] : memref<32x8xf32, #tpu.memory_space<vmem>>, vector<32x8xf32>
    tpu.vector_store %arg7[%c0_6, %c0_7], %7 {strides = array<i32>} : memref<32x8xf32, #tpu.memory_space<vmem>>, vector<32x8xf32>,
    %c0_i32_8 = arith.constant 0 : i32
    %9 = arith.cmpi eq, %arg1, %c0_i32_8 : i32
    %10 = arith.extui %9 : i1 to i32
    %c0_i32_9 = arith.constant 0 : i32
    %11 = arith.cmpi ne, %10, %c0_i32_9 : i32
    scf.if %11 {
      %c0_10 = arith.constant 0 : index
      %c0_11 = arith.constant 0 : index
      %12 = vector.load %arg7[%c0_10, %c0_11] : memref<32x8xf32, #tpu.memory_space<vmem>>, vector<32x8xf32>
      %cst_12 = arith.constant 0.000000e+00 : f32
      %13 = vector.broadcast %cst_12 : f32 to vector<32x8xf32>
      %14 = arith.cmpf ogt, %12, %13 : vector<32x8xf32>
      %cst_13 = arith.constant 2.000000e-01 : f32
      %15 = vector.broadcast %cst_13 : f32 to vector<32x8xf32>
      %16 = arith.mulf %15, %12 : vector<32x8xf32>
      %17 = arith.select %14, %12, %16 : vector<32x8xi1>, vector<32x8xf32>
      %c0_14 = arith.constant 0 : index
      %c0_15 = arith.constant 0 : index
      %18 = vector.load %arg4[%c0_14, %c0_15] : memref<32x8xbf16, #tpu.memory_space<vmem>>, vector<32x8xbf16>
      %19 = arith.extf %18 : vector<32x8xbf16> to vector<32x8xf32>
      %c0_16 = arith.constant 0 : index
      %c0_17 = arith.constant 0 : index
      %20 = vector.load %arg5[%c0_16, %c0_17] : memref<1x1xf32, #tpu.memory_space<vmem>>, vector<1x1xf32>
      %21 = vector.broadcast %20 : vector<1x1xf32> to vector<32x8xf32>
      %22 = arith.mulf %21, %17 : vector<32x8xf32>
      %23 = arith.addf %19, %22 : vector<32x8xf32>
      %24 = arith.truncf %23 : vector<32x8xf32> to vector<32x8xbf16>
      %c0_18 = arith.constant 0 : index
      %c0_19 = arith.constant 0 : index
      %25 = vector.load %arg6[%c0_18, %c0_19] : memref<32x8xbf16, #tpu.memory_space<vmem>>, vector<32x8xbf16>
      tpu.vector_store %arg6[%c0_18, %c0_19], %24 {strides = array<i32>} : memref<32x8xbf16, #tpu.memory_space<vmem>>, vector<32x8xbf16>,
    } else {
    }
    return
  }
  func.func @transform_0(%arg0: i32, %arg1: i32) -> (i32, i32) {
    %c0_i32 = arith.constant 0 : i32
    return %arg0, %arg1 : i32, i32
  }
  func.func @transform_1(%arg0: i32, %arg1: i32) -> (i32, i32) {
    %c0_i32 = arith.constant 0 : i32
    %c0_i32_0 = arith.constant 0 : i32
    return %arg1, %c0_i32 : i32, i32
  }
  func.func @transform_2(%arg0: i32, %arg1: i32) -> (i32, i32) {
    %c0_i32 = arith.constant 0 : i32
    %c0_i32_0 = arith.constant 0 : i32
    return %arg0, %c0_i32 : i32, i32
  }
  func.func @transform_3(%arg0: i32, %arg1: i32) -> (i32, i32) {
    %c0_i32 = arith.constant 0 : i32
    %c0_i32_0 = arith.constant 0 : i32
    %c0_i32_1 = arith.constant 0 : i32
    return %c0_i32, %c0_i32_0 : i32, i32
  }
  func.func @transform_4(%arg0: i32, %arg1: i32) -> (i32, i32) {
    %c0_i32 = arith.constant 0 : i32
    %c0_i32_0 = arith.constant 0 : i32
    return %arg0, %c0_i32 : i32, i32
  }
}

module attributes {stable_mosaic.version = 11 : i64} {
  func.func @_gemm_fused_kernel(%arg0: i32, %arg1: i32, %arg2: memref<32x72xbf16, #tpu.memory_space<vmem>>, %arg3: memref<72x8xbf16, #tpu.memory_space<vmem>>, %arg4: memref<32x8xf32, #tpu.memory_space<vmem>>, %arg5: memref<32x8xbf16, #tpu.memory_space<vmem>>, %arg6: memref<32x8xf32, #tpu.memory_space<vmem>>) attributes {dimension_semantics = [#tpu.dimension_semantics<parallel>, #tpu.dimension_semantics<arbitrary>], iteration_bounds = array<i64: 1, 1>, scalar_prefetch = 0 : i64, scratch_operands = 1 : i64, tpu.core_type = #tpu.core_type<tc>, window_params = [{transform_indices = @transform_0, window_bounds = array<i64: 32, 72>}, {transform_indices = @transform_1, window_bounds = array<i64: 72, 8>}, {transform_indices = @transform_2, window_bounds = array<i64: 32, 8>}, {transform_indices = @transform_3, window_bounds = array<i64: 32, 8>}]} {
    %c0_i32 = arith.constant 0 : i32
    %0 = arith.cmpi eq, %arg1, %c0_i32 : i32
    %1 = arith.extui %0 : i1 to i32
    %c0_i32_0 = arith.constant 0 : i32
    %2 = arith.cmpi ne, %1, %c0_i32_0 : i32
    scf.if %2 {
      %cst_10 = arith.constant 0.000000e+00 : f32
      %12 = vector.broadcast %cst_10 : f32 to vector<32x8xf32>
      %c0_11 = arith.constant 0 : index
      %c0_12 = arith.constant 0 : index
      %13 = vector.load %arg6[%c0_11, %c0_12] : memref<32x8xf32, #tpu.memory_space<vmem>>, vector<32x8xf32>
      tpu.vector_store %arg6[%c0_11, %c0_12], %12 {strides = array<i32>} : memref<32x8xf32, #tpu.memory_space<vmem>>, vector<32x8xf32>,
    } else {
    }
    %c0 = arith.constant 0 : index
    %c0_1 = arith.constant 0 : index
    %3 = vector.load %arg2[%c0, %c0_1] : memref<32x72xbf16, #tpu.memory_space<vmem>>, vector<32x72xbf16>
    %c0_2 = arith.constant 0 : index
    %c0_3 = arith.constant 0 : index
    %4 = vector.load %arg6[%c0_2, %c0_3] : memref<32x8xf32, #tpu.memory_space<vmem>>, vector<32x8xf32>
    %c0_4 = arith.constant 0 : index
    %c0_5 = arith.constant 0 : index
    %5 = vector.load %arg3[%c0_4, %c0_5] : memref<72x8xbf16, #tpu.memory_space<vmem>>, vector<72x8xbf16>
    %cst = arith.constant dense<0.000000e+00> : vector<32x8xf32>
    %6 = tpu.matmul %3, %5, %cst {dimension_numbers = #tpu.dot_dimension_numbers<[1], [0], [0], [1], [0, 0, 1, 1], [], []>} : vector<32x72xbf16>, vector<72x8xbf16>, vector<32x8xf32> -> vector<32x8xf32>
    %7 = arith.addf %4, %6 : vector<32x8xf32>
    %c0_6 = arith.constant 0 : index
    %c0_7 = arith.constant 0 : index
    %8 = vector.load %arg6[%c0_6, %c0_7] : memref<32x8xf32, #tpu.memory_space<vmem>>, vector<32x8xf32>
    tpu.vector_store %arg6[%c0_6, %c0_7], %7 {strides = array<i32>} : memref<32x8xf32, #tpu.memory_space<vmem>>, vector<32x8xf32>,
    %c0_i32_8 = arith.constant 0 : i32
    %9 = arith.cmpi eq, %arg1, %c0_i32_8 : i32
    %10 = arith.extui %9 : i1 to i32
    %c0_i32_9 = arith.constant 0 : i32
    %11 = arith.cmpi ne, %10, %c0_i32_9 : i32
    scf.if %11 {
      %c0_10 = arith.constant 0 : index
      %c0_11 = arith.constant 0 : index
      %12 = vector.load %arg6[%c0_10, %c0_11] : memref<32x8xf32, #tpu.memory_space<vmem>>, vector<32x8xf32>
      %c0_12 = arith.constant 0 : index
      %c0_13 = arith.constant 0 : index
      %13 = vector.load %arg4[%c0_12, %c0_13] : memref<32x8xf32, #tpu.memory_space<vmem>>, vector<32x8xf32>
      %14 = arith.addf %12, %13 : vector<32x8xf32>
      %cst_14 = arith.constant 0.000000e+00 : f32
      %15 = vector.broadcast %cst_14 : f32 to vector<32x8xf32>
      %16 = arith.cmpf ogt, %14, %15 : vector<32x8xf32>
      %cst_15 = arith.constant 2.000000e-01 : f32
      %17 = vector.broadcast %cst_15 : f32 to vector<32x8xf32>
      %18 = arith.mulf %17, %14 : vector<32x8xf32>
      %19 = arith.select %16, %14, %18 : vector<32x8xi1>, vector<32x8xf32>
      %20 = arith.truncf %19 : vector<32x8xf32> to vector<32x8xbf16>
      %c0_16 = arith.constant 0 : index
      %c0_17 = arith.constant 0 : index
      %21 = vector.load %arg5[%c0_16, %c0_17] : memref<32x8xbf16, #tpu.memory_space<vmem>>, vector<32x8xbf16>
      tpu.vector_store %arg5[%c0_16, %c0_17], %20 {strides = array<i32>} : memref<32x8xbf16, #tpu.memory_space<vmem>>, vector<32x8xbf16>,
    } else {
    }
    return
  }
  func.func @transform_0(%arg0: i32, %arg1: i32) -> (i32, i32) {
    %c0_i32 = arith.constant 0 : i32
    return %arg0, %arg1 : i32, i32
  }
  func.func @transform_1(%arg0: i32, %arg1: i32) -> (i32, i32) {
    %c0_i32 = arith.constant 0 : i32
    %c0_i32_0 = arith.constant 0 : i32
    return %arg1, %c0_i32 : i32, i32
  }
  func.func @transform_2(%arg0: i32, %arg1: i32) -> (i32, i32) {
    %c0_i32 = arith.constant 0 : i32
    %c0_i32_0 = arith.constant 0 : i32
    return %arg0, %c0_i32 : i32, i32
  }
  func.func @transform_3(%arg0: i32, %arg1: i32) -> (i32, i32) {
    %c0_i32 = arith.constant 0 : i32
    %c0_i32_0 = arith.constant 0 : i32
    return %arg0, %c0_i32 : i32, i32
  }
}

module attributes {stable_mosaic.version = 11 : i64} {
  func.func @_gemm_fused_kernel(%arg0: i32, %arg1: i32, %arg2: memref<8x128xbf16, #tpu.memory_space<vmem>>, %arg3: memref<128x1xbf16, #tpu.memory_space<vmem>>, %arg4: memref<8x1xf32, #tpu.memory_space<vmem>>, %arg5: memref<8x1xf32, #tpu.memory_space<vmem>>) attributes {dimension_semantics = [#tpu.dimension_semantics<parallel>, #tpu.dimension_semantics<arbitrary>], iteration_bounds = array<i64: 1, 1>, scalar_prefetch = 0 : i64, scratch_operands = 1 : i64, tpu.core_type = #tpu.core_type<tc>, window_params = [{transform_indices = @transform_0, window_bounds = array<i64: 8, 128>}, {transform_indices = @transform_1, window_bounds = array<i64: 128, 1>}, {transform_indices = @transform_2, window_bounds = array<i64: 8, 1>}]} {
    %c0_i32 = arith.constant 0 : i32
    %0 = arith.cmpi eq, %arg1, %c0_i32 : i32
    %1 = arith.extui %0 : i1 to i32
    %c0_i32_0 = arith.constant 0 : i32
    %2 = arith.cmpi ne, %1, %c0_i32_0 : i32
    scf.if %2 {
      %cst_10 = arith.constant 0.000000e+00 : f32
      %12 = vector.broadcast %cst_10 : f32 to vector<8x1xf32>
      %c0_11 = arith.constant 0 : index
      %c0_12 = arith.constant 0 : index
      %13 = vector.load %arg5[%c0_11, %c0_12] : memref<8x1xf32, #tpu.memory_space<vmem>>, vector<8x1xf32>
      tpu.vector_store %arg5[%c0_11, %c0_12], %12 {strides = array<i32>} : memref<8x1xf32, #tpu.memory_space<vmem>>, vector<8x1xf32>,
    } else {
    }
    %c0 = arith.constant 0 : index
    %c0_1 = arith.constant 0 : index
    %3 = vector.load %arg2[%c0, %c0_1] : memref<8x128xbf16, #tpu.memory_space<vmem>>, vector<8x128xbf16>
    %c0_2 = arith.constant 0 : index
    %c0_3 = arith.constant 0 : index
    %4 = vector.load %arg5[%c0_2, %c0_3] : memref<8x1xf32, #tpu.memory_space<vmem>>, vector<8x1xf32>
    %c0_4 = arith.constant 0 : index
    %c0_5 = arith.constant 0 : index
    %5 = vector.load %arg3[%c0_4, %c0_5] : memref<128x1xbf16, #tpu.memory_space<vmem>>, vector<128x1xbf16>
    %cst = arith.constant dense<0.000000e+00> : vector<8x1xf32>
    %6 = tpu.matmul %3, %5, %cst {dimension_numbers = #tpu.dot_dimension_numbers<[1], [0], [0], [1], [0, 0, 1, 1], [], []>} : vector<8x128xbf16>, vector<128x1xbf16>, vector<8x1xf32> -> vector<8x1xf32>
    %7 = arith.addf %4, %6 : vector<8x1xf32>
    %c0_6 = arith.constant 0 : index
    %c0_7 = arith.constant 0 : index
    %8 = vector.load %arg5[%c0_6, %c0_7] : memref<8x1xf32, #tpu.memory_space<vmem>>, vector<8x1xf32>
    tpu.vector_store %arg5[%c0_6, %c0_7], %7 {strides = array<i32>} : memref<8x1xf32, #tpu.memory_space<vmem>>, vector<8x1xf32>,
    %c0_i32_8 = arith.constant 0 : i32
    %9 = arith.cmpi eq, %arg1, %c0_i32_8 : i32
    %10 = arith.extui %9 : i1 to i32
    %c0_i32_9 = arith.constant 0 : i32
    %11 = arith.cmpi ne, %10, %c0_i32_9 : i32
    scf.if %11 {
      %c0_10 = arith.constant 0 : index
      %c0_11 = arith.constant 0 : index
      %12 = vector.load %arg5[%c0_10, %c0_11] : memref<8x1xf32, #tpu.memory_space<vmem>>, vector<8x1xf32>
      %c0_12 = arith.constant 0 : index
      %c0_13 = arith.constant 0 : index
      %13 = vector.load %arg4[%c0_12, %c0_13] : memref<8x1xf32, #tpu.memory_space<vmem>>, vector<8x1xf32>
      tpu.vector_store %arg4[%c0_12, %c0_13], %12 {strides = array<i32>} : memref<8x1xf32, #tpu.memory_space<vmem>>, vector<8x1xf32>,
    } else {
    }
    return
  }
  func.func @transform_0(%arg0: i32, %arg1: i32) -> (i32, i32) {
    %c0_i32 = arith.constant 0 : i32
    return %arg0, %arg1 : i32, i32
  }
  func.func @transform_1(%arg0: i32, %arg1: i32) -> (i32, i32) {
    %c0_i32 = arith.constant 0 : i32
    %c0_i32_0 = arith.constant 0 : i32
    return %arg1, %c0_i32 : i32, i32
  }
  func.func @transform_2(%arg0: i32, %arg1: i32) -> (i32, i32) {
    %c0_i32 = arith.constant 0 : i32
    %c0_i32_0 = arith.constant 0 : i32
    return %arg0, %c0_i32 : i32, i32
  }
}

</mosaic_0001>

<llo_original>
// kernel: discriminator_forward.10
$region0: #{discriminator_forward.10}
  #allocation0 [shape = 'u32[]', space=smem, size = 0x4, offset = 0x4, fixed_abs, tag = 'smem constant byte address 0x4 - core index']
  #allocation1 [shape = 'u32[72,128]{1,0:T(1,128)}', space=vmem, size = 0x9000, scoped, tag = 'internal scratch']
  #allocation2 [shape = 'f32[128,8]{1,0:T(8,128)}', space=vmem, size = 0x10000, scoped, tag = 'scratch operand']
  %s0 = inlined_call_operand.vmem [shape: bf16[128,4], index: 0, kind: input, shape index: {}]
  %s1 = inlined_call_operand.vmem [shape: bf16[128,4], index: 1, kind: input, shape index: {}]
  %s2 = inlined_call_operand.vmem [shape: bf16[128,4], index: 2, kind: input, shape index: {}]
  %s3 = inlined_call_operand.vmem [shape: bf16[128,4], index: 3, kind: input, shape index: {}]
  %s4 = inlined_call_operand.vmem [shape: bf16[4,8], index: 4, kind: input, shape index: {}]
  %s5 = inlined_call_operand.vmem [shape: f32[1,8], index: 5, kind: input, shape index: {}]
  %s6 = inlined_call_operand.vmem [shape: bf16[128,8], index: 6, kind: output, shape index: {}]
  %s7 = sld [smem:[#allocation0]]
  $region42: #{discriminator_forward.10} parent=0
    _
  %s9 = ssub.s32 1, %s7
  %s10 = scalar_select 0, %s9, %s7
  // Predicated region
  $region2: #{discriminator_forward.10} parent=0 // pred_check
    _
  $region3: #{discriminator_forward.10} parent=0 // pred_check_branch
    %12 = sbr.rel (0) target = $region5
  $region4: #{discriminator_forward.10} parent=0 // pred_region
    _
  $region5: #{discriminator_forward.10} parent=0 // pred_fallthru
    _
  // Predicated region
  $region6: #{discriminator_forward.10} parent=0 // pred_check
    _
  $region7: #{discriminator_forward.10} parent=0 // pred_check_branch
    %14 = sbr.rel (0) target = $region9
  $region8: #{discriminator_forward.10} parent=0 // pred_region
    _
  $region9: #{discriminator_forward.10} parent=0 // pred_fallthru
    _
  // Predicated region
  $region10: #{discriminator_forward.10} parent=0 // pred_check
    _
  $region11: #{discriminator_forward.10} parent=0 // pred_check_branch
    %16 = sbr.rel (0) target = $region13
  $region12: #{discriminator_forward.10} parent=0 // pred_region
    _
  $region13: #{discriminator_forward.10} parent=0 // pred_fallthru
    _
  // Predicated region
  $region14: #{discriminator_forward.10} parent=0 // pred_check
    _
  $region15: #{discriminator_forward.10} parent=0 // pred_check_branch
    %18 = sbr.rel (0) target = $region17
  $region16: #{discriminator_forward.10} parent=0 // pred_region
    _
  $region17: #{discriminator_forward.10} parent=0 // pred_fallthru
    _
  // Predicated region
  $region18: #{discriminator_forward.10} parent=0 // pred_check
    _
  $region19: #{discriminator_forward.10} parent=0 // pred_check_branch
    %20 = sbr.rel (0) target = $region21
  $region20: #{discriminator_forward.10} parent=0 // pred_region
    _
  $region21: #{discriminator_forward.10} parent=0 // pred_fallthru
    _
  // Predicated region
  $region22: #{discriminator_forward.10} parent=0 // pred_check
    _
  $region23: #{discriminator_forward.10} parent=0 // pred_check_branch
    %22 = sbr.rel (0) target = $region25
  $region24: #{discriminator_forward.10} parent=0 // pred_region
    _
  $region25: #{discriminator_forward.10} parent=0 // pred_fallthru
    _
  %p24 = scmp.eq.s32.totalorder 0, 0
  // Predicated region
  $region26: #{discriminator_forward.10} parent=0 // pred_check
    %p25 = pneg %p24
  $region27: #{discriminator_forward.10} parent=0 // pred_check_branch
    %27 = sbr.rel (%p25) target = $region29
  $region28: #{discriminator_forward.10} parent=0 // pred_region
    %vm28 = vcmask 64512
    %29 = vst.msk [vmem:[#allocation2] sm:$0xff] %vm28, 0.0
    %30 = vst.msk [vmem:[#allocation2 + $0x8] sm:$0xff] %vm28, 0.0
    %31 = vst.msk [vmem:[#allocation2 + $0x10] sm:$0xff] %vm28, 0.0
    %32 = vst.msk [vmem:[#allocation2 + $0x18] sm:$0xff] %vm28, 0.0
    %33 = vst.msk [vmem:[#allocation2 + $0x20] sm:$0xff] %vm28, 0.0
    %34 = vst.msk [vmem:[#allocation2 + $0x28] sm:$0xff] %vm28, 0.0
    %35 = vst.msk [vmem:[#allocation2 + $0x30] sm:$0xff] %vm28, 0.0
    %36 = vst.msk [vmem:[#allocation2 + $0x38] sm:$0xff] %vm28, 0.0
    %37 = vst.msk [vmem:[#allocation2 + $0x40] sm:$0xff] %vm28, 0.0
    %38 = vst.msk [vmem:[#allocation2 + $0x48] sm:$0xff] %vm28, 0.0
    %39 = vst.msk [vmem:[#allocation2 + $0x50] sm:$0xff] %vm28, 0.0
    %40 = vst.msk [vmem:[#allocation2 + $0x58] sm:$0xff] %vm28, 0.0
    %41 = vst.msk [vmem:[#allocation2 + $0x60] sm:$0xff] %vm28, 0.0
    %42 = vst.msk [vmem:[#allocation2 + $0x68] sm:$0xff] %vm28, 0.0
    %43 = vst.msk [vmem:[#allocation2 + $0x70] sm:$0xff] %vm28, 0.0
    %44 = vst.msk [vmem:[#allocation2 + $0x78] sm:$0xff] %vm28, 0.0
  $region29: #{discriminator_forward.10} parent=0 // pred_fallthru
    _
  %v45 = vld [vmem:[%s0] sm:$0xf]
  %v46 = vld [vmem:[%s0 + $0x4] sm:$0xf]
  %v47 = vld [vmem:[%s0 + $0x8] sm:$0xf]
  %v48 = vld [vmem:[%s0 + $0xc] sm:$0xf]
  %v49 = vld [vmem:[%s0 + $0x10] sm:$0xf]
  %v50 = vld [vmem:[%s0 + $0x14] sm:$0xf]
  %v51 = vld [vmem:[%s0 + $0x18] sm:$0xf]
  %v52 = vld [vmem:[%s0 + $0x1c] sm:$0xf]
  %v53 = vld [vmem:[%s0 + $0x20] sm:$0xf]
  %v54 = vld [vmem:[%s0 + $0x24] sm:$0xf]
  %v55 = vld [vmem:[%s0 + $0x28] sm:$0xf]
  %v56 = vld [vmem:[%s0 + $0x2c] sm:$0xf]
  %v57 = vld [vmem:[%s0 + $0x30] sm:$0xf]
  %v58 = vld [vmem:[%s0 + $0x34] sm:$0xf]
  %v59 = vld [vmem:[%s0 + $0x38] sm:$0xf]
  %v60 = vld [vmem:[%s0 + $0x3c] sm:$0xf]
  %v61 = vunpack.c.l.bf16 %v45
  %v62 = vunpack.c.l.bf16 %v46
  %v63 = vunpack.c.l.bf16 %v47
  %v64 = vunpack.c.l.bf16 %v48
  %v65 = vunpack.c.l.bf16 %v49
  %v66 = vunpack.c.l.bf16 %v50
  %v67 = vunpack.c.l.bf16 %v51
  %v68 = vunpack.c.l.bf16 %v52
  %v69 = vunpack.c.l.bf16 %v53
  %v70 = vunpack.c.l.bf16 %v54
  %v71 = vunpack.c.l.bf16 %v55
  %v72 = vunpack.c.l.bf16 %v56
  %v73 = vunpack.c.l.bf16 %v57
  %v74 = vunpack.c.l.bf16 %v58
  %v75 = vunpack.c.l.bf16 %v59
  %v76 = vunpack.c.l.bf16 %v60
  %v77 = vld [vmem:[%s1] sm:$0xf]
  %v78 = vld [vmem:[%s1 + $0x4] sm:$0xf]
  %v79 = vld [vmem:[%s1 + $0x8] sm:$0xf]
  %v80 = vld [vmem:[%s1 + $0xc] sm:$0xf]
  %v81 = vld [vmem:[%s1 + $0x10] sm:$0xf]
  %v82 = vld [vmem:[%s1 + $0x14] sm:$0xf]
  %v83 = vld [vmem:[%s1 + $0x18] sm:$0xf]
  %v84 = vld [vmem:[%s1 + $0x1c] sm:$0xf]
  %v85 = vld [vmem:[%s1 + $0x20] sm:$0xf]
  %v86 = vld [vmem:[%s1 + $0x24] sm:$0xf]
  %v87 = vld [vmem:[%s1 + $0x28] sm:$0xf]
  %v88 = vld [vmem:[%s1 + $0x2c] sm:$0xf]
  %v89 = vld [vmem:[%s1 + $0x30] sm:$0xf]
  %v90 = vld [vmem:[%s1 + $0x34] sm:$0xf]
  %v91 = vld [vmem:[%s1 + $0x38] sm:$0xf]
  %v92 = vld [vmem:[%s1 + $0x3c] sm:$0xf]
  %v93 = vunpack.c.l.bf16 %v77
  %v94 = vunpack.c.l.bf16 %v78
  %v95 = vunpack.c.l.bf16 %v79
  %v96 = vunpack.c.l.bf16 %v80
  %v97 = vunpack.c.l.bf16 %v81
  %v98 = vunpack.c.l.bf16 %v82
  %v99 = vunpack.c.l.bf16 %v83
  %v100 = vunpack.c.l.bf16 %v84
  %v101 = vunpack.c.l.bf16 %v85
  %v102 = vunpack.c.l.bf16 %v86
  %v103 = vunpack.c.l.bf16 %v87
  %v104 = vunpack.c.l.bf16 %v88
  %v105 = vunpack.c.l.bf16 %v89
  %v106 = vunpack.c.l.bf16 %v90
  %v107 = vunpack.c.l.bf16 %v91
  %v108 = vunpack.c.l.bf16 %v92
  %v109 = vadd.f32 %v61, %v93
  %v110 = vadd.f32 %v62, %v94
  %v111 = vadd.f32 %v63, %v95
  %v112 = vadd.f32 %v64, %v96
  %v113 = vadd.f32 %v65, %v97
  %v114 = vadd.f32 %v66, %v98
  %v115 = vadd.f32 %v67, %v99
  %v116 = vadd.f32 %v68, %v100
  %v117 = vadd.f32 %v69, %v101
  %v118 = vadd.f32 %v70, %v102
  %v119 = vadd.f32 %v71, %v103
  %v120 = vadd.f32 %v72, %v104
  %v121 = vadd.f32 %v73, %v105
  %v122 = vadd.f32 %v74, %v106
  %v123 = vadd.f32 %v75, %v107
  %v124 = vadd.f32 %v76, %v108
  %v125 = vld [vmem:[%s2] sm:$0xf]
  %v126 = vld [vmem:[%s2 + $0x4] sm:$0xf]
  %v127 = vld [vmem:[%s2 + $0x8] sm:$0xf]
  %v128 = vld [vmem:[%s2 + $0xc] sm:$0xf]
  %v129 = vld [vmem:[%s2 + $0x10] sm:$0xf]
  %v130 = vld [vmem:[%s2 + $0x14] sm:$0xf]
  %v131 = vld [vmem:[%s2 + $0x18] sm:$0xf]
  %v132 = vld [vmem:[%s2 + $0x1c] sm:$0xf]
  %v133 = vld [vmem:[%s2 + $0x20] sm:$0xf]
  %v134 = vld [vmem:[%s2 + $0x24] sm:$0xf]
  %v135 = vld [vmem:[%s2 + $0x28] sm:$0xf]
  %v136 = vld [vmem:[%s2 + $0x2c] sm:$0xf]
  %v137 = vld [vmem:[%s2 + $0x30] sm:$0xf]
  %v138 = vld [vmem:[%s2 + $0x34] sm:$0xf]
  %v139 = vld [vmem:[%s2 + $0x38] sm:$0xf]
  %v140 = vld [vmem:[%s2 + $0x3c] sm:$0xf]
  %v141 = vunpack.c.l.bf16 %v125
  %v142 = vunpack.c.l.bf16 %v126
  %v143 = vunpack.c.l.bf16 %v127
  %v144 = vunpack.c.l.bf16 %v128
  %v145 = vunpack.c.l.bf16 %v129
  %v146 = vunpack.c.l.bf16 %v130
  %v147 = vunpack.c.l.bf16 %v131
  %v148 = vunpack.c.l.bf16 %v132
  %v149 = vunpack.c.l.bf16 %v133
  %v150 = vunpack.c.l.bf16 %v134
  %v151 = vunpack.c.l.bf16 %v135
  %v152 = vunpack.c.l.bf16 %v136
  %v153 = vunpack.c.l.bf16 %v137
  %v154 = vunpack.c.l.bf16 %v138
  %v155 = vunpack.c.l.bf16 %v139
  %v156 = vunpack.c.l.bf16 %v140
  %v157 = vadd.f32 %v109, %v141
  %v158 = vadd.f32 %v110, %v142
  %v159 = vadd.f32 %v111, %v143
  %v160 = vadd.f32 %v112, %v144
  %v161 = vadd.f32 %v113, %v145
  %v162 = vadd.f32 %v114, %v146
  %v163 = vadd.f32 %v115, %v147
  %v164 = vadd.f32 %v116, %v148
  %v165 = vadd.f32 %v117, %v149
  %v166 = vadd.f32 %v118, %v150
  %v167 = vadd.f32 %v119, %v151
  %v168 = vadd.f32 %v120, %v152
  %v169 = vadd.f32 %v121, %v153
  %v170 = vadd.f32 %v122, %v154
  %v171 = vadd.f32 %v123, %v155
  %v172 = vadd.f32 %v124, %v156
  %v173 = vld [vmem:[%s3] sm:$0xf]
  %v174 = vld [vmem:[%s3 + $0x4] sm:$0xf]
  %v175 = vld [vmem:[%s3 + $0x8] sm:$0xf]
  %v176 = vld [vmem:[%s3 + $0xc] sm:$0xf]
  %v177 = vld [vmem:[%s3 + $0x10] sm:$0xf]
  %v178 = vld [vmem:[%s3 + $0x14] sm:$0xf]
  %v179 = vld [vmem:[%s3 + $0x18] sm:$0xf]
  %v180 = vld [vmem:[%s3 + $0x1c] sm:$0xf]
  %v181 = vld [vmem:[%s3 + $0x20] sm:$0xf]
  %v182 = vld [vmem:[%s3 + $0x24] sm:$0xf]
  %v183 = vld [vmem:[%s3 + $0x28] sm:$0xf]
  %v184 = vld [vmem:[%s3 + $0x2c] sm:$0xf]
  %v185 = vld [vmem:[%s3 + $0x30] sm:$0xf]
  %v186 = vld [vmem:[%s3 + $0x34] sm:$0xf]
  %v187 = vld [vmem:[%s3 + $0x38] sm:$0xf]
  %v188 = vld [vmem:[%s3 + $0x3c] sm:$0xf]
  %v189 = vunpack.c.l.bf16 %v173
  %v190 = vunpack.c.l.bf16 %v174
  %v191 = vunpack.c.l.bf16 %v175
  %v192 = vunpack.c.l.bf16 %v176
  %v193 = vunpack.c.l.bf16 %v177
  %v194 = vunpack.c.l.bf16 %v178
  %v195 = vunpack.c.l.bf16 %v179
  %v196 = vunpack.c.l.bf16 %v180
  %v197 = vunpack.c.l.bf16 %v181
  %v198 = vunpack.c.l.bf16 %v182
  %v199 = vunpack.c.l.bf16 %v183
  %v200 = vunpack.c.l.bf16 %v184
  %v201 = vunpack.c.l.bf16 %v185
  %v202 = vunpack.c.l.bf16 %v186
  %v203 = vunpack.c.l.bf16 %v187
  %v204 = vunpack.c.l.bf16 %v188
  %v205 = vadd.f32 %v157, %v189
  %v206 = vadd.f32 %v158, %v190
  %v207 = vadd.f32 %v159, %v191
  %v208 = vadd.f32 %v160, %v192
  %v209 = vadd.f32 %v161, %v193
  %v210 = vadd.f32 %v162, %v194
  %v211 = vadd.f32 %v163, %v195
  %v212 = vadd.f32 %v164, %v196
  %v213 = vadd.f32 %v165, %v197
  %v214 = vadd.f32 %v166, %v198
  %v215 = vadd.f32 %v167, %v199
  %v216 = vadd.f32 %v168, %v200
  %v217 = vadd.f32 %v169, %v201
  %v218 = vadd.f32 %v170, %v202
  %v219 = vadd.f32 %v171, %v203
  %v220 = vadd.f32 %v172, %v204
  %v221 = vpack.c.bf16 %v206, %v205
  %v222 = vpack.c.bf16 %v208, %v207
  %v223 = vpack.c.bf16 %v210, %v209
  %v224 = vpack.c.bf16 %v212, %v211
  %v225 = vpack.c.bf16 %v214, %v213
  %v226 = vpack.c.bf16 %v216, %v215
  %v227 = vpack.c.bf16 %v218, %v217
  %v228 = vpack.c.bf16 %v220, %v219
  %v229 = vld [vmem:[#allocation2] sm:$0xff]
  %v230 = vld [vmem:[#allocation2 + $0x8] sm:$0xff]
  %v231 = vld [vmem:[#allocation2 + $0x10] sm:$0xff]
  %v232 = vld [vmem:[#allocation2 + $0x18] sm:$0xff]
  %v233 = vld [vmem:[#allocation2 + $0x20] sm:$0xff]
  %v234 = vld [vmem:[#allocation2 + $0x28] sm:$0xff]
  %v235 = vld [vmem:[#allocation2 + $0x30] sm:$0xff]
  %v236 = vld [vmem:[#allocation2 + $0x38] sm:$0xff]
  %v237 = vld [vmem:[#allocation2 + $0x40] sm:$0xff]
  %v238 = vld [vmem:[#allocation2 + $0x48] sm:$0xff]
  %v239 = vld [vmem:[#allocation2 + $0x50] sm:$0xff]
  %v240 = vld [vmem:[#allocation2 + $0x58] sm:$0xff]
  %v241 = vld [vmem:[#allocation2 + $0x60] sm:$0xff]
  %v242 = vld [vmem:[#allocation2 + $0x68] sm:$0xff]
  %v243 = vld [vmem:[#allocation2 + $0x70] sm:$0xff]
  %v244 = vld [vmem:[#allocation2 + $0x78] sm:$0xff]
  %v245 = vld [vmem:[%s4] sm:$0x3]
  %vm246 = vcmask 31744
  %v248 = vsel %vm246, %v221, 0
  %v251 = vsel %vm246, %v222, 0
  %v254 = vsel %vm246, %v223, 0
  %v257 = vsel %vm246, %v224, 0
  %v260 = vsel %vm246, %v225, 0
  %v263 = vsel %vm246, %v226, 0
  %v266 = vsel %vm246, %v227, 0
  %v269 = vsel %vm246, %v228, 0
  %vm271 = vcmask 1041408
  %v273 = vsel %vm271, %v245, 0
  %275 = vmatpush.bf16.msra.mxu0 0
  %276 = vmatpush.bf16.msra.mxu0 0
  %277 = vmatpush.bf16.msra.mxu0 0
  %278 = vmatpush.bf16.msra.mxu0 0
  %279 = vmatpush.bf16.msra.mxu0 0
  %280 = vmatpush.bf16.msra.mxu0 0
  %281 = vmatpush.bf16.msra.mxu0 0
  %282 = vmatpush.bf16.msra.mxu0 %v273
  %283 = vmatmul.bf16.gmra.mxu0 %v248
  %v284 = vpop.f32.mrf.mxu0
  %v285 = vadd.f32 0.0, %v284
  %v286 = vpop.f32.mrf.mxu0
  %v287 = vadd.f32 0.0, %v286
  %288 = vmatmul.bf16.gmra.mxu0 %v251
  %v289 = vpop.f32.mrf.mxu0
  %v290 = vadd.f32 0.0, %v289
  %v291 = vpop.f32.mrf.mxu0
  %v292 = vadd.f32 0.0, %v291
  %293 = vmatmul.bf16.gmra.mxu0 %v254
  %v294 = vpop.f32.mrf.mxu0
  %v295 = vadd.f32 0.0, %v294
  %v296 = vpop.f32.mrf.mxu0
  %v297 = vadd.f32 0.0, %v296
  %298 = vmatmul.bf16.gmra.mxu0 %v257
  %v299 = vpop.f32.mrf.mxu0
  %v300 = vadd.f32 0.0, %v299
  %v301 = vpop.f32.mrf.mxu0
  %v302 = vadd.f32 0.0, %v301
  %303 = vmatmul.bf16.gmra.mxu0 %v260
  %v304 = vpop.f32.mrf.mxu0
  %v305 = vadd.f32 0.0, %v304
  %v306 = vpop.f32.mrf.mxu0
  %v307 = vadd.f32 0.0, %v306
  %308 = vmatmul.bf16.gmra.mxu0 %v263
  %v309 = vpop.f32.mrf.mxu0
  %v310 = vadd.f32 0.0, %v309
  %v311 = vpop.f32.mrf.mxu0
  %v312 = vadd.f32 0.0, %v311
  %313 = vmatmul.bf16.gmra.mxu0 %v266
  %v314 = vpop.f32.mrf.mxu0
  %v315 = vadd.f32 0.0, %v314
  %v316 = vpop.f32.mrf.mxu0
  %v317 = vadd.f32 0.0, %v316
  %318 = vmatmul.bf16.gmra.mxu0 %v269
  %v319 = vpop.f32.mrf.mxu0
  %v320 = vadd.f32 0.0, %v319
  %v321 = vpop.f32.mrf.mxu0
  %v322 = vadd.f32 0.0, %v321
  %323 = vdwg.mxu0
  %v324 = vadd.f32 %v229, %v285
  %v325 = vadd.f32 %v230, %v287
  %v326 = vadd.f32 %v231, %v290
  %v327 = vadd.f32 %v232, %v292
  %v328 = vadd.f32 %v233, %v295
  %v329 = vadd.f32 %v234, %v297
  %v330 = vadd.f32 %v235, %v300
  %v331 = vadd.f32 %v236, %v302
  %v332 = vadd.f32 %v237, %v305
  %v333 = vadd.f32 %v238, %v307
  %v334 = vadd.f32 %v239, %v310
  %v335 = vadd.f32 %v240, %v312
  %v336 = vadd.f32 %v241, %v315
  %v337 = vadd.f32 %v242, %v317
  %v338 = vadd.f32 %v243, %v320
  %v339 = vadd.f32 %v244, %v322
  %vm340 = vcmask 64512
  %341 = vst.msk [vmem:[#allocation2] sm:$0xff] %vm340, %v324
  %342 = vst.msk [vmem:[#allocation2 + $0x8] sm:$0xff] %vm340, %v325
  %343 = vst.msk [vmem:[#allocation2 + $0x10] sm:$0xff] %vm340, %v326
  %344 = vst.msk [vmem:[#allocation2 + $0x18] sm:$0xff] %vm340, %v327
  %345 = vst.msk [vmem:[#allocation2 + $0x20] sm:$0xff] %vm340, %v328
  %346 = vst.msk [vmem:[#allocation2 + $0x28] sm:$0xff] %vm340, %v329
  %347 = vst.msk [vmem:[#allocation2 + $0x30] sm:$0xff] %vm340, %v330
  %348 = vst.msk [vmem:[#allocation2 + $0x38] sm:$0xff] %vm340, %v331
  %349 = vst.msk [vmem:[#allocation2 + $0x40] sm:$0xff] %vm340, %v332
  %350 = vst.msk [vmem:[#allocation2 + $0x48] sm:$0xff] %vm340, %v333
  %351 = vst.msk [vmem:[#allocation2 + $0x50] sm:$0xff] %vm340, %v334
  %352 = vst.msk [vmem:[#allocation2 + $0x58] sm:$0xff] %vm340, %v335
  %353 = vst.msk [vmem:[#allocation2 + $0x60] sm:$0xff] %vm340, %v336
  %354 = vst.msk [vmem:[#allocation2 + $0x68] sm:$0xff] %vm340, %v337
  %355 = vst.msk [vmem:[#allocation2 + $0x70] sm:$0xff] %vm340, %v338
  %356 = vst.msk [vmem:[#allocation2 + $0x78] sm:$0xff] %vm340, %v339
  // Predicated region
  $region30: #{discriminator_forward.10} parent=0 // pred_check
    %p357 = pneg %p24
  $region31: #{discriminator_forward.10} parent=0 // pred_check_branch
    %359 = sbr.rel (%p357) target = $region33
  $region32: #{discriminator_forward.10} parent=0 // pred_region
    %v360 = vld [vmem:[#allocation2] sm:$0xff]
    %v361 = vld [vmem:[#allocation2 + $0x8] sm:$0xff]
    %v362 = vld [vmem:[#allocation2 + $0x10] sm:$0xff]
    %v363 = vld [vmem:[#allocation2 + $0x18] sm:$0xff]
    %v364 = vld [vmem:[#allocation2 + $0x20] sm:$0xff]
    %v365 = vld [vmem:[#allocation2 + $0x28] sm:$0xff]
    %v366 = vld [vmem:[#allocation2 + $0x30] sm:$0xff]
    %v367 = vld [vmem:[#allocation2 + $0x38] sm:$0xff]
    %v368 = vld [vmem:[#allocation2 + $0x40] sm:$0xff]
    %v369 = vld [vmem:[#allocation2 + $0x48] sm:$0xff]
    %v370 = vld [vmem:[#allocation2 + $0x50] sm:$0xff]
    %v371 = vld [vmem:[#allocation2 + $0x58] sm:$0xff]
    %v372 = vld [vmem:[#allocation2 + $0x60] sm:$0xff]
    %v373 = vld [vmem:[#allocation2 + $0x68] sm:$0xff]
    %v374 = vld [vmem:[#allocation2 + $0x70] sm:$0xff]
    %v375 = vld [vmem:[#allocation2 + $0x78] sm:$0xff]
    %v376 = vld [vmem:[%s5] sm:$0x1]
    %v378 = vperm.slane %v376, 0
    %v380 = vadd.f32 %v360, %v378
    %v381 = vadd.f32 %v361, %v378
    %v382 = vadd.f32 %v362, %v378
    %v383 = vadd.f32 %v363, %v378
    %v384 = vadd.f32 %v364, %v378
    %v385 = vadd.f32 %v365, %v378
    %v386 = vadd.f32 %v366, %v378
    %v387 = vadd.f32 %v367, %v378
    %v388 = vadd.f32 %v368, %v378
    %v389 = vadd.f32 %v369, %v378
    %v390 = vadd.f32 %v370, %v378
    %v391 = vadd.f32 %v371, %v378
    %v392 = vadd.f32 %v372, %v378
    %v393 = vadd.f32 %v373, %v378
    %v394 = vadd.f32 %v374, %v378
    %v395 = vadd.f32 %v375, %v378
    %v396 = vpack.c.bf16 %v380, %v380
    %v397 = vpack.c.bf16 %v381, %v381
    %v398 = vpack.c.bf16 %v382, %v382
    %v399 = vpack.c.bf16 %v383, %v383
    %v400 = vpack.c.bf16 %v384, %v384
    %v401 = vpack.c.bf16 %v385, %v385
    %v402 = vpack.c.bf16 %v386, %v386
    %v403 = vpack.c.bf16 %v387, %v387
    %v404 = vpack.c.bf16 %v388, %v388
    %v405 = vpack.c.bf16 %v389, %v389
    %v406 = vpack.c.bf16 %v390, %v390
    %v407 = vpack.c.bf16 %v391, %v391
    %v408 = vpack.c.bf16 %v392, %v392
    %v409 = vpack.c.bf16 %v393, %v393
    %v410 = vpack.c.bf16 %v394, %v394
    %v411 = vpack.c.bf16 %v395, %v395
    %vm412 = vcmask 60416
    %413 = vst.msk [vmem:[%s6] sm:$0xf] %vm412, %v396
    %414 = vst.msk [vmem:[%s6 + $0x4] sm:$0xf] %vm412, %v397
    %415 = vst.msk [vmem:[%s6 + $0x8] sm:$0xf] %vm412, %v398
    %416 = vst.msk [vmem:[%s6 + $0xc] sm:$0xf] %vm412, %v399
    %417 = vst.msk [vmem:[%s6 + $0x10] sm:$0xf] %vm412, %v400
    %418 = vst.msk [vmem:[%s6 + $0x14] sm:$0xf] %vm412, %v401
    %419 = vst.msk [vmem:[%s6 + $0x18] sm:$0xf] %vm412, %v402
    %420 = vst.msk [vmem:[%s6 + $0x1c] sm:$0xf] %vm412, %v403
    %421 = vst.msk [vmem:[%s6 + $0x20] sm:$0xf] %vm412, %v404
    %422 = vst.msk [vmem:[%s6 + $0x24] sm:$0xf] %vm412, %v405
    %423 = vst.msk [vmem:[%s6 + $0x28] sm:$0xf] %vm412, %v406
    %424 = vst.msk [vmem:[%s6 + $0x2c] sm:$0xf] %vm412, %v407
    %425 = vst.msk [vmem:[%s6 + $0x30] sm:$0xf] %vm412, %v408
    %426 = vst.msk [vmem:[%s6 + $0x34] sm:$0xf] %vm412, %v409
    %427 = vst.msk [vmem:[%s6 + $0x38] sm:$0xf] %vm412, %v410
    %428 = vst.msk [vmem:[%s6 + $0x3c] sm:$0xf] %vm412, %v411
  $region33: #{discriminator_forward.10} parent=0 // pred_fallthru
    _
  // Predicated region
  $region34: #{discriminator_forward.10} parent=0 // pred_check
    _
  $region35: #{discriminator_forward.10} parent=0 // pred_check_branch
    %430 = sbr.rel (0) target = $region37
  $region36: #{discriminator_forward.10} parent=0 // pred_region
    _
  $region37: #{discriminator_forward.10} parent=0 // pred_fallthru
    _
  // Predicated region
  $region38: #{discriminator_forward.10} parent=0 // pred_check
    _
  $region39: #{discriminator_forward.10} parent=0 // pred_check_branch
    %432 = sbr.rel (0) target = $region41
  $region40: #{discriminator_forward.10} parent=0 // pred_region
    _
  $region41: #{discriminator_forward.10} parent=0 // pred_fallthru
    _

// kernel: discriminator_forward.9
$region0: #{discriminator_forward.9}
  #allocation0 [shape = 'u32[]', space=smem, size = 0x4, offset = 0x4, fixed_abs, tag = 'smem constant byte address 0x4 - core index']
  #allocation1 [shape = 'u32[72,128]{1,0:T(1,128)}', space=vmem, size = 0x9000, scoped, tag = 'internal scratch']
  #allocation2 [shape = 'f32[512,4]{1,0:T(8,128)}', space=vmem, size = 0x40000, scoped, tag = 'scratch operand']
  %s0 = inlined_call_operand.vmem [shape: bf16[512,27], index: 0, kind: input, shape index: {}]
  %s1 = inlined_call_operand.vmem [shape: bf16[27,4], index: 1, kind: input, shape index: {}]
  %s2 = inlined_call_operand.vmem [shape: f32[1,4], index: 2, kind: input, shape index: {}]
  %s3 = inlined_call_operand.vmem [shape: bf16[512,4], index: 3, kind: output, shape index: {}]
  %s4 = sld [smem:[#allocation0]]
  $region30: #{discriminator_forward.9} parent=0
    _
  %s6 = ssub.s32 1, %s4
  %s7 = scalar_select 0, %s6, %s4
  // Predicated region
  $region2: #{discriminator_forward.9} parent=0 // pred_check
    _
  $region3: #{discriminator_forward.9} parent=0 // pred_check_branch
    %9 = sbr.rel (0) target = $region5
  $region4: #{discriminator_forward.9} parent=0 // pred_region
    _
  $region5: #{discriminator_forward.9} parent=0 // pred_fallthru
    _
  // Predicated region
  $region6: #{discriminator_forward.9} parent=0 // pred_check
    _
  $region7: #{discriminator_forward.9} parent=0 // pred_check_branch
    %11 = sbr.rel (0) target = $region9
  $region8: #{discriminator_forward.9} parent=0 // pred_region
    _
  $region9: #{discriminator_forward.9} parent=0 // pred_fallthru
    _
  // Predicated region
  $region10: #{discriminator_forward.9} parent=0 // pred_check
    _
  $region11: #{discriminator_forward.9} parent=0 // pred_check_branch
    %13 = sbr.rel (0) target = $region13
  $region12: #{discriminator_forward.9} parent=0 // pred_region
    _
  $region13: #{discriminator_forward.9} parent=0 // pred_fallthru
    _
  %p15 = scmp.eq.s32.totalorder 0, 0
  // Predicated region
  $region14: #{discriminator_forward.9} parent=0 // pred_check
    %p16 = pneg %p15
  $region15: #{discriminator_forward.9} parent=0 // pred_check_branch
    %18 = sbr.rel (%p16) target = $region17
  $region16: #{discriminator_forward.9} parent=0 // pred_region
    %vm19 = vcmask 31744
    %20 = vst.msk [vmem:[#allocation2] sm:$0xff] %vm19, 0.0
    %21 = vst.msk [vmem:[#allocation2 + $0x8] sm:$0xff] %vm19, 0.0
    %22 = vst.msk [vmem:[#allocation2 + $0x10] sm:$0xff] %vm19, 0.0
    %23 = vst.msk [vmem:[#allocation2 + $0x18] sm:$0xff] %vm19, 0.0
    %24 = vst.msk [vmem:[#allocation2 + $0x20] sm:$0xff] %vm19, 0.0
    %25 = vst.msk [vmem:[#allocation2 + $0x28] sm:$0xff] %vm19, 0.0
    %26 = vst.msk [vmem:[#allocation2 + $0x30] sm:$0xff] %vm19, 0.0
    %27 = vst.msk [vmem:[#allocation2 + $0x38] sm:$0xff] %vm19, 0.0
    %28 = vst.msk [vmem:[#allocation2 + $0x40] sm:$0xff] %vm19, 0.0
    %29 = vst.msk [vmem:[#allocation2 + $0x48] sm:$0xff] %vm19, 0.0
    %30 = vst.msk [vmem:[#allocation2 + $0x50] sm:$0xff] %vm19, 0.0
    %31 = vst.msk [vmem:[#allocation2 + $0x58] sm:$0xff] %vm19, 0.0
    %32 = vst.msk [vmem:[#allocation2 + $0x60] sm:$0xff] %vm19, 0.0
    %33 = vst.msk [vmem:[#allocation2 + $0x68] sm:$0xff] %vm19, 0.0
    %34 = vst.msk [vmem:[#allocation2 + $0x70] sm:$0xff] %vm19, 0.0
    %35 = vst.msk [vmem:[#allocation2 + $0x78] sm:$0xff] %vm19, 0.0
    %36 = vst.msk [vmem:[#allocation2 + $0x80] sm:$0xff] %vm19, 0.0
    %37 = vst.msk [vmem:[#allocation2 + $0x88] sm:$0xff] %vm19, 0.0
    %38 = vst.msk [vmem:[#allocation2 + $0x90] sm:$0xff] %vm19, 0.0
    %39 = vst.msk [vmem:[#allocation2 + $0x98] sm:$0xff] %vm19, 0.0
    %40 = vst.msk [vmem:[#allocation2 + $0xa0] sm:$0xff] %vm19, 0.0
    %41 = vst.msk [vmem:[#allocation2 + $0xa8] sm:$0xff] %vm19, 0.0
    %42 = vst.msk [vmem:[#allocation2 + $0xb0] sm:$0xff] %vm19, 0.0
    %43 = vst.msk [vmem:[#allocation2 + $0xb8] sm:$0xff] %vm19, 0.0
    %44 = vst.msk [vmem:[#allocation2 + $0xc0] sm:$0xff] %vm19, 0.0
    %45 = vst.msk [vmem:[#allocation2 + $0xc8] sm:$0xff] %vm19, 0.0
    %46 = vst.msk [vmem:[#allocation2 + $0xd0] sm:$0xff] %vm19, 0.0
    %47 = vst.msk [vmem:[#allocation2 + $0xd8] sm:$0xff] %vm19, 0.0
    %48 = vst.msk [vmem:[#allocation2 + $0xe0] sm:$0xff] %vm19, 0.0
    %49 = vst.msk [vmem:[#allocation2 + $0xe8] sm:$0xff] %vm19, 0.0
    %50 = vst.msk [vmem:[#allocation2 + $0xf0] sm:$0xff] %vm19, 0.0
    %51 = vst.msk [vmem:[#allocation2 + $0xf8] sm:$0xff] %vm19, 0.0
    %52 = vst.msk [vmem:[#allocation2 + $0x100] sm:$0xff] %vm19, 0.0
    %53 = vst.msk [vmem:[#allocation2 + $0x108] sm:$0xff] %vm19, 0.0
    %54 = vst.msk [vmem:[#allocation2 + $0x110] sm:$0xff] %vm19, 0.0
    %55 = vst.msk [vmem:[#allocation2 + $0x118] sm:$0xff] %vm19, 0.0
    %56 = vst.msk [vmem:[#allocation2 + $0x120] sm:$0xff] %vm19, 0.0
    %57 = vst.msk [vmem:[#allocation2 + $0x128] sm:$0xff] %vm19, 0.0
    %58 = vst.msk [vmem:[#allocation2 + $0x130] sm:$0xff] %vm19, 0.0
    %59 = vst.msk [vmem:[#allocation2 + $0x138] sm:$0xff] %vm19, 0.0
    %60 = vst.msk [vmem:[#allocation2 + $0x140] sm:$0xff] %vm19, 0.0
    %61 = vst.msk [vmem:[#allocation2 + $0x148] sm:$0xff] %vm19, 0.0
    %62 = vst.msk [vmem:[#allocation2 + $0x150] sm:$0xff] %vm19, 0.0
    %63 = vst.msk [vmem:[#allocation2 + $0x158] sm:$0xff] %vm19, 0.0
    %64 = vst.msk [vmem:[#allocation2 + $0x160] sm:$0xff] %vm19, 0.0
    %65 = vst.msk [vmem:[#allocation2 + $0x168] sm:$0xff] %vm19, 0.0
    %66 = vst.msk [vmem:[#allocation2 + $0x170] sm:$0xff] %vm19, 0.0
    %67 = vst.msk [vmem:[#allocation2 + $0x178] sm:$0xff] %vm19, 0.0
    %68 = vst.msk [vmem:[#allocation2 + $0x180] sm:$0xff] %vm19, 0.0
    %69 = vst.msk [vmem:[#allocation2 + $0x188] sm:$0xff] %vm19, 0.0
    %70 = vst.msk [vmem:[#allocation2 + $0x190] sm:$0xff] %vm19, 0.0
    %71 = vst.msk [vmem:[#allocation2 + $0x198] sm:$0xff] %vm19, 0.0
    %72 = vst.msk [vmem:[#allocation2 + $0x1a0] sm:$0xff] %vm19, 0.0
    %73 = vst.msk [vmem:[#allocation2 + $0x1a8] sm:$0xff] %vm19, 0.0
    %74 = vst.msk [vmem:[#allocation2 + $0x1b0] sm:$0xff] %vm19, 0.0
    %75 = vst.msk [vmem:[#allocation2 + $0x1b8] sm:$0xff] %vm19, 0.0
    %76 = vst.msk [vmem:[#allocation2 + $0x1c0] sm:$0xff] %vm19, 0.0
    %77 = vst.msk [vmem:[#allocation2 + $0x1c8] sm:$0xff] %vm19, 0.0
    %78 = vst.msk [vmem:[#allocation2 + $0x1d0] sm:$0xff] %vm19, 0.0
    %79 = vst.msk [vmem:[#allocation2 + $0x1d8] sm:$0xff] %vm19, 0.0
    %80 = vst.msk [vmem:[#allocation2 + $0x1e0] sm:$0xff] %vm19, 0.0
    %81 = vst.msk [vmem:[#allocation2 + $0x1e8] sm:$0xff] %vm19, 0.0
    %82 = vst.msk [vmem:[#allocation2 + $0x1f0] sm:$0xff] %vm19, 0.0
    %83 = vst.msk [vmem:[#allocation2 + $0x1f8] sm:$0xff] %vm19, 0.0
  $region17: #{discriminator_forward.9} parent=0 // pred_fallthru
    _
  %v84 = vld [vmem:[%s0] sm:$0xf]
  %v85 = vld [vmem:[%s0 + $0x4] sm:$0xf]
  %v86 = vld [vmem:[%s0 + $0x8] sm:$0xf]
  %v87 = vld [vmem:[%s0 + $0xc] sm:$0xf]
  %v88 = vld [vmem:[%s0 + $0x10] sm:$0xf]
  %v89 = vld [vmem:[%s0 + $0x14] sm:$0xf]
  %v90 = vld [vmem:[%s0 + $0x18] sm:$0xf]
  %v91 = vld [vmem:[%s0 + $0x1c] sm:$0xf]
  %v92 = vld [vmem:[%s0 + $0x20] sm:$0xf]
  %v93 = vld [vmem:[%s0 + $0x24] sm:$0xf]
  %v94 = vld [vmem:[%s0 + $0x28] sm:$0xf]
  %v95 = vld [vmem:[%s0 + $0x2c] sm:$0xf]
  %v96 = vld [vmem:[%s0 + $0x30] sm:$0xf]
  %v97 = vld [vmem:[%s0 + $0x34] sm:$0xf]
  %v98 = vld [vmem:[%s0 + $0x38] sm:$0xf]
  %v99 = vld [vmem:[%s0 + $0x3c] sm:$0xf]
  %v100 = vld [vmem:[%s0 + $0x40] sm:$0xf]
  %v101 = vld [vmem:[%s0 + $0x44] sm:$0xf]
  %v102 = vld [vmem:[%s0 + $0x48] sm:$0xf]
  %v103 = vld [vmem:[%s0 + $0x4c] sm:$0xf]
  %v104 = vld [vmem:[%s0 + $0x50] sm:$0xf]
  %v105 = vld [vmem:[%s0 + $0x54] sm:$0xf]
  %v106 = vld [vmem:[%s0 + $0x58] sm:$0xf]
  %v107 = vld [vmem:[%s0 + $0x5c] sm:$0xf]
  %v108 = vld [vmem:[%s0 + $0x60] sm:$0xf]
  %v109 = vld [vmem:[%s0 + $0x64] sm:$0xf]
  %v110 = vld [vmem:[%s0 + $0x68] sm:$0xf]
  %v111 = vld [vmem:[%s0 + $0x6c] sm:$0xf]
  %v112 = vld [vmem:[%s0 + $0x70] sm:$0xf]
  %v113 = vld [vmem:[%s0 + $0x74] sm:$0xf]
  %v114 = vld [vmem:[%s0 + $0x78] sm:$0xf]
  %v115 = vld [vmem:[%s0 + $0x7c] sm:$0xf]
  %v116 = vld [vmem:[%s0 + $0x80] sm:$0xf]
  %v117 = vld [vmem:[%s0 + $0x84] sm:$0xf]
  %v118 = vld [vmem:[%s0 + $0x88] sm:$0xf]
  %v119 = vld [vmem:[%s0 + $0x8c] sm:$0xf]
  %v120 = vld [vmem:[%s0 + $0x90] sm:$0xf]
  %v121 = vld [vmem:[%s0 + $0x94] sm:$0xf]
  %v122 = vld [vmem:[%s0 + $0x98] sm:$0xf]
  %v123 = vld [vmem:[%s0 + $0x9c] sm:$0xf]
  %v124 = vld [vmem:[%s0 + $0xa0] sm:$0xf]
  %v125 = vld [vmem:[%s0 + $0xa4] sm:$0xf]
  %v126 = vld [vmem:[%s0 + $0xa8] sm:$0xf]
  %v127 = vld [vmem:[%s0 + $0xac] sm:$0xf]
  %v128 = vld [vmem:[%s0 + $0xb0] sm:$0xf]
  %v129 = vld [vmem:[%s0 + $0xb4] sm:$0xf]
  %v130 = vld [vmem:[%s0 + $0xb8] sm:$0xf]
  %v131 = vld [vmem:[%s0 + $0xbc] sm:$0xf]
  %v132 = vld [vmem:[%s0 + $0xc0] sm:$0xf]
  %v133 = vld [vmem:[%s0 + $0xc4] sm:$0xf]
  %v134 = vld [vmem:[%s0 + $0xc8] sm:$0xf]
  %v135 = vld [vmem:[%s0 + $0xcc] sm:$0xf]
  %v136 = vld [vmem:[%s0 + $0xd0] sm:$0xf]
  %v137 = vld [vmem:[%s0 + $0xd4] sm:$0xf]
  %v138 = vld [vmem:[%s0 + $0xd8] sm:$0xf]
  %v139 = vld [vmem:[%s0 + $0xdc] sm:$0xf]
  %v140 = vld [vmem:[%s0 + $0xe0] sm:$0xf]
  %v141 = vld [vmem:[%s0 + $0xe4] sm:$0xf]
  %v142 = vld [vmem:[%s0 + $0xe8] sm:$0xf]
  %v143 = vld [vmem:[%s0 + $0xec] sm:$0xf]
  %v144 = vld [vmem:[%s0 + $0xf0] sm:$0xf]
  %v145 = vld [vmem:[%s0 + $0xf4] sm:$0xf]
  %v146 = vld [vmem:[%s0 + $0xf8] sm:$0xf]
  %v147 = vld [vmem:[%s0 + $0xfc] sm:$0xf]
  %v148 = vld [vmem:[#allocation2] sm:$0xff]
  %v149 = vld [vmem:[#allocation2 + $0x8] sm:$0xff]
  %v150 = vld [vmem:[#allocation2 + $0x10] sm:$0xff]
  %v151 = vld [vmem:[#allocation2 + $0x18] sm:$0xff]
  %v152 = vld [vmem:[#allocation2 + $0x20] sm:$0xff]
  %v153 = vld [vmem:[#allocation2 + $0x28] sm:$0xff]
  %v154 = vld [vmem:[#allocation2 + $0x30] sm:$0xff]
  %v155 = vld [vmem:[#allocation2 + $0x38] sm:$0xff]
  %v156 = vld [vmem:[#allocation2 + $0x40] sm:$0xff]
  %v157 = vld [vmem:[#allocation2 + $0x48] sm:$0xff]
  %v158 = vld [vmem:[#allocation2 + $0x50] sm:$0xff]
  %v159 = vld [vmem:[#allocation2 + $0x58] sm:$0xff]
  %v160 = vld [vmem:[#allocation2 + $0x60] sm:$0xff]
  %v161 = vld [vmem:[#allocation2 + $0x68] sm:$0xff]
  %v162 = vld [vmem:[#allocation2 + $0x70] sm:$0xff]
  %v163 = vld [vmem:[#allocation2 + $0x78] sm:$0xff]
  %v164 = vld [vmem:[#allocation2 + $0x80] sm:$0xff]
  %v165 = vld [vmem:[#allocation2 + $0x88] sm:$0xff]
  %v166 = vld [vmem:[#allocation2 + $0x90] sm:$0xff]
  %v167 = vld [vmem:[#allocation2 + $0x98] sm:$0xff]
  %v168 = vld [vmem:[#allocation2 + $0xa0] sm:$0xff]
  %v169 = vld [vmem:[#allocation2 + $0xa8] sm:$0xff]
  %v170 = vld [vmem:[#allocation2 + $0xb0] sm:$0xff]
  %v171 = vld [vmem:[#allocation2 + $0xb8] sm:$0xff]
  %v172 = vld [vmem:[#allocation2 + $0xc0] sm:$0xff]
  %v173 = vld [vmem:[#allocation2 + $0xc8] sm:$0xff]
  %v174 = vld [vmem:[#allocation2 + $0xd0] sm:$0xff]
  %v175 = vld [vmem:[#allocation2 + $0xd8] sm:$0xff]
  %v176 = vld [vmem:[#allocation2 + $0xe0] sm:$0xff]
  %v177 = vld [vmem:[#allocation2 + $0xe8] sm:$0xff]
  %v178 = vld [vmem:[#allocation2 + $0xf0] sm:$0xff]
  %v179 = vld [vmem:[#allocation2 + $0xf8] sm:$0xff]
  %v180 = vld [vmem:[#allocation2 + $0x100] sm:$0xff]
  %v181 = vld [vmem:[#allocation2 + $0x108] sm:$0xff]
  %v182 = vld [vmem:[#allocation2 + $0x110] sm:$0xff]
  %v183 = vld [vmem:[#allocation2 + $0x118] sm:$0xff]
  %v184 = vld [vmem:[#allocation2 + $0x120] sm:$0xff]
  %v185 = vld [vmem:[#allocation2 + $0x128] sm:$0xff]
  %v186 = vld [vmem:[#allocation2 + $0x130] sm:$0xff]
  %v187 = vld [vmem:[#allocation2 + $0x138] sm:$0xff]
  %v188 = vld [vmem:[#allocation2 + $0x140] sm:$0xff]
  %v189 = vld [vmem:[#allocation2 + $0x148] sm:$0xff]
  %v190 = vld [vmem:[#allocation2 + $0x150] sm:$0xff]
  %v191 = vld [vmem:[#allocation2 + $0x158] sm:$0xff]
  %v192 = vld [vmem:[#allocation2 + $0x160] sm:$0xff]
  %v193 = vld [vmem:[#allocation2 + $0x168] sm:$0xff]
  %v194 = vld [vmem:[#allocation2 + $0x170] sm:$0xff]
  %v195 = vld [vmem:[#allocation2 + $0x178] sm:$0xff]
  %v196 = vld [vmem:[#allocation2 + $0x180] sm:$0xff]
  %v197 = vld [vmem:[#allocation2 + $0x188] sm:$0xff]
  %v198 = vld [vmem:[#allocation2 + $0x190] sm:$0xff]
  %v199 = vld [vmem:[#allocation2 + $0x198] sm:$0xff]
  %v200 = vld [vmem:[#allocation2 + $0x1a0] sm:$0xff]
  %v201 = vld [vmem:[#allocation2 + $0x1a8] sm:$0xff]
  %v202 = vld [vmem:[#allocation2 + $0x1b0] sm:$0xff]
  %v203 = vld [vmem:[#allocation2 + $0x1b8] sm:$0xff]
  %v204 = vld [vmem:[#allocation2 + $0x1c0] sm:$0xff]
  %v205 = vld [vmem:[#allocation2 + $0x1c8] sm:$0xff]
  %v206 = vld [vmem:[#allocation2 + $0x1d0] sm:$0xff]
  %v207 = vld [vmem:[#allocation2 + $0x1d8] sm:$0xff]
  %v208 = vld [vmem:[#allocation2 + $0x1e0] sm:$0xff]
  %v209 = vld [vmem:[#allocation2 + $0x1e8] sm:$0xff]
  %v210 = vld [vmem:[#allocation2 + $0x1f0] sm:$0xff]
  %v211 = vld [vmem:[#allocation2 + $0x1f8] sm:$0xff]
  %v212 = vld [vmem:[%s1] sm:$0xf]
  %v213 = vld [vmem:[%s1 + $0x4] sm:$0xf]
  %v214 = vld [vmem:[%s1 + $0x8] sm:$0xf]
  %v215 = vld [vmem:[%s1 + $0xc] sm:$0x3]
  %v280 = vunpack.c.l.b16 %v84
  %v281 = vunpack.c.l.b16 %v85
  %v282 = vunpack.c.l.b16 %v86
  %v283 = vunpack.c.l.b16 %v87
  %v284 = vunpack.c.l.b16 %v88
  %v285 = vunpack.c.l.b16 %v89
  %v286 = vunpack.c.l.b16 %v90
  %v287 = vunpack.c.l.b16 %v91
  %v288 = vunpack.c.l.b16 %v92
  %v289 = vunpack.c.l.b16 %v93
  %v290 = vunpack.c.l.b16 %v94
  %v291 = vunpack.c.l.b16 %v95
  %v292 = vunpack.c.l.b16 %v96
  %v293 = vunpack.c.l.b16 %v97
  %v294 = vunpack.c.l.b16 %v98
  %v295 = vunpack.c.l.b16 %v99
  %v296 = vunpack.c.l.b16 %v100
  %v297 = vunpack.c.l.b16 %v101
  %v298 = vunpack.c.l.b16 %v102
  %v299 = vunpack.c.l.b16 %v103
  %v300 = vunpack.c.l.b16 %v104
  %v301 = vunpack.c.l.b16 %v105
  %v302 = vunpack.c.l.b16 %v106
  %v303 = vunpack.c.l.b16 %v107
  %v304 = vunpack.c.l.b16 %v108
  %v305 = vunpack.c.l.b16 %v109
  %v306 = vunpack.c.l.b16 %v110
  %v307 = vunpack.c.l.b16 %v111
  %v308 = vunpack.c.l.b16 %v112
  %v309 = vunpack.c.l.b16 %v113
  %v310 = vunpack.c.l.b16 %v114
  %v311 = vunpack.c.l.b16 %v115
  %v312 = vunpack.c.l.b16 %v116
  %v313 = vunpack.c.l.b16 %v117
  %v314 = vunpack.c.l.b16 %v118
  %v315 = vunpack.c.l.b16 %v119
  %v316 = vunpack.c.l.b16 %v120
  %v317 = vunpack.c.l.b16 %v121
  %v318 = vunpack.c.l.b16 %v122
  %v319 = vunpack.c.l.b16 %v123
  %v320 = vunpack.c.l.b16 %v124
  %v321 = vunpack.c.l.b16 %v125
  %v322 = vunpack.c.l.b16 %v126
  %v323 = vunpack.c.l.b16 %v127
  %v324 = vunpack.c.l.b16 %v128
  %v325 = vunpack.c.l.b16 %v129
  %v326 = vunpack.c.l.b16 %v130
  %v327 = vunpack.c.l.b16 %v131
  %v328 = vunpack.c.l.b16 %v132
  %v329 = vunpack.c.l.b16 %v133
  %v330 = vunpack.c.l.b16 %v134
  %v331 = vunpack.c.l.b16 %v135
  %v332 = vunpack.c.l.b16 %v136
  %v333 = vunpack.c.l.b16 %v137
  %v334 = vunpack.c.l.b16 %v138
  %v335 = vunpack.c.l.b16 %v139
  %v336 = vunpack.c.l.b16 %v140
  %v337 = vunpack.c.l.b16 %v141
  %v338 = vunpack.c.l.b16 %v142
  %v339 = vunpack.c.l.b16 %v143
  %v340 = vunpack.c.l.b16 %v144
  %v341 = vunpack.c.l.b16 %v145
  %v342 = vunpack.c.l.b16 %v146
  %v343 = vunpack.c.l.b16 %v147
  %v344 = vpack.c.b16 %v281, %v280
  %v345 = vpack.c.b16 %v283, %v282
  %v346 = vpack.c.b16 %v285, %v284
  %v347 = vpack.c.b16 %v287, %v286
  %v348 = vpack.c.b16 %v289, %v288
  %v349 = vpack.c.b16 %v291, %v290
  %v350 = vpack.c.b16 %v293, %v292
  %v351 = vpack.c.b16 %v295, %v294
  %v352 = vpack.c.b16 %v297, %v296
  %v353 = vpack.c.b16 %v299, %v298
  %v354 = vpack.c.b16 %v301, %v300
  %v355 = vpack.c.b16 %v303, %v302
  %v356 = vpack.c.b16 %v305, %v304
  %v357 = vpack.c.b16 %v307, %v306
  %v358 = vpack.c.b16 %v309, %v308
  %v359 = vpack.c.b16 %v311, %v310
  %v360 = vpack.c.b16 %v313, %v312
  %v361 = vpack.c.b16 %v315, %v314
  %v362 = vpack.c.b16 %v317, %v316
  %v363 = vpack.c.b16 %v319, %v318
  %v364 = vpack.c.b16 %v321, %v320
  %v365 = vpack.c.b16 %v323, %v322
  %v366 = vpack.c.b16 %v325, %v324
  %v367 = vpack.c.b16 %v327, %v326
  %v368 = vpack.c.b16 %v329, %v328
  %v369 = vpack.c.b16 %v331, %v330
  %v370 = vpack.c.b16 %v333, %v332
  %v371 = vpack.c.b16 %v335, %v334
  %v372 = vpack.c.b16 %v337, %v336
  %v373 = vpack.c.b16 %v339, %v338
  %v374 = vpack.c.b16 %v341, %v340
  %v375 = vpack.c.b16 %v343, %v342
  %v380 = vunpack.c.l.b16 %v212
  %v381 = vunpack.c.l.b16 %v213
  %v382 = vunpack.c.l.b16 %v214
  %v383 = vunpack.c.l.b16 %v215
  %v384 = vpack.c.b16 %v381, %v380
  %v385 = vpack.c.b16 %v383, %v382
  %vm387 = vcmask 220160
  %v389 = vsel %vm387, %v344, 0
  %v392 = vsel %vm387, %v345, 0
  %v395 = vsel %vm387, %v346, 0
  %v398 = vsel %vm387, %v347, 0
  %v401 = vsel %vm387, %v348, 0
  %v404 = vsel %vm387, %v349, 0
  %v407 = vsel %vm387, %v350, 0
  %v410 = vsel %vm387, %v351, 0
  %v413 = vsel %vm387, %v352, 0
  %v416 = vsel %vm387, %v353, 0
  %v419 = vsel %vm387, %v354, 0
  %v422 = vsel %vm387, %v355, 0
  %v425 = vsel %vm387, %v356, 0
  %v428 = vsel %vm387, %v357, 0
  %v431 = vsel %vm387, %v358, 0
  %v434 = vsel %vm387, %v359, 0
  %v437 = vsel %vm387, %v360, 0
  %v440 = vsel %vm387, %v361, 0
  %v443 = vsel %vm387, %v362, 0
  %v446 = vsel %vm387, %v363, 0
  %v449 = vsel %vm387, %v364, 0
  %v452 = vsel %vm387, %v365, 0
  %v455 = vsel %vm387, %v366, 0
  %v458 = vsel %vm387, %v367, 0
  %v461 = vsel %vm387, %v368, 0
  %v464 = vsel %vm387, %v369, 0
  %v467 = vsel %vm387, %v370, 0
  %v470 = vsel %vm387, %v371, 0
  %v473 = vsel %vm387, %v372, 0
  %v476 = vsel %vm387, %v373, 0
  %v479 = vsel %vm387, %v374, 0
  %v482 = vsel %vm387, %v375, 0
  %vm484 = vcmask 1044480
  %vm485 = vcmask 1045504
  %v486 = vsel %vm484, 4294967295, 65535
  %v487 = vsel %vm485, %v486, 0
  %v489 = vand.u32 %v385, %v487
  %491 = vmatpush.bf16.msra.mxu0 0
  %492 = vmatpush.bf16.msra.mxu0 0
  %493 = vmatpush.bf16.msra.mxu0 0
  %494 = vmatpush.bf16.msra.mxu0 0
  %495 = vmatpush.bf16.msra.mxu0 0
  %496 = vmatpush.bf16.msra.mxu0 0
  %497 = vmatpush.bf16.msra.mxu0 %v489
  %498 = vmatpush.bf16.msra.mxu0 %v384
  %499 = vmatmul.bf16.gmra.mxu0 %v389
  %v500 = vpop.f32.mrf.mxu0
  %v501 = vadd.f32 0.0, %v500
  %v502 = vpop.f32.mrf.mxu0
  %v503 = vadd.f32 0.0, %v502
  %504 = vmatmul.bf16.gmra.mxu0 %v392
  %v505 = vpop.f32.mrf.mxu0
  %v506 = vadd.f32 0.0, %v505
  %v507 = vpop.f32.mrf.mxu0
  %v508 = vadd.f32 0.0, %v507
  %509 = vmatmul.bf16.gmra.mxu0 %v395
  %v510 = vpop.f32.mrf.mxu0
  %v511 = vadd.f32 0.0, %v510
  %v512 = vpop.f32.mrf.mxu0
  %v513 = vadd.f32 0.0, %v512
  %514 = vmatmul.bf16.gmra.mxu0 %v398
  %v515 = vpop.f32.mrf.mxu0
  %v516 = vadd.f32 0.0, %v515
  %v517 = vpop.f32.mrf.mxu0
  %v518 = vadd.f32 0.0, %v517
  %519 = vmatmul.bf16.gmra.mxu0 %v401
  %v520 = vpop.f32.mrf.mxu0
  %v521 = vadd.f32 0.0, %v520
  %v522 = vpop.f32.mrf.mxu0
  %v523 = vadd.f32 0.0, %v522
  %524 = vmatmul.bf16.gmra.mxu0 %v404
  %v525 = vpop.f32.mrf.mxu0
  %v526 = vadd.f32 0.0, %v525
  %v527 = vpop.f32.mrf.mxu0
  %v528 = vadd.f32 0.0, %v527
  %529 = vmatmul.bf16.gmra.mxu0 %v407
  %v530 = vpop.f32.mrf.mxu0
  %v531 = vadd.f32 0.0, %v530
  %v532 = vpop.f32.mrf.mxu0
  %v533 = vadd.f32 0.0, %v532
  %534 = vmatmul.bf16.gmra.mxu0 %v410
  %v535 = vpop.f32.mrf.mxu0
  %v536 = vadd.f32 0.0, %v535
  %v537 = vpop.f32.mrf.mxu0
  %v538 = vadd.f32 0.0, %v537
  %539 = vmatmul.bf16.gmra.mxu0 %v413
  %v540 = vpop.f32.mrf.mxu0
  %v541 = vadd.f32 0.0, %v540
  %v542 = vpop.f32.mrf.mxu0
  %v543 = vadd.f32 0.0, %v542
  %544 = vmatmul.bf16.gmra.mxu0 %v416
  %v545 = vpop.f32.mrf.mxu0
  %v546 = vadd.f32 0.0, %v545
  %v547 = vpop.f32.mrf.mxu0
  %v548 = vadd.f32 0.0, %v547
  %549 = vmatmul.bf16.gmra.mxu0 %v419
  %v550 = vpop.f32.mrf.mxu0
  %v551 = vadd.f32 0.0, %v550
  %v552 = vpop.f32.mrf.mxu0
  %v553 = vadd.f32 0.0, %v552
  %554 = vmatmul.bf16.gmra.mxu0 %v422
  %v555 = vpop.f32.mrf.mxu0
  %v556 = vadd.f32 0.0, %v555
  %v557 = vpop.f32.mrf.mxu0
  %v558 = vadd.f32 0.0, %v557
  %559 = vmatmul.bf16.gmra.mxu0 %v425
  %v560 = vpop.f32.mrf.mxu0
  %v561 = vadd.f32 0.0, %v560
  %v562 = vpop.f32.mrf.mxu0
  %v563 = vadd.f32 0.0, %v562
  %564 = vmatmul.bf16.gmra.mxu0 %v428
  %v565 = vpop.f32.mrf.mxu0
  %v566 = vadd.f32 0.0, %v565
  %v567 = vpop.f32.mrf.mxu0
  %v568 = vadd.f32 0.0, %v567
  %569 = vmatmul.bf16.gmra.mxu0 %v431
  %v570 = vpop.f32.mrf.mxu0
  %v571 = vadd.f32 0.0, %v570
  %v572 = vpop.f32.mrf.mxu0
  %v573 = vadd.f32 0.0, %v572
  %574 = vmatmul.bf16.gmra.mxu0 %v434
  %v575 = vpop.f32.mrf.mxu0
  %v576 = vadd.f32 0.0, %v575
  %v577 = vpop.f32.mrf.mxu0
  %v578 = vadd.f32 0.0, %v577
  %579 = vmatmul.bf16.gmra.mxu0 %v437
  %v580 = vpop.f32.mrf.mxu0
  %v581 = vadd.f32 0.0, %v580
  %v582 = vpop.f32.mrf.mxu0
  %v583 = vadd.f32 0.0, %v582
  %584 = vmatmul.bf16.gmra.mxu0 %v440
  %v585 = vpop.f32.mrf.mxu0
  %v586 = vadd.f32 0.0, %v585
  %v587 = vpop.f32.mrf.mxu0
  %v588 = vadd.f32 0.0, %v587
  %589 = vmatmul.bf16.gmra.mxu0 %v443
  %v590 = vpop.f32.mrf.mxu0
  %v591 = vadd.f32 0.0, %v590
  %v592 = vpop.f32.mrf.mxu0
  %v593 = vadd.f32 0.0, %v592
  %594 = vmatmul.bf16.gmra.mxu0 %v446
  %v595 = vpop.f32.mrf.mxu0
  %v596 = vadd.f32 0.0, %v595
  %v597 = vpop.f32.mrf.mxu0
  %v598 = vadd.f32 0.0, %v597
  %599 = vmatmul.bf16.gmra.mxu0 %v449
  %v600 = vpop.f32.mrf.mxu0
  %v601 = vadd.f32 0.0, %v600
  %v602 = vpop.f32.mrf.mxu0
  %v603 = vadd.f32 0.0, %v602
  %604 = vmatmul.bf16.gmra.mxu0 %v452
  %v605 = vpop.f32.mrf.mxu0
  %v606 = vadd.f32 0.0, %v605
  %v607 = vpop.f32.mrf.mxu0
  %v608 = vadd.f32 0.0, %v607
  %609 = vmatmul.bf16.gmra.mxu0 %v455
  %v610 = vpop.f32.mrf.mxu0
  %v611 = vadd.f32 0.0, %v610
  %v612 = vpop.f32.mrf.mxu0
  %v613 = vadd.f32 0.0, %v612
  %614 = vmatmul.bf16.gmra.mxu0 %v458
  %v615 = vpop.f32.mrf.mxu0
  %v616 = vadd.f32 0.0, %v615
  %v617 = vpop.f32.mrf.mxu0
  %v618 = vadd.f32 0.0, %v617
  %619 = vmatmul.bf16.gmra.mxu0 %v461
  %v620 = vpop.f32.mrf.mxu0
  %v621 = vadd.f32 0.0, %v620
  %v622 = vpop.f32.mrf.mxu0
  %v623 = vadd.f32 0.0, %v622
  %624 = vmatmul.bf16.gmra.mxu0 %v464
  %v625 = vpop.f32.mrf.mxu0
  %v626 = vadd.f32 0.0, %v625
  %v627 = vpop.f32.mrf.mxu0
  %v628 = vadd.f32 0.0, %v627
  %629 = vmatmul.bf16.gmra.mxu0 %v467
  %v630 = vpop.f32.mrf.mxu0
  %v631 = vadd.f32 0.0, %v630
  %v632 = vpop.f32.mrf.mxu0
  %v633 = vadd.f32 0.0, %v632
  %634 = vmatmul.bf16.gmra.mxu0 %v470
  %v635 = vpop.f32.mrf.mxu0
  %v636 = vadd.f32 0.0, %v635
  %v637 = vpop.f32.mrf.mxu0
  %v638 = vadd.f32 0.0, %v637
  %639 = vmatmul.bf16.gmra.mxu0 %v473
  %v640 = vpop.f32.mrf.mxu0
  %v641 = vadd.f32 0.0, %v640
  %v642 = vpop.f32.mrf.mxu0
  %v643 = vadd.f32 0.0, %v642
  %644 = vmatmul.bf16.gmra.mxu0 %v476
  %v645 = vpop.f32.mrf.mxu0
  %v646 = vadd.f32 0.0, %v645
  %v647 = vpop.f32.mrf.mxu0
  %v648 = vadd.f32 0.0, %v647
  %649 = vmatmul.bf16.gmra.mxu0 %v479
  %v650 = vpop.f32.mrf.mxu0
  %v651 = vadd.f32 0.0, %v650
  %v652 = vpop.f32.mrf.mxu0
  %v653 = vadd.f32 0.0, %v652
  %654 = vmatmul.bf16.gmra.mxu0 %v482
  %v655 = vpop.f32.mrf.mxu0
  %v656 = vadd.f32 0.0, %v655
  %v657 = vpop.f32.mrf.mxu0
  %v658 = vadd.f32 0.0, %v657
  %659 = vdwg.mxu0
  %v660 = vadd.f32 %v148, %v501
  %v661 = vadd.f32 %v149, %v503
  %v662 = vadd.f32 %v150, %v506
  %v663 = vadd.f32 %v151, %v508
  %v664 = vadd.f32 %v152, %v511
  %v665 = vadd.f32 %v153, %v513
  %v666 = vadd.f32 %v154, %v516
  %v667 = vadd.f32 %v155, %v518
  %v668 = vadd.f32 %v156, %v521
  %v669 = vadd.f32 %v157, %v523
  %v670 = vadd.f32 %v158, %v526
  %v671 = vadd.f32 %v159, %v528
  %v672 = vadd.f32 %v160, %v531
  %v673 = vadd.f32 %v161, %v533
  %v674 = vadd.f32 %v162, %v536
  %v675 = vadd.f32 %v163, %v538
  %v676 = vadd.f32 %v164, %v541
  %v677 = vadd.f32 %v165, %v543
  %v678 = vadd.f32 %v166, %v546
  %v679 = vadd.f32 %v167, %v548
  %v680 = vadd.f32 %v168, %v551
  %v681 = vadd.f32 %v169, %v553
  %v682 = vadd.f32 %v170, %v556
  %v683 = vadd.f32 %v171, %v558
  %v684 = vadd.f32 %v172, %v561
  %v685 = vadd.f32 %v173, %v563
  %v686 = vadd.f32 %v174, %v566
  %v687 = vadd.f32 %v175, %v568
  %v688 = vadd.f32 %v176, %v571
  %v689 = vadd.f32 %v177, %v573
  %v690 = vadd.f32 %v178, %v576
  %v691 = vadd.f32 %v179, %v578
  %v692 = vadd.f32 %v180, %v581
  %v693 = vadd.f32 %v181, %v583
  %v694 = vadd.f32 %v182, %v586
  %v695 = vadd.f32 %v183, %v588
  %v696 = vadd.f32 %v184, %v591
  %v697 = vadd.f32 %v185, %v593
  %v698 = vadd.f32 %v186, %v596
  %v699 = vadd.f32 %v187, %v598
  %v700 = vadd.f32 %v188, %v601
  %v701 = vadd.f32 %v189, %v603
  %v702 = vadd.f32 %v190, %v606
  %v703 = vadd.f32 %v191, %v608
  %v704 = vadd.f32 %v192, %v611
  %v705 = vadd.f32 %v193, %v613
  %v706 = vadd.f32 %v194, %v616
  %v707 = vadd.f32 %v195, %v618
  %v708 = vadd.f32 %v196, %v621
  %v709 = vadd.f32 %v197, %v623
  %v710 = vadd.f32 %v198, %v626
  %v711 = vadd.f32 %v199, %v628
  %v712 = vadd.f32 %v200, %v631
  %v713 = vadd.f32 %v201, %v633
  %v714 = vadd.f32 %v202, %v636
  %v715 = vadd.f32 %v203, %v638
  %v716 = vadd.f32 %v204, %v641
  %v717 = vadd.f32 %v205, %v643
  %v718 = vadd.f32 %v206, %v646
  %v719 = vadd.f32 %v207, %v648
  %v720 = vadd.f32 %v208, %v651
  %v721 = vadd.f32 %v209, %v653
  %v722 = vadd.f32 %v210, %v656
  %v723 = vadd.f32 %v211, %v658
  %vm724 = vcmask 31744
  %725 = vst.msk [vmem:[#allocation2] sm:$0xff] %vm724, %v660
  %726 = vst.msk [vmem:[#allocation2 + $0x8] sm:$0xff] %vm724, %v661
  %727 = vst.msk [vmem:[#allocation2 + $0x10] sm:$0xff] %vm724, %v662
  %728 = vst.msk [vmem:[#allocation2 + $0x18] sm:$0xff] %vm724, %v663
  %729 = vst.msk [vmem:[#allocation2 + $0x20] sm:$0xff] %vm724, %v664
  %730 = vst.msk [vmem:[#allocation2 + $0x28] sm:$0xff] %vm724, %v665
  %731 = vst.msk [vmem:[#allocation2 + $0x30] sm:$0xff] %vm724, %v666
  %732 = vst.msk [vmem:[#allocation2 + $0x38] sm:$0xff] %vm724, %v667
  %733 = vst.msk [vmem:[#allocation2 + $0x40] sm:$0xff] %vm724, %v668
  %734 = vst.msk [vmem:[#allocation2 + $0x48] sm:$0xff] %vm724, %v669
  %735 = vst.msk [vmem:[#allocation2 + $0x50] sm:$0xff] %vm724, %v670
  %736 = vst.msk [vmem:[#allocation2 + $0x58] sm:$0xff] %vm724, %v671
  %737 = vst.msk [vmem:[#allocation2 + $0x60] sm:$0xff] %vm724, %v672
  %738 = vst.msk [vmem:[#allocation2 + $0x68] sm:$0xff] %vm724, %v673
  %739 = vst.msk [vmem:[#allocation2 + $0x70] sm:$0xff] %vm724, %v674
  %740 = vst.msk [vmem:[#allocation2 + $0x78] sm:$0xff] %vm724, %v675
  %741 = vst.msk [vmem:[#allocation2 + $0x80] sm:$0xff] %vm724, %v676
  %742 = vst.msk [vmem:[#allocation2 + $0x88] sm:$0xff] %vm724, %v677
  %743 = vst.msk [vmem:[#allocation2 + $0x90] sm:$0xff] %vm724, %v678
  %744 = vst.msk [vmem:[#allocation2 + $0x98] sm:$0xff] %vm724, %v679
  %745 = vst.msk [vmem:[#allocation2 + $0xa0] sm:$0xff] %vm724, %v680
  %746 = vst.msk [vmem:[#allocation2 + $0xa8] sm:$0xff] %vm724, %v681
  %747 = vst.msk [vmem:[#allocation2 + $0xb0] sm:$0xff] %vm724, %v682
  %748 = vst.msk [vmem:[#allocation2 + $0xb8] sm:$0xff] %vm724, %v683
  %749 = vst.msk [vmem:[#allocation2 + $0xc0] sm:$0xff] %vm724, %v684
  %750 = vst.msk [vmem:[#allocation2 + $0xc8] sm:$0xff] %vm724, %v685
  %751 = vst.msk [vmem:[#allocation2 + $0xd0] sm:$0xff] %vm724, %v686
  %752 = vst.msk [vmem:[#allocation2 + $0xd8] sm:$0xff] %vm724, %v687
  %753 = vst.msk [vmem:[#allocation2 + $0xe0] sm:$0xff] %vm724, %v688
  %754 = vst.msk [vmem:[#allocation2 + $0xe8] sm:$0xff] %vm724, %v689
  %755 = vst.msk [vmem:[#allocation2 + $0xf0] sm:$0xff] %vm724, %v690
  %756 = vst.msk [vmem:[#allocation2 + $0xf8] sm:$0xff] %vm724, %v691
  %757 = vst.msk [vmem:[#allocation2 + $0x100] sm:$0xff] %vm724, %v692
  %758 = vst.msk [vmem:[#allocation2 + $0x108] sm:$0xff] %vm724, %v693
  %759 = vst.msk [vmem:[#allocation2 + $0x110] sm:$0xff] %vm724, %v694
  %760 = vst.msk [vmem:[#allocation2 + $0x118] sm:$0xff] %vm724, %v695
  %761 = vst.msk [vmem:[#allocation2 + $0x120] sm:$0xff] %vm724, %v696
  %762 = vst.msk [vmem:[#allocation2 + $0x128] sm:$0xff] %vm724, %v697
  %763 = vst.msk [vmem:[#allocation2 + $0x130] sm:$0xff] %vm724, %v698
  %764 = vst.msk [vmem:[#allocation2 + $0x138] sm:$0xff] %vm724, %v699
  %765 = vst.msk [vmem:[#allocation2 + $0x140] sm:$0xff] %vm724, %v700
  %766 = vst.msk [vmem:[#allocation2 + $0x148] sm:$0xff] %vm724, %v701
  %767 = vst.msk [vmem:[#allocation2 + $0x150] sm:$0xff] %vm724, %v702
  %768 = vst.msk [vmem:[#allocation2 + $0x158] sm:$0xff] %vm724, %v703
  %769 = vst.msk [vmem:[#allocation2 + $0x160] sm:$0xff] %vm724, %v704
  %770 = vst.msk [vmem:[#allocation2 + $0x168] sm:$0xff] %vm724, %v705
  %771 = vst.msk [vmem:[#allocation2 + $0x170] sm:$0xff] %vm724, %v706
  %772 = vst.msk [vmem:[#allocation2 + $0x178] sm:$0xff] %vm724, %v707
  %773 = vst.msk [vmem:[#allocation2 + $0x180] sm:$0xff] %vm724, %v708
  %774 = vst.msk [vmem:[#allocation2 + $0x188] sm:$0xff] %vm724, %v709
  %775 = vst.msk [vmem:[#allocation2 + $0x190] sm:$0xff] %vm724, %v710
  %776 = vst.msk [vmem:[#allocation2 + $0x198] sm:$0xff] %vm724, %v711
  %777 = vst.msk [vmem:[#allocation2 + $0x1a0] sm:$0xff] %vm724, %v712
  %778 = vst.msk [vmem:[#allocation2 + $0x1a8] sm:$0xff] %vm724, %v713
  %779 = vst.msk [vmem:[#allocation2 + $0x1b0] sm:$0xff] %vm724, %v714
  %780 = vst.msk [vmem:[#allocation2 + $0x1b8] sm:$0xff] %vm724, %v715
  %781 = vst.msk [vmem:[#allocation2 + $0x1c0] sm:$0xff] %vm724, %v716
  %782 = vst.msk [vmem:[#allocation2 + $0x1c8] sm:$0xff] %vm724, %v717
  %783 = vst.msk [vmem:[#allocation2 + $0x1d0] sm:$0xff] %vm724, %v718
  %784 = vst.msk [vmem:[#allocation2 + $0x1d8] sm:$0xff] %vm724, %v719
  %785 = vst.msk [vmem:[#allocation2 + $0x1e0] sm:$0xff] %vm724, %v720
  %786 = vst.msk [vmem:[#allocation2 + $0x1e8] sm:$0xff] %vm724, %v721
  %787 = vst.msk [vmem:[#allocation2 + $0x1f0] sm:$0xff] %vm724, %v722
  %788 = vst.msk [vmem:[#allocation2 + $0x1f8] sm:$0xff] %vm724, %v723
  // Predicated region
  $region18: #{discriminator_forward.9} parent=0 // pred_check
    %p789 = pneg %p15
  $region19: #{discriminator_forward.9} parent=0 // pred_check_branch
    %791 = sbr.rel (%p789) target = $region21
  $region20: #{discriminator_forward.9} parent=0 // pred_region
    %v792 = vld [vmem:[#allocation2] sm:$0xff]
    %v793 = vld [vmem:[#allocation2 + $0x8] sm:$0xff]
    %v794 = vld [vmem:[#allocation2 + $0x10] sm:$0xff]
    %v795 = vld [vmem:[#allocation2 + $0x18] sm:$0xff]
    %v796 = vld [vmem:[#allocation2 + $0x20] sm:$0xff]
    %v797 = vld [vmem:[#allocation2 + $0x28] sm:$0xff]
    %v798 = vld [vmem:[#allocation2 + $0x30] sm:$0xff]
    %v799 = vld [vmem:[#allocation2 + $0x38] sm:$0xff]
    %v800 = vld [vmem:[#allocation2 + $0x40] sm:$0xff]
    %v801 = vld [vmem:[#allocation2 + $0x48] sm:$0xff]
    %v802 = vld [vmem:[#allocation2 + $0x50] sm:$0xff]
    %v803 = vld [vmem:[#allocation2 + $0x58] sm:$0xff]
    %v804 = vld [vmem:[#allocation2 + $0x60] sm:$0xff]
    %v805 = vld [vmem:[#allocation2 + $0x68] sm:$0xff]
    %v806 = vld [vmem:[#allocation2 + $0x70] sm:$0xff]
    %v807 = vld [vmem:[#allocation2 + $0x78] sm:$0xff]
    %v808 = vld [vmem:[#allocation2 + $0x80] sm:$0xff]
    %v809 = vld [vmem:[#allocation2 + $0x88] sm:$0xff]
    %v810 = vld [vmem:[#allocation2 + $0x90] sm:$0xff]
    %v811 = vld [vmem:[#allocation2 + $0x98] sm:$0xff]
    %v812 = vld [vmem:[#allocation2 + $0xa0] sm:$0xff]
    %v813 = vld [vmem:[#allocation2 + $0xa8] sm:$0xff]
    %v814 = vld [vmem:[#allocation2 + $0xb0] sm:$0xff]
    %v815 = vld [vmem:[#allocation2 + $0xb8] sm:$0xff]
    %v816 = vld [vmem:[#allocation2 + $0xc0] sm:$0xff]
    %v817 = vld [vmem:[#allocation2 + $0xc8] sm:$0xff]
    %v818 = vld [vmem:[#allocation2 + $0xd0] sm:$0xff]
    %v819 = vld [vmem:[#allocation2 + $0xd8] sm:$0xff]
    %v820 = vld [vmem:[#allocation2 + $0xe0] sm:$0xff]
    %v821 = vld [vmem:[#allocation2 + $0xe8] sm:$0xff]
    %v822 = vld [vmem:[#allocation2 + $0xf0] sm:$0xff]
    %v823 = vld [vmem:[#allocation2 + $0xf8] sm:$0xff]
    %v824 = vld [vmem:[#allocation2 + $0x100] sm:$0xff]
    %v825 = vld [vmem:[#allocation2 + $0x108] sm:$0xff]
    %v826 = vld [vmem:[#allocation2 + $0x110] sm:$0xff]
    %v827 = vld [vmem:[#allocation2 + $0x118] sm:$0xff]
    %v828 = vld [vmem:[#allocation2 + $0x120] sm:$0xff]
    %v829 = vld [vmem:[#allocation2 + $0x128] sm:$0xff]
    %v830 = vld [vmem:[#allocation2 + $0x130] sm:$0xff]
    %v831 = vld [vmem:[#allocation2 + $0x138] sm:$0xff]
    %v832 = vld [vmem:[#allocation2 + $0x140] sm:$0xff]
    %v833 = vld [vmem:[#allocation2 + $0x148] sm:$0xff]
    %v834 = vld [vmem:[#allocation2 + $0x150] sm:$0xff]
    %v835 = vld [vmem:[#allocation2 + $0x158] sm:$0xff]
    %v836 = vld [vmem:[#allocation2 + $0x160] sm:$0xff]
    %v837 = vld [vmem:[#allocation2 + $0x168] sm:$0xff]
    %v838 = vld [vmem:[#allocation2 + $0x170] sm:$0xff]
    %v839 = vld [vmem:[#allocation2 + $0x178] sm:$0xff]
    %v840 = vld [vmem:[#allocation2 + $0x180] sm:$0xff]
    %v841 = vld [vmem:[#allocation2 + $0x188] sm:$0xff]
    %v842 = vld [vmem:[#allocation2 + $0x190] sm:$0xff]
    %v843 = vld [vmem:[#allocation2 + $0x198] sm:$0xff]
    %v844 = vld [vmem:[#allocation2 + $0x1a0] sm:$0xff]
    %v845 = vld [vmem:[#allocation2 + $0x1a8] sm:$0xff]
    %v846 = vld [vmem:[#allocation2 + $0x1b0] sm:$0xff]
    %v847 = vld [vmem:[#allocation2 + $0x1b8] sm:$0xff]
    %v848 = vld [vmem:[#allocation2 + $0x1c0] sm:$0xff]
    %v849 = vld [vmem:[#allocation2 + $0x1c8] sm:$0xff]
    %v850 = vld [vmem:[#allocation2 + $0x1d0] sm:$0xff]
    %v851 = vld [vmem:[#allocation2 + $0x1d8] sm:$0xff]
    %v852 = vld [vmem:[#allocation2 + $0x1e0] sm:$0xff]
    %v853 = vld [vmem:[#allocation2 + $0x1e8] sm:$0xff]
    %v854 = vld [vmem:[#allocation2 + $0x1f0] sm:$0xff]
    %v855 = vld [vmem:[#allocation2 + $0x1f8] sm:$0xff]
    %v856 = vld [vmem:[%s2] sm:$0x1]
    %v858 = vperm.slane %v856, 0
    %v860 = vadd.f32 %v792, %v858
    %v861 = vadd.f32 %v793, %v858
    %v862 = vadd.f32 %v794, %v858
    %v863 = vadd.f32 %v795, %v858
    %v864 = vadd.f32 %v796, %v858
    %v865 = vadd.f32 %v797, %v858
    %v866 = vadd.f32 %v798, %v858
    %v867 = vadd.f32 %v799, %v858
    %v868 = vadd.f32 %v800, %v858
    %v869 = vadd.f32 %v801, %v858
    %v870 = vadd.f32 %v802, %v858
    %v871 = vadd.f32 %v803, %v858
    %v872 = vadd.f32 %v804, %v858
    %v873 = vadd.f32 %v805, %v858
    %v874 = vadd.f32 %v806, %v858
    %v875 = vadd.f32 %v807, %v858
    %v876 = vadd.f32 %v808, %v858
    %v877 = vadd.f32 %v809, %v858
    %v878 = vadd.f32 %v810, %v858
    %v879 = vadd.f32 %v811, %v858
    %v880 = vadd.f32 %v812, %v858
    %v881 = vadd.f32 %v813, %v858
    %v882 = vadd.f32 %v814, %v858
    %v883 = vadd.f32 %v815, %v858
    %v884 = vadd.f32 %v816, %v858
    %v885 = vadd.f32 %v817, %v858
    %v886 = vadd.f32 %v818, %v858
    %v887 = vadd.f32 %v819, %v858
    %v888 = vadd.f32 %v820, %v858
    %v889 = vadd.f32 %v821, %v858
    %v890 = vadd.f32 %v822, %v858
    %v891 = vadd.f32 %v823, %v858
    %v892 = vadd.f32 %v824, %v858
    %v893 = vadd.f32 %v825, %v858
    %v894 = vadd.f32 %v826, %v858
    %v895 = vadd.f32 %v827, %v858
    %v896 = vadd.f32 %v828, %v858
    %v897 = vadd.f32 %v829, %v858
    %v898 = vadd.f32 %v830, %v858
    %v899 = vadd.f32 %v831, %v858
    %v900 = vadd.f32 %v832, %v858
    %v901 = vadd.f32 %v833, %v858
    %v902 = vadd.f32 %v834, %v858
    %v903 = vadd.f32 %v835, %v858
    %v904 = vadd.f32 %v836, %v858
    %v905 = vadd.f32 %v837, %v858
    %v906 = vadd.f32 %v838, %v858
    %v907 = vadd.f32 %v839, %v858
    %v908 = vadd.f32 %v840, %v858
    %v909 = vadd.f32 %v841, %v858
    %v910 = vadd.f32 %v842, %v858
    %v911 = vadd.f32 %v843, %v858
    %v912 = vadd.f32 %v844, %v858
    %v913 = vadd.f32 %v845, %v858
    %v914 = vadd.f32 %v846, %v858
    %v915 = vadd.f32 %v847, %v858
    %v916 = vadd.f32 %v848, %v858
    %v917 = vadd.f32 %v849, %v858
    %v918 = vadd.f32 %v850, %v858
    %v919 = vadd.f32 %v851, %v858
    %v920 = vadd.f32 %v852, %v858
    %v921 = vadd.f32 %v853, %v858
    %v922 = vadd.f32 %v854, %v858
    %v923 = vadd.f32 %v855, %v858
    %v924 = vpack.c.bf16 %v860, %v860
    %v925 = vpack.c.bf16 %v861, %v861
    %v926 = vpack.c.bf16 %v862, %v862
    %v927 = vpack.c.bf16 %v863, %v863
    %v928 = vpack.c.bf16 %v864, %v864
    %v929 = vpack.c.bf16 %v865, %v865
    %v930 = vpack.c.bf16 %v866, %v866
    %v931 = vpack.c.bf16 %v867, %v867
    %v932 = vpack.c.bf16 %v868, %v868
    %v933 = vpack.c.bf16 %v869, %v869
    %v934 = vpack.c.bf16 %v870, %v870
    %v935 = vpack.c.bf16 %v871, %v871
    %v936 = vpack.c.bf16 %v872, %v872
    %v937 = vpack.c.bf16 %v873, %v873
    %v938 = vpack.c.bf16 %v874, %v874
    %v939 = vpack.c.bf16 %v875, %v875
    %v940 = vpack.c.bf16 %v876, %v876
    %v941 = vpack.c.bf16 %v877, %v877
    %v942 = vpack.c.bf16 %v878, %v878
    %v943 = vpack.c.bf16 %v879, %v879
    %v944 = vpack.c.bf16 %v880, %v880
    %v945 = vpack.c.bf16 %v881, %v881
    %v946 = vpack.c.bf16 %v882, %v882
    %v947 = vpack.c.bf16 %v883, %v883
    %v948 = vpack.c.bf16 %v884, %v884
    %v949 = vpack.c.bf16 %v885, %v885
    %v950 = vpack.c.bf16 %v886, %v886
    %v951 = vpack.c.bf16 %v887, %v887
    %v952 = vpack.c.bf16 %v888, %v888
    %v953 = vpack.c.bf16 %v889, %v889
    %v954 = vpack.c.bf16 %v890, %v890
    %v955 = vpack.c.bf16 %v891, %v891
    %v956 = vpack.c.bf16 %v892, %v892
    %v957 = vpack.c.bf16 %v893, %v893
    %v958 = vpack.c.bf16 %v894, %v894
    %v959 = vpack.c.bf16 %v895, %v895
    %v960 = vpack.c.bf16 %v896, %v896
    %v961 = vpack.c.bf16 %v897, %v897
    %v962 = vpack.c.bf16 %v898, %v898
    %v963 = vpack.c.bf16 %v899, %v899
    %v964 = vpack.c.bf16 %v900, %v900
    %v965 = vpack.c.bf16 %v901, %v901
    %v966 = vpack.c.bf16 %v902, %v902
    %v967 = vpack.c.bf16 %v903, %v903
    %v968 = vpack.c.bf16 %v904, %v904
    %v969 = vpack.c.bf16 %v905, %v905
    %v970 = vpack.c.bf16 %v906, %v906
    %v971 = vpack.c.bf16 %v907, %v907
    %v972 = vpack.c.bf16 %v908, %v908
    %v973 = vpack.c.bf16 %v909, %v909
    %v974 = vpack.c.bf16 %v910, %v910
    %v975 = vpack.c.bf16 %v911, %v911
    %v976 = vpack.c.bf16 %v912, %v912
    %v977 = vpack.c.bf16 %v913, %v913
    %v978 = vpack.c.bf16 %v914, %v914
    %v979 = vpack.c.bf16 %v915, %v915
    %v980 = vpack.c.bf16 %v916, %v916
    %v981 = vpack.c.bf16 %v917, %v917
    %v982 = vpack.c.bf16 %v918, %v918
    %v983 = vpack.c.bf16 %v919, %v919
    %v984 = vpack.c.bf16 %v920, %v920
    %v985 = vpack.c.bf16 %v921, %v921
    %v986 = vpack.c.bf16 %v922, %v922
    %v987 = vpack.c.bf16 %v923, %v923
    %vm988 = vcmask 27648
    %989 = vst.msk [vmem:[%s3] sm:$0xf] %vm988, %v924
    %990 = vst.msk [vmem:[%s3 + $0x4] sm:$0xf] %vm988, %v925
    %991 = vst.msk [vmem:[%s3 + $0x8] sm:$0xf] %vm988, %v926
    %992 = vst.msk [vmem:[%s3 + $0xc] sm:$0xf] %vm988, %v927
    %993 = vst.msk [vmem:[%s3 + $0x10] sm:$0xf] %vm988, %v928
    %994 = vst.msk [vmem:[%s3 + $0x14] sm:$0xf] %vm988, %v929
    %995 = vst.msk [vmem:[%s3 + $0x18] sm:$0xf] %vm988, %v930
    %996 = vst.msk [vmem:[%s3 + $0x1c] sm:$0xf] %vm988, %v931
    %997 = vst.msk [vmem:[%s3 + $0x20] sm:$0xf] %vm988, %v932
    %998 = vst.msk [vmem:[%s3 + $0x24] sm:$0xf] %vm988, %v933
    %999 = vst.msk [vmem:[%s3 + $0x28] sm:$0xf] %vm988, %v934
    %1000 = vst.msk [vmem:[%s3 + $0x2c] sm:$0xf] %vm988, %v935
    %1001 = vst.msk [vmem:[%s3 + $0x30] sm:$0xf] %vm988, %v936
    %1002 = vst.msk [vmem:[%s3 + $0x34] sm:$0xf] %vm988, %v937
    %1003 = vst.msk [vmem:[%s3 + $0x38] sm:$0xf] %vm988, %v938
    %1004 = vst.msk [vmem:[%s3 + $0x3c] sm:$0xf] %vm988, %v939
    %1005 = vst.msk [vmem:[%s3 + $0x40] sm:$0xf] %vm988, %v940
    %1006 = vst.msk [vmem:[%s3 + $0x44] sm:$0xf] %vm988, %v941
    %1007 = vst.msk [vmem:[%s3 + $0x48] sm:$0xf] %vm988, %v942
    %1008 = vst.msk [vmem:[%s3 + $0x4c] sm:$0xf] %vm988, %v943
    %1009 = vst.msk [vmem:[%s3 + $0x50] sm:$0xf] %vm988, %v944
    %1010 = vst.msk [vmem:[%s3 + $0x54] sm:$0xf] %vm988, %v945
    %1011 = vst.msk [vmem:[%s3 + $0x58] sm:$0xf] %vm988, %v946
    %1012 = vst.msk [vmem:[%s3 + $0x5c] sm:$0xf] %vm988, %v947
    %1013 = vst.msk [vmem:[%s3 + $0x60] sm:$0xf] %vm988, %v948
    %1014 = vst.msk [vmem:[%s3 + $0x64] sm:$0xf] %vm988, %v949
    %1015 = vst.msk [vmem:[%s3 + $0x68] sm:$0xf] %vm988, %v950
    %1016 = vst.msk [vmem:[%s3 + $0x6c] sm:$0xf] %vm988, %v951
    %1017 = vst.msk [vmem:[%s3 + $0x70] sm:$0xf] %vm988, %v952
    %1018 = vst.msk [vmem:[%s3 + $0x74] sm:$0xf] %vm988, %v953
    %1019 = vst.msk [vmem:[%s3 + $0x78] sm:$0xf] %vm988, %v954
    %1020 = vst.msk [vmem:[%s3 + $0x7c] sm:$0xf] %vm988, %v955
    %1021 = vst.msk [vmem:[%s3 + $0x80] sm:$0xf] %vm988, %v956
    %1022 = vst.msk [vmem:[%s3 + $0x84] sm:$0xf] %vm988, %v957
    %1023 = vst.msk [vmem:[%s3 + $0x88] sm:$0xf] %vm988, %v958
    %1024 = vst.msk [vmem:[%s3 + $0x8c] sm:$0xf] %vm988, %v959
    %1025 = vst.msk [vmem:[%s3 + $0x90] sm:$0xf] %vm988, %v960
    %1026 = vst.msk [vmem:[%s3 + $0x94] sm:$0xf] %vm988, %v961
    %1027 = vst.msk [vmem:[%s3 + $0x98] sm:$0xf] %vm988, %v962
    %1028 = vst.msk [vmem:[%s3 + $0x9c] sm:$0xf] %vm988, %v963
    %1029 = vst.msk [vmem:[%s3 + $0xa0] sm:$0xf] %vm988, %v964
    %1030 = vst.msk [vmem:[%s3 + $0xa4] sm:$0xf] %vm988, %v965
    %1031 = vst.msk [vmem:[%s3 + $0xa8] sm:$0xf] %vm988, %v966
    %1032 = vst.msk [vmem:[%s3 + $0xac] sm:$0xf] %vm988, %v967
    %1033 = vst.msk [vmem:[%s3 + $0xb0] sm:$0xf] %vm988, %v968
    %1034 = vst.msk [vmem:[%s3 + $0xb4] sm:$0xf] %vm988, %v969
    %1035 = vst.msk [vmem:[%s3 + $0xb8] sm:$0xf] %vm988, %v970
    %1036 = vst.msk [vmem:[%s3 + $0xbc] sm:$0xf] %vm988, %v971
    %1037 = vst.msk [vmem:[%s3 + $0xc0] sm:$0xf] %vm988, %v972
    %1038 = vst.msk [vmem:[%s3 + $0xc4] sm:$0xf] %vm988, %v973
    %1039 = vst.msk [vmem:[%s3 + $0xc8] sm:$0xf] %vm988, %v974
    %1040 = vst.msk [vmem:[%s3 + $0xcc] sm:$0xf] %vm988, %v975
    %1041 = vst.msk [vmem:[%s3 + $0xd0] sm:$0xf] %vm988, %v976
    %1042 = vst.msk [vmem:[%s3 + $0xd4] sm:$0xf] %vm988, %v977
    %1043 = vst.msk [vmem:[%s3 + $0xd8] sm:$0xf] %vm988, %v978
    %1044 = vst.msk [vmem:[%s3 + $0xdc] sm:$0xf] %vm988, %v979
    %1045 = vst.msk [vmem:[%s3 + $0xe0] sm:$0xf] %vm988, %v980
    %1046 = vst.msk [vmem:[%s3 + $0xe4] sm:$0xf] %vm988, %v981
    %1047 = vst.msk [vmem:[%s3 + $0xe8] sm:$0xf] %vm988, %v982
    %1048 = vst.msk [vmem:[%s3 + $0xec] sm:$0xf] %vm988, %v983
    %1049 = vst.msk [vmem:[%s3 + $0xf0] sm:$0xf] %vm988, %v984
    %1050 = vst.msk [vmem:[%s3 + $0xf4] sm:$0xf] %vm988, %v985
    %1051 = vst.msk [vmem:[%s3 + $0xf8] sm:$0xf] %vm988, %v986
    %1052 = vst.msk [vmem:[%s3 + $0xfc] sm:$0xf] %vm988, %v987
  $region21: #{discriminator_forward.9} parent=0 // pred_fallthru
    _
  // Predicated region
  $region22: #{discriminator_forward.9} parent=0 // pred_check
    _
  $region23: #{discriminator_forward.9} parent=0 // pred_check_branch
    %1054 = sbr.rel (0) target = $region25
  $region24: #{discriminator_forward.9} parent=0 // pred_region
    _
  $region25: #{discriminator_forward.9} parent=0 // pred_fallthru
    _
  // Predicated region
  $region26: #{discriminator_forward.9} parent=0 // pred_check
    _
  $region27: #{discriminator_forward.9} parent=0 // pred_check_branch
    %1056 = sbr.rel (0) target = $region29
  $region28: #{discriminator_forward.9} parent=0 // pred_region
    _
  $region29: #{discriminator_forward.9} parent=0 // pred_fallthru
    _

// kernel: discriminator_forward.11
$region0: #{discriminator_forward.11}
  #allocation0 [shape = 'u32[]', space=smem, size = 0x4, offset = 0x4, fixed_abs, tag = 'smem constant byte address 0x4 - core index']
  #allocation1 [shape = 'u32[72,128]{1,0:T(1,128)}', space=vmem, size = 0x9000, scoped, tag = 'internal scratch']
  #allocation2 [shape = 'f32[128,8]{1,0:T(8,128)}', space=vmem, size = 0x10000, scoped, tag = 'scratch operand']
  %s0 = inlined_call_operand.vmem [shape: bf16[128,64], index: 0, kind: input, shape index: {}]
  %s1 = inlined_call_operand.vmem [shape: bf16[64,8], index: 1, kind: input, shape index: {}]
  %s2 = inlined_call_operand.vmem [shape: bf16[128,8], index: 2, kind: output, shape index: {}]
  %s3 = sld [smem:[#allocation0]]
  $region26: #{discriminator_forward.11} parent=0
    _
  %s5 = ssub.s32 1, %s3
  %s6 = scalar_select 0, %s5, %s3
  // Predicated region
  $region2: #{discriminator_forward.11} parent=0 // pred_check
    _
  $region3: #{discriminator_forward.11} parent=0 // pred_check_branch
    %8 = sbr.rel (0) target = $region5
  $region4: #{discriminator_forward.11} parent=0 // pred_region
    _
  $region5: #{discriminator_forward.11} parent=0 // pred_fallthru
    _
  // Predicated region
  $region6: #{discriminator_forward.11} parent=0 // pred_check
    _
  $region7: #{discriminator_forward.11} parent=0 // pred_check_branch
    %10 = sbr.rel (0) target = $region9
  $region8: #{discriminator_forward.11} parent=0 // pred_region
    _
  $region9: #{discriminator_forward.11} parent=0 // pred_fallthru
    _
  %p12 = scmp.eq.s32.totalorder 0, 0
  // Predicated region
  $region10: #{discriminator_forward.11} parent=0 // pred_check
    %p13 = pneg %p12
  $region11: #{discriminator_forward.11} parent=0 // pred_check_branch
    %15 = sbr.rel (%p13) target = $region13
  $region12: #{discriminator_forward.11} parent=0 // pred_region
    %vm16 = vcmask 64512
    %17 = vst.msk [vmem:[#allocation2] sm:$0xff] %vm16, 0.0
    %18 = vst.msk [vmem:[#allocation2 + $0x8] sm:$0xff] %vm16, 0.0
    %19 = vst.msk [vmem:[#allocation2 + $0x10] sm:$0xff] %vm16, 0.0
    %20 = vst.msk [vmem:[#allocation2 + $0x18] sm:$0xff] %vm16, 0.0
    %21 = vst.msk [vmem:[#allocation2 + $0x20] sm:$0xff] %vm16, 0.0
    %22 = vst.msk [vmem:[#allocation2 + $0x28] sm:$0xff] %vm16, 0.0
    %23 = vst.msk [vmem:[#allocation2 + $0x30] sm:$0xff] %vm16, 0.0
    %24 = vst.msk [vmem:[#allocation2 + $0x38] sm:$0xff] %vm16, 0.0
    %25 = vst.msk [vmem:[#allocation2 + $0x40] sm:$0xff] %vm16, 0.0
    %26 = vst.msk [vmem:[#allocation2 + $0x48] sm:$0xff] %vm16, 0.0
    %27 = vst.msk [vmem:[#allocation2 + $0x50] sm:$0xff] %vm16, 0.0
    %28 = vst.msk [vmem:[#allocation2 + $0x58] sm:$0xff] %vm16, 0.0
    %29 = vst.msk [vmem:[#allocation2 + $0x60] sm:$0xff] %vm16, 0.0
    %30 = vst.msk [vmem:[#allocation2 + $0x68] sm:$0xff] %vm16, 0.0
    %31 = vst.msk [vmem:[#allocation2 + $0x70] sm:$0xff] %vm16, 0.0
    %32 = vst.msk [vmem:[#allocation2 + $0x78] sm:$0xff] %vm16, 0.0
  $region13: #{discriminator_forward.11} parent=0 // pred_fallthru
    _
  %v33 = vld [vmem:[%s0] sm:$0xf]
  %v34 = vld [vmem:[%s0 + $0x4] sm:$0xf]
  %v35 = vld [vmem:[%s0 + $0x8] sm:$0xf]
  %v36 = vld [vmem:[%s0 + $0xc] sm:$0xf]
  %v37 = vld [vmem:[%s0 + $0x10] sm:$0xf]
  %v38 = vld [vmem:[%s0 + $0x14] sm:$0xf]
  %v39 = vld [vmem:[%s0 + $0x18] sm:$0xf]
  %v40 = vld [vmem:[%s0 + $0x1c] sm:$0xf]
  %v41 = vld [vmem:[%s0 + $0x20] sm:$0xf]
  %v42 = vld [vmem:[%s0 + $0x24] sm:$0xf]
  %v43 = vld [vmem:[%s0 + $0x28] sm:$0xf]
  %v44 = vld [vmem:[%s0 + $0x2c] sm:$0xf]
  %v45 = vld [vmem:[%s0 + $0x30] sm:$0xf]
  %v46 = vld [vmem:[%s0 + $0x34] sm:$0xf]
  %v47 = vld [vmem:[%s0 + $0x38] sm:$0xf]
  %v48 = vld [vmem:[%s0 + $0x3c] sm:$0xf]
  %v49 = vld [vmem:[#allocation2] sm:$0xff]
  %v50 = vld [vmem:[#allocation2 + $0x8] sm:$0xff]
  %v51 = vld [vmem:[#allocation2 + $0x10] sm:$0xff]
  %v52 = vld [vmem:[#allocation2 + $0x18] sm:$0xff]
  %v53 = vld [vmem:[#allocation2 + $0x20] sm:$0xff]
  %v54 = vld [vmem:[#allocation2 + $0x28] sm:$0xff]
  %v55 = vld [vmem:[#allocation2 + $0x30] sm:$0xff]
  %v56 = vld [vmem:[#allocation2 + $0x38] sm:$0xff]
  %v57 = vld [vmem:[#allocation2 + $0x40] sm:$0xff]
  %v58 = vld [vmem:[#allocation2 + $0x48] sm:$0xff]
  %v59 = vld [vmem:[#allocation2 + $0x50] sm:$0xff]
  %v60 = vld [vmem:[#allocation2 + $0x58] sm:$0xff]
  %v61 = vld [vmem:[#allocation2 + $0x60] sm:$0xff]
  %v62 = vld [vmem:[#allocation2 + $0x68] sm:$0xff]
  %v63 = vld [vmem:[#allocation2 + $0x70] sm:$0xff]
  %v64 = vld [vmem:[#allocation2 + $0x78] sm:$0xff]
  %v65 = vld [vmem:[%s1] sm:$0xf]
  %v66 = vld [vmem:[%s1 + $0x4] sm:$0xf]
  %v67 = vld [vmem:[%s1 + $0x8] sm:$0xf]
  %v68 = vld [vmem:[%s1 + $0xc] sm:$0xf]
  %v69 = vld [vmem:[%s1 + $0x10] sm:$0xf]
  %v70 = vld [vmem:[%s1 + $0x14] sm:$0xf]
  %v71 = vld [vmem:[%s1 + $0x18] sm:$0xf]
  %v72 = vld [vmem:[%s1 + $0x1c] sm:$0xf]
  %v89 = vunpack.c.l.b16 %v33
  %v90 = vunpack.c.l.b16 %v34
  %v91 = vunpack.c.l.b16 %v35
  %v92 = vunpack.c.l.b16 %v36
  %v93 = vunpack.c.l.b16 %v37
  %v94 = vunpack.c.l.b16 %v38
  %v95 = vunpack.c.l.b16 %v39
  %v96 = vunpack.c.l.b16 %v40
  %v97 = vunpack.c.l.b16 %v41
  %v98 = vunpack.c.l.b16 %v42
  %v99 = vunpack.c.l.b16 %v43
  %v100 = vunpack.c.l.b16 %v44
  %v101 = vunpack.c.l.b16 %v45
  %v102 = vunpack.c.l.b16 %v46
  %v103 = vunpack.c.l.b16 %v47
  %v104 = vunpack.c.l.b16 %v48
  %v105 = vpack.c.b16 %v90, %v89
  %v106 = vpack.c.b16 %v92, %v91
  %v107 = vpack.c.b16 %v94, %v93
  %v108 = vpack.c.b16 %v96, %v95
  %v109 = vpack.c.b16 %v98, %v97
  %v110 = vpack.c.b16 %v100, %v99
  %v111 = vpack.c.b16 %v102, %v101
  %v112 = vpack.c.b16 %v104, %v103
  %v121 = vunpack.c.l.b16 %v65
  %v122 = vunpack.c.l.b16 %v66
  %v123 = vunpack.c.l.b16 %v67
  %v124 = vunpack.c.l.b16 %v68
  %v125 = vunpack.c.l.b16 %v69
  %v126 = vunpack.c.l.b16 %v70
  %v127 = vunpack.c.l.b16 %v71
  %v128 = vunpack.c.l.b16 %v72
  %v129 = vpack.c.b16 %v122, %v121
  %v130 = vpack.c.b16 %v124, %v123
  %v131 = vpack.c.b16 %v126, %v125
  %v132 = vpack.c.b16 %v128, %v127
  %vm137 = vcmask 523264
  %v139 = vsel %vm137, %v105, 0
  %v142 = vsel %vm137, %v106, 0
  %v145 = vsel %vm137, %v107, 0
  %v148 = vsel %vm137, %v108, 0
  %v151 = vsel %vm137, %v109, 0
  %v154 = vsel %vm137, %v110, 0
  %v157 = vsel %vm137, %v111, 0
  %v160 = vsel %vm137, %v112, 0
  %162 = vmatpush.bf16.msra.mxu0 0
  %163 = vmatpush.bf16.msra.mxu0 0
  %164 = vmatpush.bf16.msra.mxu0 0
  %165 = vmatpush.bf16.msra.mxu0 0
  %166 = vmatpush.bf16.msra.mxu0 %v132
  %167 = vmatpush.bf16.msra.mxu0 %v131
  %168 = vmatpush.bf16.msra.mxu0 %v130
  %169 = vmatpush.bf16.msra.mxu0 %v129
  %170 = vmatmul.bf16.gmra.mxu0 %v139
  %v171 = vpop.f32.mrf.mxu0
  %v172 = vadd.f32 0.0, %v171
  %v173 = vpop.f32.mrf.mxu0
  %v174 = vadd.f32 0.0, %v173
  %175 = vmatmul.bf16.gmra.mxu0 %v142
  %v176 = vpop.f32.mrf.mxu0
  %v177 = vadd.f32 0.0, %v176
  %v178 = vpop.f32.mrf.mxu0
  %v179 = vadd.f32 0.0, %v178
  %180 = vmatmul.bf16.gmra.mxu0 %v145
  %v181 = vpop.f32.mrf.mxu0
  %v182 = vadd.f32 0.0, %v181
  %v183 = vpop.f32.mrf.mxu0
  %v184 = vadd.f32 0.0, %v183
  %185 = vmatmul.bf16.gmra.mxu0 %v148
  %v186 = vpop.f32.mrf.mxu0
  %v187 = vadd.f32 0.0, %v186
  %v188 = vpop.f32.mrf.mxu0
  %v189 = vadd.f32 0.0, %v188
  %190 = vmatmul.bf16.gmra.mxu0 %v151
  %v191 = vpop.f32.mrf.mxu0
  %v192 = vadd.f32 0.0, %v191
  %v193 = vpop.f32.mrf.mxu0
  %v194 = vadd.f32 0.0, %v193
  %195 = vmatmul.bf16.gmra.mxu0 %v154
  %v196 = vpop.f32.mrf.mxu0
  %v197 = vadd.f32 0.0, %v196
  %v198 = vpop.f32.mrf.mxu0
  %v199 = vadd.f32 0.0, %v198
  %200 = vmatmul.bf16.gmra.mxu0 %v157
  %v201 = vpop.f32.mrf.mxu0
  %v202 = vadd.f32 0.0, %v201
  %v203 = vpop.f32.mrf.mxu0
  %v204 = vadd.f32 0.0, %v203
  %205 = vmatmul.bf16.gmra.mxu0 %v160
  %v206 = vpop.f32.mrf.mxu0
  %v207 = vadd.f32 0.0, %v206
  %v208 = vpop.f32.mrf.mxu0
  %v209 = vadd.f32 0.0, %v208
  %210 = vdwg.mxu0
  %v211 = vadd.f32 %v49, %v172
  %v212 = vadd.f32 %v50, %v174
  %v213 = vadd.f32 %v51, %v177
  %v214 = vadd.f32 %v52, %v179
  %v215 = vadd.f32 %v53, %v182
  %v216 = vadd.f32 %v54, %v184
  %v217 = vadd.f32 %v55, %v187
  %v218 = vadd.f32 %v56, %v189
  %v219 = vadd.f32 %v57, %v192
  %v220 = vadd.f32 %v58, %v194
  %v221 = vadd.f32 %v59, %v197
  %v222 = vadd.f32 %v60, %v199
  %v223 = vadd.f32 %v61, %v202
  %v224 = vadd.f32 %v62, %v204
  %v225 = vadd.f32 %v63, %v207
  %v226 = vadd.f32 %v64, %v209
  %vm227 = vcmask 64512
  %228 = vst.msk [vmem:[#allocation2] sm:$0xff] %vm227, %v211
  %229 = vst.msk [vmem:[#allocation2 + $0x8] sm:$0xff] %vm227, %v212
  %230 = vst.msk [vmem:[#allocation2 + $0x10] sm:$0xff] %vm227, %v213
  %231 = vst.msk [vmem:[#allocation2 + $0x18] sm:$0xff] %vm227, %v214
  %232 = vst.msk [vmem:[#allocation2 + $0x20] sm:$0xff] %vm227, %v215
  %233 = vst.msk [vmem:[#allocation2 + $0x28] sm:$0xff] %vm227, %v216
  %234 = vst.msk [vmem:[#allocation2 + $0x30] sm:$0xff] %vm227, %v217
  %235 = vst.msk [vmem:[#allocation2 + $0x38] sm:$0xff] %vm227, %v218
  %236 = vst.msk [vmem:[#allocation2 + $0x40] sm:$0xff] %vm227, %v219
  %237 = vst.msk [vmem:[#allocation2 + $0x48] sm:$0xff] %vm227, %v220
  %238 = vst.msk [vmem:[#allocation2 + $0x50] sm:$0xff] %vm227, %v221
  %239 = vst.msk [vmem:[#allocation2 + $0x58] sm:$0xff] %vm227, %v222
  %240 = vst.msk [vmem:[#allocation2 + $0x60] sm:$0xff] %vm227, %v223
  %241 = vst.msk [vmem:[#allocation2 + $0x68] sm:$0xff] %vm227, %v224
  %242 = vst.msk [vmem:[#allocation2 + $0x70] sm:$0xff] %vm227, %v225
  %243 = vst.msk [vmem:[#allocation2 + $0x78] sm:$0xff] %vm227, %v226
  // Predicated region
  $region14: #{discriminator_forward.11} parent=0 // pred_check
    %p244 = pneg %p12
  $region15: #{discriminator_forward.11} parent=0 // pred_check_branch
    %246 = sbr.rel (%p244) target = $region17
  $region16: #{discriminator_forward.11} parent=0 // pred_region
    %v247 = vld [vmem:[#allocation2] sm:$0xff]
    %v248 = vld [vmem:[#allocation2 + $0x8] sm:$0xff]
    %v249 = vld [vmem:[#allocation2 + $0x10] sm:$0xff]
    %v250 = vld [vmem:[#allocation2 + $0x18] sm:$0xff]
    %v251 = vld [vmem:[#allocation2 + $0x20] sm:$0xff]
    %v252 = vld [vmem:[#allocation2 + $0x28] sm:$0xff]
    %v253 = vld [vmem:[#allocation2 + $0x30] sm:$0xff]
    %v254 = vld [vmem:[#allocation2 + $0x38] sm:$0xff]
    %v255 = vld [vmem:[#allocation2 + $0x40] sm:$0xff]
    %v256 = vld [vmem:[#allocation2 + $0x48] sm:$0xff]
    %v257 = vld [vmem:[#allocation2 + $0x50] sm:$0xff]
    %v258 = vld [vmem:[#allocation2 + $0x58] sm:$0xff]
    %v259 = vld [vmem:[#allocation2 + $0x60] sm:$0xff]
    %v260 = vld [vmem:[#allocation2 + $0x68] sm:$0xff]
    %v261 = vld [vmem:[#allocation2 + $0x70] sm:$0xff]
    %v262 = vld [vmem:[#allocation2 + $0x78] sm:$0xff]
    %vm263 = vcmp.gt.f32.partialorder %v247, 0.0
    %vm264 = vcmp.gt.f32.partialorder %v248, 0.0
    %vm265 = vcmp.gt.f32.partialorder %v249, 0.0
    %vm266 = vcmp.gt.f32.partialorder %v250, 0.0
    %vm267 = vcmp.gt.f32.partialorder %v251, 0.0
    %vm268 = vcmp.gt.f32.partialorder %v252, 0.0
    %vm269 = vcmp.gt.f32.partialorder %v253, 0.0
    %vm270 = vcmp.gt.f32.partialorder %v254, 0.0
    %vm271 = vcmp.gt.f32.partialorder %v255, 0.0
    %vm272 = vcmp.gt.f32.partialorder %v256, 0.0
    %vm273 = vcmp.gt.f32.partialorder %v257, 0.0
    %vm274 = vcmp.gt.f32.partialorder %v258, 0.0
    %vm275 = vcmp.gt.f32.partialorder %v259, 0.0
    %vm276 = vcmp.gt.f32.partialorder %v260, 0.0
    %vm277 = vcmp.gt.f32.partialorder %v261, 0.0
    %vm278 = vcmp.gt.f32.partialorder %v262, 0.0
    %v279 = vmul.f32 %v247, 0.2
    %v280 = vmul.f32 %v248, 0.2
    %v281 = vmul.f32 %v249, 0.2
    %v282 = vmul.f32 %v250, 0.2
    %v283 = vmul.f32 %v251, 0.2
    %v284 = vmul.f32 %v252, 0.2
    %v285 = vmul.f32 %v253, 0.2
    %v286 = vmul.f32 %v254, 0.2
    %v287 = vmul.f32 %v255, 0.2
    %v288 = vmul.f32 %v256, 0.2
    %v289 = vmul.f32 %v257, 0.2
    %v290 = vmul.f32 %v258, 0.2
    %v291 = vmul.f32 %v259, 0.2
    %v292 = vmul.f32 %v260, 0.2
    %v293 = vmul.f32 %v261, 0.2
    %v294 = vmul.f32 %v262, 0.2
    %v295 = vsel %vm263, %v247, %v279
    %v296 = vsel %vm264, %v248, %v280
    %v297 = vsel %vm265, %v249, %v281
    %v298 = vsel %vm266, %v250, %v282
    %v299 = vsel %vm267, %v251, %v283
    %v300 = vsel %vm268, %v252, %v284
    %v301 = vsel %vm269, %v253, %v285
    %v302 = vsel %vm270, %v254, %v286
    %v303 = vsel %vm271, %v255, %v287
    %v304 = vsel %vm272, %v256, %v288
    %v305 = vsel %vm273, %v257, %v289
    %v306 = vsel %vm274, %v258, %v290
    %v307 = vsel %vm275, %v259, %v291
    %v308 = vsel %vm276, %v260, %v292
    %v309 = vsel %vm277, %v261, %v293
    %v310 = vsel %vm278, %v262, %v294
    %v311 = vpack.c.bf16 %v295, %v295
    %v312 = vpack.c.bf16 %v296, %v296
    %v313 = vpack.c.bf16 %v297, %v297
    %v314 = vpack.c.bf16 %v298, %v298
    %v315 = vpack.c.bf16 %v299, %v299
    %v316 = vpack.c.bf16 %v300, %v300
    %v317 = vpack.c.bf16 %v301, %v301
    %v318 = vpack.c.bf16 %v302, %v302
    %v319 = vpack.c.bf16 %v303, %v303
    %v320 = vpack.c.bf16 %v304, %v304
    %v321 = vpack.c.bf16 %v305, %v305
    %v322 = vpack.c.bf16 %v306, %v306
    %v323 = vpack.c.bf16 %v307, %v307
    %v324 = vpack.c.bf16 %v308, %v308
    %v325 = vpack.c.bf16 %v309, %v309
    %v326 = vpack.c.bf16 %v310, %v310
    %vm327 = vcmask 60416
    %328 = vst.msk [vmem:[%s2] sm:$0xf] %vm327, %v311
    %329 = vst.msk [vmem:[%s2 + $0x4] sm:$0xf] %vm327, %v312
    %330 = vst.msk [vmem:[%s2 + $0x8] sm:$0xf] %vm327, %v313
    %331 = vst.msk [vmem:[%s2 + $0xc] sm:$0xf] %vm327, %v314
    %332 = vst.msk [vmem:[%s2 + $0x10] sm:$0xf] %vm327, %v315
    %333 = vst.msk [vmem:[%s2 + $0x14] sm:$0xf] %vm327, %v316
    %334 = vst.msk [vmem:[%s2 + $0x18] sm:$0xf] %vm327, %v317
    %335 = vst.msk [vmem:[%s2 + $0x1c] sm:$0xf] %vm327, %v318
    %336 = vst.msk [vmem:[%s2 + $0x20] sm:$0xf] %vm327, %v319
    %337 = vst.msk [vmem:[%s2 + $0x24] sm:$0xf] %vm327, %v320
    %338 = vst.msk [vmem:[%s2 + $0x28] sm:$0xf] %vm327, %v321
    %339 = vst.msk [vmem:[%s2 + $0x2c] sm:$0xf] %vm327, %v322
    %340 = vst.msk [vmem:[%s2 + $0x30] sm:$0xf] %vm327, %v323
    %341 = vst.msk [vmem:[%s2 + $0x34] sm:$0xf] %vm327, %v324
    %342 = vst.msk [vmem:[%s2 + $0x38] sm:$0xf] %vm327, %v325
    %343 = vst.msk [vmem:[%s2 + $0x3c] sm:$0xf] %vm327, %v326
  $region17: #{discriminator_forward.11} parent=0 // pred_fallthru
    _
  // Predicated region
  $region18: #{discriminator_forward.11} parent=0 // pred_check
    _
  $region19: #{discriminator_forward.11} parent=0 // pred_check_branch
    %345 = sbr.rel (0) target = $region21
  $region20: #{discriminator_forward.11} parent=0 // pred_region
    _
  $region21: #{discriminator_forward.11} parent=0 // pred_fallthru
    _
  // Predicated region
  $region22: #{discriminator_forward.11} parent=0 // pred_check
    _
  $region23: #{discriminator_forward.11} parent=0 // pred_check_branch
    %347 = sbr.rel (0) target = $region25
  $region24: #{discriminator_forward.11} parent=0 // pred_region
    _
  $region25: #{discriminator_forward.11} parent=0 // pred_fallthru
    _

// kernel: discriminator_forward.12
$region0: #{discriminator_forward.12}
  #allocation0 [shape = 'u32[]', space=smem, size = 0x4, offset = 0x4, fixed_abs, tag = 'smem constant byte address 0x4 - core index']
  #allocation1 [shape = 'u32[72,128]{1,0:T(1,128)}', space=vmem, size = 0x9000, scoped, tag = 'internal scratch']
  #allocation2 [shape = 'f32[128,8]{1,0:T(8,128)}', space=vmem, size = 0x10000, scoped, tag = 'scratch operand']
  #allocation3 [shape = 'f32[1,1]{1,0:T(1,128)S(1)}', space=vmem, size = 0x200, scoped, tag = 'scoped memory for discriminator_forward.12']
  %s0 = inlined_call_operand.vmem [shape: bf16[128,72], index: 0, kind: input, shape index: {}]
  %s1 = inlined_call_operand.vmem [shape: bf16[72,8], index: 1, kind: input, shape index: {}]
  %s2 = inlined_call_operand.vmem [shape: bf16[128,8], index: 2, kind: input, shape index: {}]
  %s3 = inlined_call_operand.<no memory space> [shape: f32[1,1], index: 3, kind: input, shape index: {}]
  %s4 = inlined_call_operand.vmem [shape: bf16[128,8], index: 4, kind: output, shape index: {}]
  %s5 = sld [smem:[#allocation0]]
  $region34: #{discriminator_forward.12} parent=0
    _
  %s7 = ssub.s32 1, %s5
  %s8 = scalar_select 0, %s7, %s5
  %v9 = vstv %s3
  %10 = vst [vmem:[#allocation3] sm:$0x1] %v9
  // Predicated region
  $region2: #{discriminator_forward.12} parent=0 // pred_check
    _
  $region3: #{discriminator_forward.12} parent=0 // pred_check_branch
    %12 = sbr.rel (0) target = $region5
  $region4: #{discriminator_forward.12} parent=0 // pred_region
    _
  $region5: #{discriminator_forward.12} parent=0 // pred_fallthru
    _
  // Predicated region
  $region6: #{discriminator_forward.12} parent=0 // pred_check
    _
  $region7: #{discriminator_forward.12} parent=0 // pred_check_branch
    %14 = sbr.rel (0) target = $region9
  $region8: #{discriminator_forward.12} parent=0 // pred_region
    _
  $region9: #{discriminator_forward.12} parent=0 // pred_fallthru
    _
  // Predicated region
  $region10: #{discriminator_forward.12} parent=0 // pred_check
    _
  $region11: #{discriminator_forward.12} parent=0 // pred_check_branch
    %16 = sbr.rel (0) target = $region13
  $region12: #{discriminator_forward.12} parent=0 // pred_region
    _
  $region13: #{discriminator_forward.12} parent=0 // pred_fallthru
    _
  // Predicated region
  $region14: #{discriminator_forward.12} parent=0 // pred_check
    _
  $region15: #{discriminator_forward.12} parent=0 // pred_check_branch
    %18 = sbr.rel (0) target = $region17
  $region16: #{discriminator_forward.12} parent=0 // pred_region
    _
  $region17: #{discriminator_forward.12} parent=0 // pred_fallthru
    _
  %p20 = scmp.eq.s32.totalorder 0, 0
  // Predicated region
  $region18: #{discriminator_forward.12} parent=0 // pred_check
    %p21 = pneg %p20
  $region19: #{discriminator_forward.12} parent=0 // pred_check_branch
    %23 = sbr.rel (%p21) target = $region21
  $region20: #{discriminator_forward.12} parent=0 // pred_region
    %vm24 = vcmask 64512
    %25 = vst.msk [vmem:[#allocation2] sm:$0xff] %vm24, 0.0
    %26 = vst.msk [vmem:[#allocation2 + $0x8] sm:$0xff] %vm24, 0.0
    %27 = vst.msk [vmem:[#allocation2 + $0x10] sm:$0xff] %vm24, 0.0
    %28 = vst.msk [vmem:[#allocation2 + $0x18] sm:$0xff] %vm24, 0.0
    %29 = vst.msk [vmem:[#allocation2 + $0x20] sm:$0xff] %vm24, 0.0
    %30 = vst.msk [vmem:[#allocation2 + $0x28] sm:$0xff] %vm24, 0.0
    %31 = vst.msk [vmem:[#allocation2 + $0x30] sm:$0xff] %vm24, 0.0
    %32 = vst.msk [vmem:[#allocation2 + $0x38] sm:$0xff] %vm24, 0.0
    %33 = vst.msk [vmem:[#allocation2 + $0x40] sm:$0xff] %vm24, 0.0
    %34 = vst.msk [vmem:[#allocation2 + $0x48] sm:$0xff] %vm24, 0.0
    %35 = vst.msk [vmem:[#allocation2 + $0x50] sm:$0xff] %vm24, 0.0
    %36 = vst.msk [vmem:[#allocation2 + $0x58] sm:$0xff] %vm24, 0.0
    %37 = vst.msk [vmem:[#allocation2 + $0x60] sm:$0xff] %vm24, 0.0
    %38 = vst.msk [vmem:[#allocation2 + $0x68] sm:$0xff] %vm24, 0.0
    %39 = vst.msk [vmem:[#allocation2 + $0x70] sm:$0xff] %vm24, 0.0
    %40 = vst.msk [vmem:[#allocation2 + $0x78] sm:$0xff] %vm24, 0.0
  $region21: #{discriminator_forward.12} parent=0 // pred_fallthru
    _
  %v41 = vld [vmem:[%s0] sm:$0xf]
  %v42 = vld [vmem:[%s0 + $0x4] sm:$0xf]
  %v43 = vld [vmem:[%s0 + $0x8] sm:$0xf]
  %v44 = vld [vmem:[%s0 + $0xc] sm:$0xf]
  %v45 = vld [vmem:[%s0 + $0x10] sm:$0xf]
  %v46 = vld [vmem:[%s0 + $0x14] sm:$0xf]
  %v47 = vld [vmem:[%s0 + $0x18] sm:$0xf]
  %v48 = vld [vmem:[%s0 + $0x1c] sm:$0xf]
  %v49 = vld [vmem:[%s0 + $0x20] sm:$0xf]
  %v50 = vld [vmem:[%s0 + $0x24] sm:$0xf]
  %v51 = vld [vmem:[%s0 + $0x28] sm:$0xf]
  %v52 = vld [vmem:[%s0 + $0x2c] sm:$0xf]
  %v53 = vld [vmem:[%s0 + $0x30] sm:$0xf]
  %v54 = vld [vmem:[%s0 + $0x34] sm:$0xf]
  %v55 = vld [vmem:[%s0 + $0x38] sm:$0xf]
  %v56 = vld [vmem:[%s0 + $0x3c] sm:$0xf]
  %v57 = vld [vmem:[#allocation2] sm:$0xff]
  %v58 = vld [vmem:[#allocation2 + $0x8] sm:$0xff]
  %v59 = vld [vmem:[#allocation2 + $0x10] sm:$0xff]
  %v60 = vld [vmem:[#allocation2 + $0x18] sm:$0xff]
  %v61 = vld [vmem:[#allocation2 + $0x20] sm:$0xff]
  %v62 = vld [vmem:[#allocation2 + $0x28] sm:$0xff]
  %v63 = vld [vmem:[#allocation2 + $0x30] sm:$0xff]
  %v64 = vld [vmem:[#allocation2 + $0x38] sm:$0xff]
  %v65 = vld [vmem:[#allocation2 + $0x40] sm:$0xff]
  %v66 = vld [vmem:[#allocation2 + $0x48] sm:$0xff]
  %v67 = vld [vmem:[#allocation2 + $0x50] sm:$0xff]
  %v68 = vld [vmem:[#allocation2 + $0x58] sm:$0xff]
  %v69 = vld [vmem:[#allocation2 + $0x60] sm:$0xff]
  %v70 = vld [vmem:[#allocation2 + $0x68] sm:$0xff]
  %v71 = vld [vmem:[#allocation2 + $0x70] sm:$0xff]
  %v72 = vld [vmem:[#allocation2 + $0x78] sm:$0xff]
  %v73 = vld [vmem:[%s1] sm:$0xf]
  %v74 = vld [vmem:[%s1 + $0x4] sm:$0xf]
  %v75 = vld [vmem:[%s1 + $0x8] sm:$0xf]
  %v76 = vld [vmem:[%s1 + $0xc] sm:$0xf]
  %v77 = vld [vmem:[%s1 + $0x10] sm:$0xf]
  %v78 = vld [vmem:[%s1 + $0x14] sm:$0xf]
  %v79 = vld [vmem:[%s1 + $0x18] sm:$0xf]
  %v80 = vld [vmem:[%s1 + $0x1c] sm:$0xf]
  %v81 = vld [vmem:[%s1 + $0x20] sm:$0xf]
  %v98 = vunpack.c.l.b16 %v41
  %v99 = vunpack.c.l.b16 %v42
  %v100 = vunpack.c.l.b16 %v43
  %v101 = vunpack.c.l.b16 %v44
  %v102 = vunpack.c.l.b16 %v45
  %v103 = vunpack.c.l.b16 %v46
  %v104 = vunpack.c.l.b16 %v47
  %v105 = vunpack.c.l.b16 %v48
  %v106 = vunpack.c.l.b16 %v49
  %v107 = vunpack.c.l.b16 %v50
  %v108 = vunpack.c.l.b16 %v51
  %v109 = vunpack.c.l.b16 %v52
  %v110 = vunpack.c.l.b16 %v53
  %v111 = vunpack.c.l.b16 %v54
  %v112 = vunpack.c.l.b16 %v55
  %v113 = vunpack.c.l.b16 %v56
  %v114 = vpack.c.b16 %v99, %v98
  %v115 = vpack.c.b16 %v101, %v100
  %v116 = vpack.c.b16 %v103, %v102
  %v117 = vpack.c.b16 %v105, %v104
  %v118 = vpack.c.b16 %v107, %v106
  %v119 = vpack.c.b16 %v109, %v108
  %v120 = vpack.c.b16 %v111, %v110
  %v121 = vpack.c.b16 %v113, %v112
  %v131 = vunpack.c.l.b16 %v73
  %v132 = vunpack.c.l.b16 %v74
  %v133 = vunpack.c.l.b16 %v75
  %v134 = vunpack.c.l.b16 %v76
  %v135 = vunpack.c.l.b16 %v77
  %v136 = vunpack.c.l.b16 %v78
  %v137 = vunpack.c.l.b16 %v79
  %v138 = vunpack.c.l.b16 %v80
  %v139 = vunpack.c.l.b16 %v81
  %v140 = vpack.c.b16 %v132, %v131
  %v141 = vpack.c.b16 %v134, %v133
  %v142 = vpack.c.b16 %v136, %v135
  %v143 = vpack.c.b16 %v138, %v137
  %v144 = vpack.c.b16 %v139, %v139
  %vm149 = vcmask 588800
  %v151 = vsel %vm149, %v114, 0
  %v154 = vsel %vm149, %v115, 0
  %v157 = vsel %vm149, %v116, 0
  %v160 = vsel %vm149, %v117, 0
  %v163 = vsel %vm149, %v118, 0
  %v166 = vsel %vm149, %v119, 0
  %v169 = vsel %vm149, %v120, 0
  %v172 = vsel %vm149, %v121, 0
  %vm174 = vcmask 1043456
  %v176 = vsel %vm174, %v144, 0
  %178 = vmatpush.bf16.msra.mxu0 0
  %179 = vmatpush.bf16.msra.mxu0 0
  %180 = vmatpush.bf16.msra.mxu0 0
  %181 = vmatpush.bf16.msra.mxu0 %v176
  %182 = vmatpush.bf16.msra.mxu0 %v143
  %183 = vmatpush.bf16.msra.mxu0 %v142
  %184 = vmatpush.bf16.msra.mxu0 %v141
  %185 = vmatpush.bf16.msra.mxu0 %v140
  %186 = vmatmul.bf16.gmra.mxu0 %v151
  %v187 = vpop.f32.mrf.mxu0
  %v188 = vadd.f32 0.0, %v187
  %v189 = vpop.f32.mrf.mxu0
  %v190 = vadd.f32 0.0, %v189
  %191 = vmatmul.bf16.gmra.mxu0 %v154
  %v192 = vpop.f32.mrf.mxu0
  %v193 = vadd.f32 0.0, %v192
  %v194 = vpop.f32.mrf.mxu0
  %v195 = vadd.f32 0.0, %v194
  %196 = vmatmul.bf16.gmra.mxu0 %v157
  %v197 = vpop.f32.mrf.mxu0
  %v198 = vadd.f32 0.0, %v197
  %v199 = vpop.f32.mrf.mxu0
  %v200 = vadd.f32 0.0, %v199
  %201 = vmatmul.bf16.gmra.mxu0 %v160
  %v202 = vpop.f32.mrf.mxu0
  %v203 = vadd.f32 0.0, %v202
  %v204 = vpop.f32.mrf.mxu0
  %v205 = vadd.f32 0.0, %v204
  %206 = vmatmul.bf16.gmra.mxu0 %v163
  %v207 = vpop.f32.mrf.mxu0
  %v208 = vadd.f32 0.0, %v207
  %v209 = vpop.f32.mrf.mxu0
  %v210 = vadd.f32 0.0, %v209
  %211 = vmatmul.bf16.gmra.mxu0 %v166
  %v212 = vpop.f32.mrf.mxu0
  %v213 = vadd.f32 0.0, %v212
  %v214 = vpop.f32.mrf.mxu0
  %v215 = vadd.f32 0.0, %v214
  %216 = vmatmul.bf16.gmra.mxu0 %v169
  %v217 = vpop.f32.mrf.mxu0
  %v218 = vadd.f32 0.0, %v217
  %v219 = vpop.f32.mrf.mxu0
  %v220 = vadd.f32 0.0, %v219
  %221 = vmatmul.bf16.gmra.mxu0 %v172
  %v222 = vpop.f32.mrf.mxu0
  %v223 = vadd.f32 0.0, %v222
  %v224 = vpop.f32.mrf.mxu0
  %v225 = vadd.f32 0.0, %v224
  %226 = vdwg.mxu0
  %v227 = vadd.f32 %v57, %v188
  %v228 = vadd.f32 %v58, %v190
  %v229 = vadd.f32 %v59, %v193
  %v230 = vadd.f32 %v60, %v195
  %v231 = vadd.f32 %v61, %v198
  %v232 = vadd.f32 %v62, %v200
  %v233 = vadd.f32 %v63, %v203
  %v234 = vadd.f32 %v64, %v205
  %v235 = vadd.f32 %v65, %v208
  %v236 = vadd.f32 %v66, %v210
  %v237 = vadd.f32 %v67, %v213
  %v238 = vadd.f32 %v68, %v215
  %v239 = vadd.f32 %v69, %v218
  %v240 = vadd.f32 %v70, %v220
  %v241 = vadd.f32 %v71, %v223
  %v242 = vadd.f32 %v72, %v225
  %vm243 = vcmask 64512
  %244 = vst.msk [vmem:[#allocation2] sm:$0xff] %vm243, %v227
  %245 = vst.msk [vmem:[#allocation2 + $0x8] sm:$0xff] %vm243, %v228
  %246 = vst.msk [vmem:[#allocation2 + $0x10] sm:$0xff] %vm243, %v229
  %247 = vst.msk [vmem:[#allocation2 + $0x18] sm:$0xff] %vm243, %v230
  %248 = vst.msk [vmem:[#allocation2 + $0x20] sm:$0xff] %vm243, %v231
  %249 = vst.msk [vmem:[#allocation2 + $0x28] sm:$0xff] %vm243, %v232
  %250 = vst.msk [vmem:[#allocation2 + $0x30] sm:$0xff] %vm243, %v233
  %251 = vst.msk [vmem:[#allocation2 + $0x38] sm:$0xff] %vm243, %v234
  %252 = vst.msk [vmem:[#allocation2 + $0x40] sm:$0xff] %vm243, %v235
  %253 = vst.msk [vmem:[#allocation2 + $0x48] sm:$0xff] %vm243, %v236
  %254 = vst.msk [vmem:[#allocation2 + $0x50] sm:$0xff] %vm243, %v237
  %255 = vst.msk [vmem:[#allocation2 + $0x58] sm:$0xff] %vm243, %v238
  %256 = vst.msk [vmem:[#allocation2 + $0x60] sm:$0xff] %vm243, %v239
  %257 = vst.msk [vmem:[#allocation2 + $0x68] sm:$0xff] %vm243, %v240
  %258 = vst.msk [vmem:[#allocation2 + $0x70] sm:$0xff] %vm243, %v241
  %259 = vst.msk [vmem:[#allocation2 + $0x78] sm:$0xff] %vm243, %v242
  // Predicated region
  $region22: #{discriminator_forward.12} parent=0 // pred_check
    %p260 = pneg %p20
  $region23: #{discriminator_forward.12} parent=0 // pred_check_branch
    %262 = sbr.rel (%p260) target = $region25
  $region24: #{discriminator_forward.12} parent=0 // pred_region
    %v263 = vld [vmem:[#allocation2] sm:$0xff]
    %v264 = vld [vmem:[#allocation2 + $0x8] sm:$0xff]
    %v265 = vld [vmem:[#allocation2 + $0x10] sm:$0xff]
    %v266 = vld [vmem:[#allocation2 + $0x18] sm:$0xff]
    %v267 = vld [vmem:[#allocation2 + $0x20] sm:$0xff]
    %v268 = vld [vmem:[#allocation2 + $0x28] sm:$0xff]
    %v269 = vld [vmem:[#allocation2 + $0x30] sm:$0xff]
    %v270 = vld [vmem:[#allocation2 + $0x38] sm:$0xff]
    %v271 = vld [vmem:[#allocation2 + $0x40] sm:$0xff]
    %v272 = vld [vmem:[#allocation2 + $0x48] sm:$0xff]
    %v273 = vld [vmem:[#allocation2 + $0x50] sm:$0xff]
    %v274 = vld [vmem:[#allocation2 + $0x58] sm:$0xff]
    %v275 = vld [vmem:[#allocation2 + $0x60] sm:$0xff]
    %v276 = vld [vmem:[#allocation2 + $0x68] sm:$0xff]
    %v277 = vld [vmem:[#allocation2 + $0x70] sm:$0xff]
    %v278 = vld [vmem:[#allocation2 + $0x78] sm:$0xff]
    %vm279 = vcmp.gt.f32.partialorder %v263, 0.0
    %vm280 = vcmp.gt.f32.partialorder %v264, 0.0
    %vm281 = vcmp.gt.f32.partialorder %v265, 0.0
    %vm282 = vcmp.gt.f32.partialorder %v266, 0.0
    %vm283 = vcmp.gt.f32.partialorder %v267, 0.0
    %vm284 = vcmp.gt.f32.partialorder %v268, 0.0
    %vm285 = vcmp.gt.f32.partialorder %v269, 0.0
    %vm286 = vcmp.gt.f32.partialorder %v270, 0.0
    %vm287 = vcmp.gt.f32.partialorder %v271, 0.0
    %vm288 = vcmp.gt.f32.partialorder %v272, 0.0
    %vm289 = vcmp.gt.f32.partialorder %v273, 0.0
    %vm290 = vcmp.gt.f32.partialorder %v274, 0.0
    %vm291 = vcmp.gt.f32.partialorder %v275, 0.0
    %vm292 = vcmp.gt.f32.partialorder %v276, 0.0
    %vm293 = vcmp.gt.f32.partialorder %v277, 0.0
    %vm294 = vcmp.gt.f32.partialorder %v278, 0.0
    %v295 = vmul.f32 %v263, 0.2
    %v296 = vmul.f32 %v264, 0.2
    %v297 = vmul.f32 %v265, 0.2
    %v298 = vmul.f32 %v266, 0.2
    %v299 = vmul.f32 %v267, 0.2
    %v300 = vmul.f32 %v268, 0.2
    %v301 = vmul.f32 %v269, 0.2
    %v302 = vmul.f32 %v270, 0.2
    %v303 = vmul.f32 %v271, 0.2
    %v304 = vmul.f32 %v272, 0.2
    %v305 = vmul.f32 %v273, 0.2
    %v306 = vmul.f32 %v274, 0.2
    %v307 = vmul.f32 %v275, 0.2
    %v308 = vmul.f32 %v276, 0.2
    %v309 = vmul.f32 %v277, 0.2
    %v310 = vmul.f32 %v278, 0.2
    %v311 = vsel %vm279, %v263, %v295
    %v312 = vsel %vm280, %v264, %v296
    %v313 = vsel %vm281, %v265, %v297
    %v314 = vsel %vm282, %v266, %v298
    %v315 = vsel %vm283, %v267, %v299
    %v316 = vsel %vm284, %v268, %v300
    %v317 = vsel %vm285, %v269, %v301
    %v318 = vsel %vm286, %v270, %v302
    %v319 = vsel %vm287, %v271, %v303
    %v320 = vsel %vm288, %v272, %v304
    %v321 = vsel %vm289, %v273, %v305
    %v322 = vsel %vm290, %v274, %v306
    %v323 = vsel %vm291, %v275, %v307
    %v324 = vsel %vm292, %v276, %v308
    %v325 = vsel %vm293, %v277, %v309
    %v326 = vsel %vm294, %v278, %v310
    %v327 = vld [vmem:[%s2] sm:$0xf]
    %v328 = vld [vmem:[%s2 + $0x4] sm:$0xf]
    %v329 = vld [vmem:[%s2 + $0x8] sm:$0xf]
    %v330 = vld [vmem:[%s2 + $0xc] sm:$0xf]
    %v331 = vld [vmem:[%s2 + $0x10] sm:$0xf]
    %v332 = vld [vmem:[%s2 + $0x14] sm:$0xf]
    %v333 = vld [vmem:[%s2 + $0x18] sm:$0xf]
    %v334 = vld [vmem:[%s2 + $0x1c] sm:$0xf]
    %v335 = vld [vmem:[%s2 + $0x20] sm:$0xf]
    %v336 = vld [vmem:[%s2 + $0x24] sm:$0xf]
    %v337 = vld [vmem:[%s2 + $0x28] sm:$0xf]
    %v338 = vld [vmem:[%s2 + $0x2c] sm:$0xf]
    %v339 = vld [vmem:[%s2 + $0x30] sm:$0xf]
    %v340 = vld [vmem:[%s2 + $0x34] sm:$0xf]
    %v341 = vld [vmem:[%s2 + $0x38] sm:$0xf]
    %v342 = vld [vmem:[%s2 + $0x3c] sm:$0xf]
    %v343 = vunpack.c.l.bf16 %v327
    %v344 = vunpack.c.l.bf16 %v328
    %v345 = vunpack.c.l.bf16 %v329
    %v346 = vunpack.c.l.bf16 %v330
    %v347 = vunpack.c.l.bf16 %v331
    %v348 = vunpack.c.l.bf16 %v332
    %v349 = vunpack.c.l.bf16 %v333
    %v350 = vunpack.c.l.bf16 %v334
    %v351 = vunpack.c.l.bf16 %v335
    %v352 = vunpack.c.l.bf16 %v336
    %v353 = vunpack.c.l.bf16 %v337
    %v354 = vunpack.c.l.bf16 %v338
    %v355 = vunpack.c.l.bf16 %v339
    %v356 = vunpack.c.l.bf16 %v340
    %v357 = vunpack.c.l.bf16 %v341
    %v358 = vunpack.c.l.bf16 %v342
    %v359 = vld [vmem:[#allocation3] sm:$0x1]
    %v361 = vperm.slane %v359, 0
    %362 = vset.pattern.permute.xlu0 0
    %363 = vperm.xlu0 %362, %v361
    %v364 = vpop.permute.xlu0 %363
    %v366 = vmul.f32 %v364, %v311
    %v367 = vmul.f32 %v364, %v312
    %v368 = vmul.f32 %v364, %v313
    %v369 = vmul.f32 %v364, %v314
    %v370 = vmul.f32 %v364, %v315
    %v371 = vmul.f32 %v364, %v316
    %v372 = vmul.f32 %v364, %v317
    %v373 = vmul.f32 %v364, %v318
    %v374 = vmul.f32 %v364, %v319
    %v375 = vmul.f32 %v364, %v320
    %v376 = vmul.f32 %v364, %v321
    %v377 = vmul.f32 %v364, %v322
    %v378 = vmul.f32 %v364, %v323
    %v379 = vmul.f32 %v364, %v324
    %v380 = vmul.f32 %v364, %v325
    %v381 = vmul.f32 %v364, %v326
    %v382 = vadd.f32 %v343, %v366
    %v383 = vadd.f32 %v344, %v367
    %v384 = vadd.f32 %v345, %v368
    %v385 = vadd.f32 %v346, %v369
    %v386 = vadd.f32 %v347, %v370
    %v387 = vadd.f32 %v348, %v371
    %v388 = vadd.f32 %v349, %v372
    %v389 = vadd.f32 %v350, %v373
    %v390 = vadd.f32 %v351, %v374
    %v391 = vadd.f32 %v352, %v375
    %v392 = vadd.f32 %v353, %v376
    %v393 = vadd.f32 %v354, %v377
    %v394 = vadd.f32 %v355, %v378
    %v395 = vadd.f32 %v356, %v379
    %v396 = vadd.f32 %v357, %v380
    %v397 = vadd.f32 %v358, %v381
    %v398 = vpack.c.bf16 %v382, %v382
    %v399 = vpack.c.bf16 %v383, %v383
    %v400 = vpack.c.bf16 %v384, %v384
    %v401 = vpack.c.bf16 %v385, %v385
    %v402 = vpack.c.bf16 %v386, %v386
    %v403 = vpack.c.bf16 %v387, %v387
    %v404 = vpack.c.bf16 %v388, %v388
    %v405 = vpack.c.bf16 %v389, %v389
    %v406 = vpack.c.bf16 %v390, %v390
    %v407 = vpack.c.bf16 %v391, %v391
    %v408 = vpack.c.bf16 %v392, %v392
    %v409 = vpack.c.bf16 %v393, %v393
    %v410 = vpack.c.bf16 %v394, %v394
    %v411 = vpack.c.bf16 %v395, %v395
    %v412 = vpack.c.bf16 %v396, %v396
    %v413 = vpack.c.bf16 %v397, %v397
    %vm414 = vcmask 60416
    %415 = vst.msk [vmem:[%s4] sm:$0xf] %vm414, %v398
    %416 = vst.msk [vmem:[%s4 + $0x4] sm:$0xf] %vm414, %v399
    %417 = vst.msk [vmem:[%s4 + $0x8] sm:$0xf] %vm414, %v400
    %418 = vst.msk [vmem:[%s4 + $0xc] sm:$0xf] %vm414, %v401
    %419 = vst.msk [vmem:[%s4 + $0x10] sm:$0xf] %vm414, %v402
    %420 = vst.msk [vmem:[%s4 + $0x14] sm:$0xf] %vm414, %v403
    %421 = vst.msk [vmem:[%s4 + $0x18] sm:$0xf] %vm414, %v404
    %422 = vst.msk [vmem:[%s4 + $0x1c] sm:$0xf] %vm414, %v405
    %423 = vst.msk [vmem:[%s4 + $0x20] sm:$0xf] %vm414, %v406
    %424 = vst.msk [vmem:[%s4 + $0x24] sm:$0xf] %vm414, %v407
    %425 = vst.msk [vmem:[%s4 + $0x28] sm:$0xf] %vm414, %v408
    %426 = vst.msk [vmem:[%s4 + $0x2c] sm:$0xf] %vm414, %v409
    %427 = vst.msk [vmem:[%s4 + $0x30] sm:$0xf] %vm414, %v410
    %428 = vst.msk [vmem:[%s4 + $0x34] sm:$0xf] %vm414, %v411
    %429 = vst.msk [vmem:[%s4 + $0x38] sm:$0xf] %vm414, %v412
    %430 = vst.msk [vmem:[%s4 + $0x3c] sm:$0xf] %vm414, %v413
  $region25: #{discriminator_forward.12} parent=0 // pred_fallthru
    _
  // Predicated region
  $region26: #{discriminator_forward.12} parent=0 // pred_check
    _
  $region27: #{discriminator_forward.12} parent=0 // pred_check_branch
    %432 = sbr.rel (0) target = $region29
  $region28: #{discriminator_forward.12} parent=0 // pred_region
    _
  $region29: #{discriminator_forward.12} parent=0 // pred_fallthru
    _
  // Predicated region
  $region30: #{discriminator_forward.12} parent=0 // pred_check
    _
  $region31: #{discriminator_forward.12} parent=0 // pred_check_branch
    %434 = sbr.rel (0) target = $region33
  $region32: #{discriminator_forward.12} parent=0 // pred_region
    _
  $region33: #{discriminator_forward.12} parent=0 // pred_fallthru
    _

// kernel: discriminator_forward.13
$region0: #{discriminator_forward.13}
  #allocation0 [shape = 'u32[]', space=smem, size = 0x4, offset = 0x4, fixed_abs, tag = 'smem constant byte address 0x4 - core index']
  #allocation1 [shape = 'u32[72,128]{1,0:T(1,128)}', space=vmem, size = 0x9000, scoped, tag = 'internal scratch']
  %s0 = inlined_call_operand.vmem [shape: bf16[8,128], index: 0, kind: input, shape index: {}]
  %s1 = inlined_call_operand.vmem [shape: bf16[8,128], index: 1, kind: input, shape index: {}]
  %s2 = inlined_call_operand.vmem [shape: bf16[8,128], index: 2, kind: input, shape index: {}]
  %s3 = inlined_call_operand.vmem [shape: bf16[8,128], index: 3, kind: input, shape index: {}]
  %s4 = inlined_call_operand.vmem [shape: bf16[8,128], index: 4, kind: output, shape index: {}]
  %s5 = sld [smem:[#allocation0]]
  $region26: #{discriminator_forward.13} parent=0
    _
  %s7 = ssub.s32 1, %s5
  %s8 = scalar_select 0, %s7, %s5
  // Predicated region
  $region2: #{discriminator_forward.13} parent=0 // pred_check
    _
  $region3: #{discriminator_forward.13} parent=0 // pred_check_branch
    %10 = sbr.rel (0) target = $region5
  $region4: #{discriminator_forward.13} parent=0 // pred_region
    _
  $region5: #{discriminator_forward.13} parent=0 // pred_fallthru
    _
  // Predicated region
  $region6: #{discriminator_forward.13} parent=0 // pred_check
    _
  $region7: #{discriminator_forward.13} parent=0 // pred_check_branch
    %12 = sbr.rel (0) target = $region9
  $region8: #{discriminator_forward.13} parent=0 // pred_region
    _
  $region9: #{discriminator_forward.13} parent=0 // pred_fallthru
    _
  // Predicated region
  $region10: #{discriminator_forward.13} parent=0 // pred_check
    _
  $region11: #{discriminator_forward.13} parent=0 // pred_check_branch
    %14 = sbr.rel (0) target = $region13
  $region12: #{discriminator_forward.13} parent=0 // pred_region
    _
  $region13: #{discriminator_forward.13} parent=0 // pred_fallthru
    _
  // Predicated region
  $region14: #{discriminator_forward.13} parent=0 // pred_check
    _
  $region15: #{discriminator_forward.13} parent=0 // pred_check_branch
    %16 = sbr.rel (0) target = $region17
  $region16: #{discriminator_forward.13} parent=0 // pred_region
    _
  $region17: #{discriminator_forward.13} parent=0 // pred_fallthru
    _
  %v17 = vld [vmem:[%s0] sm:$0xf]
  %v18 = vunpack.c.l.bf16 %v17
  %v19 = vld [vmem:[%s1] sm:$0xf]
  %v20 = vunpack.c.l.bf16 %v19
  %v21 = vadd.f32 %v18, %v20
  %v22 = vld [vmem:[%s2] sm:$0xf]
  %v23 = vunpack.c.l.bf16 %v22
  %v24 = vadd.f32 %v21, %v23
  %v25 = vld [vmem:[%s3] sm:$0xf]
  %v26 = vunpack.c.l.bf16 %v25
  %v27 = vadd.f32 %v24, %v26
  %v28 = vmul.f32 %v27, 0.25
  %v29 = vpack.c.bf16 %v28, %v28
  %30 = vst [vmem:[%s4] sm:$0xf] %v29
  // Predicated region
  $region18: #{discriminator_forward.13} parent=0 // pred_check
    _
  $region19: #{discriminator_forward.13} parent=0 // pred_check_branch
    %32 = sbr.rel (0) target = $region21
  $region20: #{discriminator_forward.13} parent=0 // pred_region
    _
  $region21: #{discriminator_forward.13} parent=0 // pred_fallthru
    _
  // Predicated region
  $region22: #{discriminator_forward.13} parent=0 // pred_check
    _
  $region23: #{discriminator_forward.13} parent=0 // pred_check_branch
    %34 = sbr.rel (0) target = $region25
  $region24: #{discriminator_forward.13} parent=0 // pred_region
    _
  $region25: #{discriminator_forward.13} parent=0 // pred_fallthru
    _

// kernel: discriminator_forward.14
$region0: #{discriminator_forward.14}
  #allocation0 [shape = 'u32[]', space=smem, size = 0x4, offset = 0x4, fixed_abs, tag = 'smem constant byte address 0x4 - core index']
  #allocation1 [shape = 'u32[72,128]{1,0:T(1,128)}', space=vmem, size = 0x9000, scoped, tag = 'internal scratch']
  #allocation2 [shape = 'f32[32,8]{1,0:T(8,128)}', space=vmem, size = 0x4000, scoped, tag = 'scratch operand']
  %s0 = inlined_call_operand.vmem [shape: bf16[32,128], index: 0, kind: input, shape index: {}]
  %s1 = inlined_call_operand.vmem [shape: bf16[128,8], index: 1, kind: input, shape index: {}]
  %s2 = inlined_call_operand.vmem [shape: bf16[32,8], index: 2, kind: output, shape index: {}]
  %s3 = sld [smem:[#allocation0]]
  $region26: #{discriminator_forward.14} parent=0
    _
  %s5 = ssub.s32 1, %s3
  %s6 = scalar_select 0, %s5, %s3
  // Predicated region
  $region2: #{discriminator_forward.14} parent=0 // pred_check
    _
  $region3: #{discriminator_forward.14} parent=0 // pred_check_branch
    %8 = sbr.rel (0) target = $region5
  $region4: #{discriminator_forward.14} parent=0 // pred_region
    _
  $region5: #{discriminator_forward.14} parent=0 // pred_fallthru
    _
  // Predicated region
  $region6: #{discriminator_forward.14} parent=0 // pred_check
    _
  $region7: #{discriminator_forward.14} parent=0 // pred_check_branch
    %10 = sbr.rel (0) target = $region9
  $region8: #{discriminator_forward.14} parent=0 // pred_region
    _
  $region9: #{discriminator_forward.14} parent=0 // pred_fallthru
    _
  %p11 = scmp.eq.s32.totalorder 0, 0
  // Predicated region
  $region10: #{discriminator_forward.14} parent=0 // pred_check
    %p12 = pneg %p11
  $region11: #{discriminator_forward.14} parent=0 // pred_check_branch
    %14 = sbr.rel (%p12) target = $region13
  $region12: #{discriminator_forward.14} parent=0 // pred_region
    %vm15 = vcmask 64512
    %16 = vst.msk [vmem:[#allocation2] sm:$0xff] %vm15, 0.0
    %17 = vst.msk [vmem:[#allocation2 + $0x8] sm:$0xff] %vm15, 0.0
    %18 = vst.msk [vmem:[#allocation2 + $0x10] sm:$0xff] %vm15, 0.0
    %19 = vst.msk [vmem:[#allocation2 + $0x18] sm:$0xff] %vm15, 0.0
  $region13: #{discriminator_forward.14} parent=0 // pred_fallthru
    _
  %v20 = vld [vmem:[%s0] sm:$0xf]
  %v21 = vld [vmem:[%s0 + $0x4] sm:$0xf]
  %v22 = vld [vmem:[%s0 + $0x8] sm:$0xf]
  %v23 = vld [vmem:[%s0 + $0xc] sm:$0xf]
  %v24 = vld [vmem:[#allocation2] sm:$0xff]
  %v25 = vld [vmem:[#allocation2 + $0x8] sm:$0xff]
  %v26 = vld [vmem:[#allocation2 + $0x10] sm:$0xff]
  %v27 = vld [vmem:[#allocation2 + $0x18] sm:$0xff]
  %v28 = vld [vmem:[%s1] sm:$0xf]
  %v29 = vld [vmem:[%s1 + $0x4] sm:$0xf]
  %v30 = vld [vmem:[%s1 + $0x8] sm:$0xf]
  %v31 = vld [vmem:[%s1 + $0xc] sm:$0xf]
  %v32 = vld [vmem:[%s1 + $0x10] sm:$0xf]
  %v33 = vld [vmem:[%s1 + $0x14] sm:$0xf]
  %v34 = vld [vmem:[%s1 + $0x18] sm:$0xf]
  %v35 = vld [vmem:[%s1 + $0x1c] sm:$0xf]
  %v36 = vld [vmem:[%s1 + $0x20] sm:$0xf]
  %v37 = vld [vmem:[%s1 + $0x24] sm:$0xf]
  %v38 = vld [vmem:[%s1 + $0x28] sm:$0xf]
  %v39 = vld [vmem:[%s1 + $0x2c] sm:$0xf]
  %v40 = vld [vmem:[%s1 + $0x30] sm:$0xf]
  %v41 = vld [vmem:[%s1 + $0x34] sm:$0xf]
  %v42 = vld [vmem:[%s1 + $0x38] sm:$0xf]
  %v43 = vld [vmem:[%s1 + $0x3c] sm:$0xf]
  %v48 = vunpack.c.l.b16 %v20
  %v49 = vunpack.c.l.b16 %v21
  %v50 = vunpack.c.l.b16 %v22
  %v51 = vunpack.c.l.b16 %v23
  %v52 = vpack.c.b16 %v49, %v48
  %v53 = vpack.c.b16 %v51, %v50
  %v72 = vunpack.c.l.b16 %v28
  %v73 = vunpack.c.l.b16 %v29
  %v74 = vunpack.c.l.b16 %v30
  %v75 = vunpack.c.l.b16 %v31
  %v76 = vunpack.c.l.b16 %v32
  %v77 = vunpack.c.l.b16 %v33
  %v78 = vunpack.c.l.b16 %v34
  %v79 = vunpack.c.l.b16 %v35
  %v80 = vunpack.c.l.b16 %v36
  %v81 = vunpack.c.l.b16 %v37
  %v82 = vunpack.c.l.b16 %v38
  %v83 = vunpack.c.l.b16 %v39
  %v84 = vunpack.c.l.b16 %v40
  %v85 = vunpack.c.l.b16 %v41
  %v86 = vunpack.c.l.b16 %v42
  %v87 = vunpack.c.l.b16 %v43
  %v88 = vpack.c.b16 %v73, %v72
  %v89 = vpack.c.b16 %v75, %v74
  %v90 = vpack.c.b16 %v77, %v76
  %v91 = vpack.c.b16 %v79, %v78
  %v92 = vpack.c.b16 %v81, %v80
  %v93 = vpack.c.b16 %v83, %v82
  %v94 = vpack.c.b16 %v85, %v84
  %v95 = vpack.c.b16 %v87, %v86
  %104 = vmatpush.bf16.msra.mxu0 %v95
  %105 = vmatpush.bf16.msra.mxu0 %v94
  %106 = vmatpush.bf16.msra.mxu0 %v93
  %107 = vmatpush.bf16.msra.mxu0 %v92
  %108 = vmatpush.bf16.msra.mxu0 %v91
  %109 = vmatpush.bf16.msra.mxu0 %v90
  %110 = vmatpush.bf16.msra.mxu0 %v89
  %111 = vmatpush.bf16.msra.mxu0 %v88
  %112 = vmatmul.bf16.gmra.mxu0 %v52
  %v113 = vpop.f32.mrf.mxu0
  %v114 = vadd.f32 0.0, %v113
  %v115 = vpop.f32.mrf.mxu0
  %v116 = vadd.f32 0.0, %v115
  %117 = vmatmul.bf16.gmra.mxu0 %v53
  %v118 = vpop.f32.mrf.mxu0
  %v119 = vadd.f32 0.0, %v118
  %v120 = vpop.f32.mrf.mxu0
  %v121 = vadd.f32 0.0, %v120
  %122 = vdwg.mxu0
  %v123 = vadd.f32 %v24, %v114
  %v124 = vadd.f32 %v25, %v116
  %v125 = vadd.f32 %v26, %v119
  %v126 = vadd.f32 %v27, %v121
  %vm127 = vcmask 64512
  %128 = vst.msk [vmem:[#allocation2] sm:$0xff] %vm127, %v123
  %129 = vst.msk [vmem:[#allocation2 + $0x8] sm:$0xff] %vm127, %v124
  %130 = vst.msk [vmem:[#allocation2 + $0x10] sm:$0xff] %vm127, %v125
  %131 = vst.msk [vmem:[#allocation2 + $0x18] sm:$0xff] %vm127, %v126
  // Predicated region
  $region14: #{discriminator_forward.14} parent=0 // pred_check
    %p132 = pneg %p11
  $region15: #{discriminator_forward.14} parent=0 // pred_check_branch
    %134 = sbr.rel (%p132) target = $region17
  $region16: #{discriminator_forward.14} parent=0 // pred_region
    %v135 = vld [vmem:[#allocation2] sm:$0xff]
    %v136 = vld [vmem:[#allocation2 + $0x8] sm:$0xff]
    %v137 = vld [vmem:[#allocation2 + $0x10] sm:$0xff]
    %v138 = vld [vmem:[#allocation2 + $0x18] sm:$0xff]
    %vm139 = vcmp.gt.f32.partialorder %v135, 0.0
    %vm140 = vcmp.gt.f32.partialorder %v136, 0.0
    %vm141 = vcmp.gt.f32.partialorder %v137, 0.0
    %vm142 = vcmp.gt.f32.partialorder %v138, 0.0
    %v143 = vmul.f32 %v135, 0.2
    %v144 = vmul.f32 %v136, 0.2
    %v145 = vmul.f32 %v137, 0.2
    %v146 = vmul.f32 %v138, 0.2
    %v147 = vsel %vm139, %v135, %v143
    %v148 = vsel %vm140, %v136, %v144
    %v149 = vsel %vm141, %v137, %v145
    %v150 = vsel %vm142, %v138, %v146
    %v151 = vpack.c.bf16 %v147, %v147
    %v152 = vpack.c.bf16 %v148, %v148
    %v153 = vpack.c.bf16 %v149, %v149
    %v154 = vpack.c.bf16 %v150, %v150
    %vm155 = vcmask 60416
    %156 = vst.msk [vmem:[%s2] sm:$0xf] %vm155, %v151
    %157 = vst.msk [vmem:[%s2 + $0x4] sm:$0xf] %vm155, %v152
    %158 = vst.msk [vmem:[%s2 + $0x8] sm:$0xf] %vm155, %v153
    %159 = vst.msk [vmem:[%s2 + $0xc] sm:$0xf] %vm155, %v154
  $region17: #{discriminator_forward.14} parent=0 // pred_fallthru
    _
  // Predicated region
  $region18: #{discriminator_forward.14} parent=0 // pred_check
    _
  $region19: #{discriminator_forward.14} parent=0 // pred_check_branch
    %161 = sbr.rel (0) target = $region21
  $region20: #{discriminator_forward.14} parent=0 // pred_region
    _
  $region21: #{discriminator_forward.14} parent=0 // pred_fallthru
    _
  // Predicated region
  $region22: #{discriminator_forward.14} parent=0 // pred_check
    _
  $region23: #{discriminator_forward.14} parent=0 // pred_check_branch
    %163 = sbr.rel (0) target = $region25
  $region24: #{discriminator_forward.14} parent=0 // pred_region
    _
  $region25: #{discriminator_forward.14} parent=0 // pred_fallthru
    _

// kernel: discriminator_forward.15
$region0: #{discriminator_forward.15}
  #allocation0 [shape = 'u32[]', space=smem, size = 0x4, offset = 0x4, fixed_abs, tag = 'smem constant byte address 0x4 - core index']
  #allocation1 [shape = 'u32[72,128]{1,0:T(1,128)}', space=vmem, size = 0x9000, scoped, tag = 'internal scratch']
  #allocation2 [shape = 'f32[32,8]{1,0:T(8,128)}', space=vmem, size = 0x4000, scoped, tag = 'scratch operand']
  #allocation3 [shape = 'f32[1,1]{1,0:T(1,128)S(1)}', space=vmem, size = 0x200, scoped, tag = 'scoped memory for discriminator_forward.15']
  %s0 = inlined_call_operand.vmem [shape: bf16[32,72], index: 0, kind: input, shape index: {}]
  %s1 = inlined_call_operand.vmem [shape: bf16[72,8], index: 1, kind: input, shape index: {}]
  %s2 = inlined_call_operand.vmem [shape: bf16[32,8], index: 2, kind: input, shape index: {}]
  %s3 = inlined_call_operand.<no memory space> [shape: f32[1,1], index: 3, kind: input, shape index: {}]
  %s4 = inlined_call_operand.vmem [shape: bf16[32,8], index: 4, kind: output, shape index: {}]
  %s5 = sld [smem:[#allocation0]]
  $region34: #{discriminator_forward.15} parent=0
    _
  %s7 = ssub.s32 1, %s5
  %s8 = scalar_select 0, %s7, %s5
  %v9 = vstv %s3
  %10 = vst [vmem:[#allocation3] sm:$0x1] %v9
  // Predicated region
  $region2: #{discriminator_forward.15} parent=0 // pred_check
    _
  $region3: #{discriminator_forward.15} parent=0 // pred_check_branch
    %12 = sbr.rel (0) target = $region5
  $region4: #{discriminator_forward.15} parent=0 // pred_region
    _
  $region5: #{discriminator_forward.15} parent=0 // pred_fallthru
    _
  // Predicated region
  $region6: #{discriminator_forward.15} parent=0 // pred_check
    _
  $region7: #{discriminator_forward.15} parent=0 // pred_check_branch
    %14 = sbr.rel (0) target = $region9
  $region8: #{discriminator_forward.15} parent=0 // pred_region
    _
  $region9: #{discriminator_forward.15} parent=0 // pred_fallthru
    _
  // Predicated region
  $region10: #{discriminator_forward.15} parent=0 // pred_check
    _
  $region11: #{discriminator_forward.15} parent=0 // pred_check_branch
    %16 = sbr.rel (0) target = $region13
  $region12: #{discriminator_forward.15} parent=0 // pred_region
    _
  $region13: #{discriminator_forward.15} parent=0 // pred_fallthru
    _
  // Predicated region
  $region14: #{discriminator_forward.15} parent=0 // pred_check
    _
  $region15: #{discriminator_forward.15} parent=0 // pred_check_branch
    %18 = sbr.rel (0) target = $region17
  $region16: #{discriminator_forward.15} parent=0 // pred_region
    _
  $region17: #{discriminator_forward.15} parent=0 // pred_fallthru
    _
  %p20 = scmp.eq.s32.totalorder 0, 0
  // Predicated region
  $region18: #{discriminator_forward.15} parent=0 // pred_check
    %p21 = pneg %p20
  $region19: #{discriminator_forward.15} parent=0 // pred_check_branch
    %23 = sbr.rel (%p21) target = $region21
  $region20: #{discriminator_forward.15} parent=0 // pred_region
    %vm24 = vcmask 64512
    %25 = vst.msk [vmem:[#allocation2] sm:$0xff] %vm24, 0.0
    %26 = vst.msk [vmem:[#allocation2 + $0x8] sm:$0xff] %vm24, 0.0
    %27 = vst.msk [vmem:[#allocation2 + $0x10] sm:$0xff] %vm24, 0.0
    %28 = vst.msk [vmem:[#allocation2 + $0x18] sm:$0xff] %vm24, 0.0
  $region21: #{discriminator_forward.15} parent=0 // pred_fallthru
    _
  %v29 = vld [vmem:[%s0] sm:$0xf]
  %v30 = vld [vmem:[%s0 + $0x4] sm:$0xf]
  %v31 = vld [vmem:[%s0 + $0x8] sm:$0xf]
  %v32 = vld [vmem:[%s0 + $0xc] sm:$0xf]
  %v33 = vld [vmem:[#allocation2] sm:$0xff]
  %v34 = vld [vmem:[#allocation2 + $0x8] sm:$0xff]
  %v35 = vld [vmem:[#allocation2 + $0x10] sm:$0xff]
  %v36 = vld [vmem:[#allocation2 + $0x18] sm:$0xff]
  %v37 = vld [vmem:[%s1] sm:$0xf]
  %v38 = vld [vmem:[%s1 + $0x4] sm:$0xf]
  %v39 = vld [vmem:[%s1 + $0x8] sm:$0xf]
  %v40 = vld [vmem:[%s1 + $0xc] sm:$0xf]
  %v41 = vld [vmem:[%s1 + $0x10] sm:$0xf]
  %v42 = vld [vmem:[%s1 + $0x14] sm:$0xf]
  %v43 = vld [vmem:[%s1 + $0x18] sm:$0xf]
  %v44 = vld [vmem:[%s1 + $0x1c] sm:$0xf]
  %v45 = vld [vmem:[%s1 + $0x20] sm:$0xf]
  %v50 = vunpack.c.l.b16 %v29
  %v51 = vunpack.c.l.b16 %v30
  %v52 = vunpack.c.l.b16 %v31
  %v53 = vunpack.c.l.b16 %v32
  %v54 = vpack.c.b16 %v51, %v50
  %v55 = vpack.c.b16 %v53, %v52
  %v65 = vunpack.c.l.b16 %v37
  %v66 = vunpack.c.l.b16 %v38
  %v67 = vunpack.c.l.b16 %v39
  %v68 = vunpack.c.l.b16 %v40
  %v69 = vunpack.c.l.b16 %v41
  %v70 = vunpack.c.l.b16 %v42
  %v71 = vunpack.c.l.b16 %v43
  %v72 = vunpack.c.l.b16 %v44
  %v73 = vunpack.c.l.b16 %v45
  %v74 = vpack.c.b16 %v66, %v65
  %v75 = vpack.c.b16 %v68, %v67
  %v76 = vpack.c.b16 %v70, %v69
  %v77 = vpack.c.b16 %v72, %v71
  %v78 = vpack.c.b16 %v73, %v73
  %vm83 = vcmask 588800
  %v85 = vsel %vm83, %v54, 0
  %v88 = vsel %vm83, %v55, 0
  %vm90 = vcmask 1043456
  %v92 = vsel %vm90, %v78, 0
  %94 = vmatpush.bf16.msra.mxu0 0
  %95 = vmatpush.bf16.msra.mxu0 0
  %96 = vmatpush.bf16.msra.mxu0 0
  %97 = vmatpush.bf16.msra.mxu0 %v92
  %98 = vmatpush.bf16.msra.mxu0 %v77
  %99 = vmatpush.bf16.msra.mxu0 %v76
  %100 = vmatpush.bf16.msra.mxu0 %v75
  %101 = vmatpush.bf16.msra.mxu0 %v74
  %102 = vmatmul.bf16.gmra.mxu0 %v85
  %v103 = vpop.f32.mrf.mxu0
  %v104 = vadd.f32 0.0, %v103
  %v105 = vpop.f32.mrf.mxu0
  %v106 = vadd.f32 0.0, %v105
  %107 = vmatmul.bf16.gmra.mxu0 %v88
  %v108 = vpop.f32.mrf.mxu0
  %v109 = vadd.f32 0.0, %v108
  %v110 = vpop.f32.mrf.mxu0
  %v111 = vadd.f32 0.0, %v110
  %112 = vdwg.mxu0
  %v113 = vadd.f32 %v33, %v104
  %v114 = vadd.f32 %v34, %v106
  %v115 = vadd.f32 %v35, %v109
  %v116 = vadd.f32 %v36, %v111
  %vm117 = vcmask 64512
  %118 = vst.msk [vmem:[#allocation2] sm:$0xff] %vm117, %v113
  %119 = vst.msk [vmem:[#allocation2 + $0x8] sm:$0xff] %vm117, %v114
  %120 = vst.msk [vmem:[#allocation2 + $0x10] sm:$0xff] %vm117, %v115
  %121 = vst.msk [vmem:[#allocation2 + $0x18] sm:$0xff] %vm117, %v116
  // Predicated region
  $region22: #{discriminator_forward.15} parent=0 // pred_check
    %p122 = pneg %p20
  $region23: #{discriminator_forward.15} parent=0 // pred_check_branch
    %124 = sbr.rel (%p122) target = $region25
  $region24: #{discriminator_forward.15} parent=0 // pred_region
    %v125 = vld [vmem:[#allocation2] sm:$0xff]
    %v126 = vld [vmem:[#allocation2 + $0x8] sm:$0xff]
    %v127 = vld [vmem:[#allocation2 + $0x10] sm:$0xff]
    %v128 = vld [vmem:[#allocation2 + $0x18] sm:$0xff]
    %vm129 = vcmp.gt.f32.partialorder %v125, 0.0
    %vm130 = vcmp.gt.f32.partialorder %v126, 0.0
    %vm131 = vcmp.gt.f32.partialorder %v127, 0.0
    %vm132 = vcmp.gt.f32.partialorder %v128, 0.0
    %v133 = vmul.f32 %v125, 0.2
    %v134 = vmul.f32 %v126, 0.2
    %v135 = vmul.f32 %v127, 0.2
    %v136 = vmul.f32 %v128, 0.2
    %v137 = vsel %vm129, %v125, %v133
    %v138 = vsel %vm130, %v126, %v134
    %v139 = vsel %vm131, %v127, %v135
    %v140 = vsel %vm132, %v128, %v136
    %v141 = vld [vmem:[%s2] sm:$0xf]
    %v142 = vld [vmem:[%s2 + $0x4] sm:$0xf]
    %v143 = vld [vmem:[%s2 + $0x8] sm:$0xf]
    %v144 = vld [vmem:[%s2 + $0xc] sm:$0xf]
    %v145 = vunpack.c.l.bf16 %v141
    %v146 = vunpack.c.l.bf16 %v142
    %v147 = vunpack.c.l.bf16 %v143
    %v148 = vunpack.c.l.bf16 %v144
    %v149 = vld [vmem:[#allocation3] sm:$0x1]
    %v151 = vperm.slane %v149, 0
    %152 = vset.pattern.permute.xlu0 0
    %153 = vperm.xlu0 %152, %v151
    %v154 = vpop.permute.xlu0 %153
    %v156 = vmul.f32 %v154, %v137
    %v157 = vmul.f32 %v154, %v138
    %v158 = vmul.f32 %v154, %v139
    %v159 = vmul.f32 %v154, %v140
    %v160 = vadd.f32 %v145, %v156
    %v161 = vadd.f32 %v146, %v157
    %v162 = vadd.f32 %v147, %v158
    %v163 = vadd.f32 %v148, %v159
    %v164 = vpack.c.bf16 %v160, %v160
    %v165 = vpack.c.bf16 %v161, %v161
    %v166 = vpack.c.bf16 %v162, %v162
    %v167 = vpack.c.bf16 %v163, %v163
    %vm168 = vcmask 60416
    %169 = vst.msk [vmem:[%s4] sm:$0xf] %vm168, %v164
    %170 = vst.msk [vmem:[%s4 + $0x4] sm:$0xf] %vm168, %v165
    %171 = vst.msk [vmem:[%s4 + $0x8] sm:$0xf] %vm168, %v166
    %172 = vst.msk [vmem:[%s4 + $0xc] sm:$0xf] %vm168, %v167
  $region25: #{discriminator_forward.15} parent=0 // pred_fallthru
    _
  // Predicated region
  $region26: #{discriminator_forward.15} parent=0 // pred_check
    _
  $region27: #{discriminator_forward.15} parent=0 // pred_check_branch
    %174 = sbr.rel (0) target = $region29
  $region28: #{discriminator_forward.15} parent=0 // pred_region
    _
  $region29: #{discriminator_forward.15} parent=0 // pred_fallthru
    _
  // Predicated region
  $region30: #{discriminator_forward.15} parent=0 // pred_check
    _
  $region31: #{discriminator_forward.15} parent=0 // pred_check_branch
    %176 = sbr.rel (0) target = $region33
  $region32: #{discriminator_forward.15} parent=0 // pred_region
    _
  $region33: #{discriminator_forward.15} parent=0 // pred_fallthru
    _

// kernel: discriminator_forward.16
$region0: #{discriminator_forward.16}
  #allocation0 [shape = 'u32[]', space=smem, size = 0x4, offset = 0x4, fixed_abs, tag = 'smem constant byte address 0x4 - core index']
  #allocation1 [shape = 'u32[72,128]{1,0:T(1,128)}', space=vmem, size = 0x9000, scoped, tag = 'internal scratch']
  #allocation2 [shape = 'f32[32,8]{1,0:T(8,128)}', space=vmem, size = 0x4000, scoped, tag = 'scratch operand']
  %s0 = inlined_call_operand.vmem [shape: bf16[32,72], index: 0, kind: input, shape index: {}]
  %s1 = inlined_call_operand.vmem [shape: bf16[72,8], index: 1, kind: input, shape index: {}]
  %s2 = inlined_call_operand.vmem [shape: f32[32,8], index: 2, kind: input, shape index: {}]
  %s3 = inlined_call_operand.vmem [shape: bf16[32,8], index: 3, kind: output, shape index: {}]
  %s4 = sld [smem:[#allocation0]]
  $region30: #{discriminator_forward.16} parent=0
    _
  %s6 = ssub.s32 1, %s4
  %s7 = scalar_select 0, %s6, %s4
  // Predicated region
  $region2: #{discriminator_forward.16} parent=0 // pred_check
    _
  $region3: #{discriminator_forward.16} parent=0 // pred_check_branch
    %9 = sbr.rel (0) target = $region5
  $region4: #{discriminator_forward.16} parent=0 // pred_region
    _
  $region5: #{discriminator_forward.16} parent=0 // pred_fallthru
    _
  // Predicated region
  $region6: #{discriminator_forward.16} parent=0 // pred_check
    _
  $region7: #{discriminator_forward.16} parent=0 // pred_check_branch
    %11 = sbr.rel (0) target = $region9
  $region8: #{discriminator_forward.16} parent=0 // pred_region
    _
  $region9: #{discriminator_forward.16} parent=0 // pred_fallthru
    _
  // Predicated region
  $region10: #{discriminator_forward.16} parent=0 // pred_check
    _
  $region11: #{discriminator_forward.16} parent=0 // pred_check_branch
    %13 = sbr.rel (0) target = $region13
  $region12: #{discriminator_forward.16} parent=0 // pred_region
    _
  $region13: #{discriminator_forward.16} parent=0 // pred_fallthru
    _
  %p15 = scmp.eq.s32.totalorder 0, 0
  // Predicated region
  $region14: #{discriminator_forward.16} parent=0 // pred_check
    %p16 = pneg %p15
  $region15: #{discriminator_forward.16} parent=0 // pred_check_branch
    %18 = sbr.rel (%p16) target = $region17
  $region16: #{discriminator_forward.16} parent=0 // pred_region
    %vm19 = vcmask 64512
    %20 = vst.msk [vmem:[#allocation2] sm:$0xff] %vm19, 0.0
    %21 = vst.msk [vmem:[#allocation2 + $0x8] sm:$0xff] %vm19, 0.0
    %22 = vst.msk [vmem:[#allocation2 + $0x10] sm:$0xff] %vm19, 0.0
    %23 = vst.msk [vmem:[#allocation2 + $0x18] sm:$0xff] %vm19, 0.0
  $region17: #{discriminator_forward.16} parent=0 // pred_fallthru
    _
  %v24 = vld [vmem:[%s0] sm:$0xf]
  %v25 = vld [vmem:[%s0 + $0x4] sm:$0xf]
  %v26 = vld [vmem:[%s0 + $0x8] sm:$0xf]
  %v27 = vld [vmem:[%s0 + $0xc] sm:$0xf]
  %v28 = vld [vmem:[#allocation2] sm:$0xff]
  %v29 = vld [vmem:[#allocation2 + $0x8] sm:$0xff]
  %v30 = vld [vmem:[#allocation2 + $0x10] sm:$0xff]
  %v31 = vld [vmem:[#allocation2 + $0x18] sm:$0xff]
  %v32 = vld [vmem:[%s1] sm:$0xf]
  %v33 = vld [vmem:[%s1 + $0x4] sm:$0xf]
  %v34 = vld [vmem:[%s1 + $0x8] sm:$0xf]
  %v35 = vld [vmem:[%s1 + $0xc] sm:$0xf]
  %v36 = vld [vmem:[%s1 + $0x10] sm:$0xf]
  %v37 = vld [vmem:[%s1 + $0x14] sm:$0xf]
  %v38 = vld [vmem:[%s1 + $0x18] sm:$0xf]
  %v39 = vld [vmem:[%s1 + $0x1c] sm:$0xf]
  %v40 = vld [vmem:[%s1 + $0x20] sm:$0xf]
  %v45 = vunpack.c.l.b16 %v24
  %v46 = vunpack.c.l.b16 %v25
  %v47 = vunpack.c.l.b16 %v26
  %v48 = vunpack.c.l.b16 %v27
  %v49 = vpack.c.b16 %v46, %v45
  %v50 = vpack.c.b16 %v48, %v47
  %v60 = vunpack.c.l.b16 %v32
  %v61 = vunpack.c.l.b16 %v33
  %v62 = vunpack.c.l.b16 %v34
  %v63 = vunpack.c.l.b16 %v35
  %v64 = vunpack.c.l.b16 %v36
  %v65 = vunpack.c.l.b16 %v37
  %v66 = vunpack.c.l.b16 %v38
  %v67 = vunpack.c.l.b16 %v39
  %v68 = vunpack.c.l.b16 %v40
  %v69 = vpack.c.b16 %v61, %v60
  %v70 = vpack.c.b16 %v63, %v62
  %v71 = vpack.c.b16 %v65, %v64
  %v72 = vpack.c.b16 %v67, %v66
  %v73 = vpack.c.b16 %v68, %v68
  %vm78 = vcmask 588800
  %v80 = vsel %vm78, %v49, 0
  %v83 = vsel %vm78, %v50, 0
  %vm85 = vcmask 1043456
  %v87 = vsel %vm85, %v73, 0
  %89 = vmatpush.bf16.msra.mxu0 0
  %90 = vmatpush.bf16.msra.mxu0 0
  %91 = vmatpush.bf16.msra.mxu0 0
  %92 = vmatpush.bf16.msra.mxu0 %v87
  %93 = vmatpush.bf16.msra.mxu0 %v72
  %94 = vmatpush.bf16.msra.mxu0 %v71
  %95 = vmatpush.bf16.msra.mxu0 %v70
  %96 = vmatpush.bf16.msra.mxu0 %v69
  %97 = vmatmul.bf16.gmra.mxu0 %v80
  %v98 = vpop.f32.mrf.mxu0
  %v99 = vadd.f32 0.0, %v98
  %v100 = vpop.f32.mrf.mxu0
  %v101 = vadd.f32 0.0, %v100
  %102 = vmatmul.bf16.gmra.mxu0 %v83
  %v103 = vpop.f32.mrf.mxu0
  %v104 = vadd.f32 0.0, %v103
  %v105 = vpop.f32.mrf.mxu0
  %v106 = vadd.f32 0.0, %v105
  %107 = vdwg.mxu0
  %v108 = vadd.f32 %v28, %v99
  %v109 = vadd.f32 %v29, %v101
  %v110 = vadd.f32 %v30, %v104
  %v111 = vadd.f32 %v31, %v106
  %vm112 = vcmask 64512
  %113 = vst.msk [vmem:[#allocation2] sm:$0xff] %vm112, %v108
  %114 = vst.msk [vmem:[#allocation2 + $0x8] sm:$0xff] %vm112, %v109
  %115 = vst.msk [vmem:[#allocation2 + $0x10] sm:$0xff] %vm112, %v110
  %116 = vst.msk [vmem:[#allocation2 + $0x18] sm:$0xff] %vm112, %v111
  // Predicated region
  $region18: #{discriminator_forward.16} parent=0 // pred_check
    %p117 = pneg %p15
  $region19: #{discriminator_forward.16} parent=0 // pred_check_branch
    %119 = sbr.rel (%p117) target = $region21
  $region20: #{discriminator_forward.16} parent=0 // pred_region
    %v120 = vld [vmem:[#allocation2] sm:$0xff]
    %v121 = vld [vmem:[#allocation2 + $0x8] sm:$0xff]
    %v122 = vld [vmem:[#allocation2 + $0x10] sm:$0xff]
    %v123 = vld [vmem:[#allocation2 + $0x18] sm:$0xff]
    %v124 = vld [vmem:[%s2] sm:$0xff]
    %v125 = vld [vmem:[%s2 + $0x8] sm:$0xff]
    %v126 = vld [vmem:[%s2 + $0x10] sm:$0xff]
    %v127 = vld [vmem:[%s2 + $0x18] sm:$0xff]
    %v128 = vadd.f32 %v120, %v124
    %v129 = vadd.f32 %v121, %v125
    %v130 = vadd.f32 %v122, %v126
    %v131 = vadd.f32 %v123, %v127
    %vm132 = vcmp.gt.f32.partialorder %v128, 0.0
    %vm133 = vcmp.gt.f32.partialorder %v129, 0.0
    %vm134 = vcmp.gt.f32.partialorder %v130, 0.0
    %vm135 = vcmp.gt.f32.partialorder %v131, 0.0
    %v136 = vmul.f32 %v128, 0.2
    %v137 = vmul.f32 %v129, 0.2
    %v138 = vmul.f32 %v130, 0.2
    %v139 = vmul.f32 %v131, 0.2
    %v140 = vsel %vm132, %v128, %v136
    %v141 = vsel %vm133, %v129, %v137
    %v142 = vsel %vm134, %v130, %v138
    %v143 = vsel %vm135, %v131, %v139
    %v144 = vpack.c.bf16 %v140, %v140
    %v145 = vpack.c.bf16 %v141, %v141
    %v146 = vpack.c.bf16 %v142, %v142
    %v147 = vpack.c.bf16 %v143, %v143
    %vm148 = vcmask 60416
    %149 = vst.msk [vmem:[%s3] sm:$0xf] %vm148, %v144
    %150 = vst.msk [vmem:[%s3 + $0x4] sm:$0xf] %vm148, %v145
    %151 = vst.msk [vmem:[%s3 + $0x8] sm:$0xf] %vm148, %v146
    %152 = vst.msk [vmem:[%s3 + $0xc] sm:$0xf] %vm148, %v147
  $region21: #{discriminator_forward.16} parent=0 // pred_fallthru
    _
  // Predicated region
  $region22: #{discriminator_forward.16} parent=0 // pred_check
    _
  $region23: #{discriminator_forward.16} parent=0 // pred_check_branch
    %154 = sbr.rel (0) target = $region25
  $region24: #{discriminator_forward.16} parent=0 // pred_region
    _
  $region25: #{discriminator_forward.16} parent=0 // pred_fallthru
    _
  // Predicated region
  $region26: #{discriminator_forward.16} parent=0 // pred_check
    _
  $region27: #{discriminator_forward.16} parent=0 // pred_check_branch
    %156 = sbr.rel (0) target = $region29
  $region28: #{discriminator_forward.16} parent=0 // pred_region
    _
  $region29: #{discriminator_forward.16} parent=0 // pred_fallthru
    _

// kernel: discriminator_forward.17
$region0: #{discriminator_forward.17}
  #allocation0 [shape = 'u32[]', space=smem, size = 0x4, offset = 0x4, fixed_abs, tag = 'smem constant byte address 0x4 - core index']
  #allocation1 [shape = 'u32[72,128]{1,0:T(1,128)}', space=vmem, size = 0x9000, scoped, tag = 'internal scratch']
  #allocation2 [shape = 'f32[8,1]{1,0:T(8,128)}', space=vmem, size = 0x1000, scoped, tag = 'scratch operand']
  %s0 = inlined_call_operand.vmem [shape: bf16[8,128], index: 0, kind: input, shape index: {}]
  %s1 = inlined_call_operand.vmem [shape: bf16[128,1], index: 1, kind: input, shape index: {}]
  %s2 = inlined_call_operand.vmem [shape: f32[8,1], index: 2, kind: output, shape index: {}]
  %s3 = sld [smem:[#allocation0]]
  $region26: #{discriminator_forward.17} parent=0
    _
  %s5 = ssub.s32 1, %s3
  %s6 = scalar_select 0, %s5, %s3
  // Predicated region
  $region2: #{discriminator_forward.17} parent=0 // pred_check
    _
  $region3: #{discriminator_forward.17} parent=0 // pred_check_branch
    %8 = sbr.rel (0) target = $region5
  $region4: #{discriminator_forward.17} parent=0 // pred_region
    _
  $region5: #{discriminator_forward.17} parent=0 // pred_fallthru
    _
  // Predicated region
  $region6: #{discriminator_forward.17} parent=0 // pred_check
    _
  $region7: #{discriminator_forward.17} parent=0 // pred_check_branch
    %10 = sbr.rel (0) target = $region9
  $region8: #{discriminator_forward.17} parent=0 // pred_region
    _
  $region9: #{discriminator_forward.17} parent=0 // pred_fallthru
    _
  %p11 = scmp.eq.s32.totalorder 0, 0
  // Predicated region
  $region10: #{discriminator_forward.17} parent=0 // pred_check
    %p12 = pneg %p11
  $region11: #{discriminator_forward.17} parent=0 // pred_check_branch
    %14 = sbr.rel (%p12) target = $region13
  $region12: #{discriminator_forward.17} parent=0 // pred_region
    %vm15 = vcmask 7168
    %16 = vst.msk [vmem:[#allocation2] sm:$0xff] %vm15, 0.0
  $region13: #{discriminator_forward.17} parent=0 // pred_fallthru
    _
  %v17 = vld [vmem:[%s0] sm:$0xf]
  %v18 = vld [vmem:[#allocation2] sm:$0xff]
  %v19 = vld [vmem:[%s1] sm:$0xf]
  %v20 = vld [vmem:[%s1 + $0x4] sm:$0xf]
  %v21 = vld [vmem:[%s1 + $0x8] sm:$0xf]
  %v22 = vld [vmem:[%s1 + $0xc] sm:$0xf]
  %v23 = vld [vmem:[%s1 + $0x10] sm:$0xf]
  %v24 = vld [vmem:[%s1 + $0x14] sm:$0xf]
  %v25 = vld [vmem:[%s1 + $0x18] sm:$0xf]
  %v26 = vld [vmem:[%s1 + $0x1c] sm:$0xf]
  %v27 = vld [vmem:[%s1 + $0x20] sm:$0xf]
  %v28 = vld [vmem:[%s1 + $0x24] sm:$0xf]
  %v29 = vld [vmem:[%s1 + $0x28] sm:$0xf]
  %v30 = vld [vmem:[%s1 + $0x2c] sm:$0xf]
  %v31 = vld [vmem:[%s1 + $0x30] sm:$0xf]
  %v32 = vld [vmem:[%s1 + $0x34] sm:$0xf]
  %v33 = vld [vmem:[%s1 + $0x38] sm:$0xf]
  %v34 = vld [vmem:[%s1 + $0x3c] sm:$0xf]
  %v51 = vunpack.c.l.b16 %v19
  %v52 = vunpack.c.l.b16 %v20
  %v53 = vunpack.c.l.b16 %v21
  %v54 = vunpack.c.l.b16 %v22
  %v55 = vunpack.c.l.b16 %v23
  %v56 = vunpack.c.l.b16 %v24
  %v57 = vunpack.c.l.b16 %v25
  %v58 = vunpack.c.l.b16 %v26
  %v59 = vunpack.c.l.b16 %v27
  %v60 = vunpack.c.l.b16 %v28
  %v61 = vunpack.c.l.b16 %v29
  %v62 = vunpack.c.l.b16 %v30
  %v63 = vunpack.c.l.b16 %v31
  %v64 = vunpack.c.l.b16 %v32
  %v65 = vunpack.c.l.b16 %v33
  %v66 = vunpack.c.l.b16 %v34
  %v67 = vpack.c.b16 %v52, %v51
  %v68 = vpack.c.b16 %v54, %v53
  %v69 = vpack.c.b16 %v56, %v55
  %v70 = vpack.c.b16 %v58, %v57
  %v71 = vpack.c.b16 %v60, %v59
  %v72 = vpack.c.b16 %v62, %v61
  %v73 = vpack.c.b16 %v64, %v63
  %v74 = vpack.c.b16 %v66, %v65
  %83 = vmatpush.bf16.msra.mxu0 %v74
  %84 = vmatpush.bf16.msra.mxu0 %v73
  %85 = vmatpush.bf16.msra.mxu0 %v72
  %86 = vmatpush.bf16.msra.mxu0 %v71
  %87 = vmatpush.bf16.msra.mxu0 %v70
  %88 = vmatpush.bf16.msra.mxu0 %v69
  %89 = vmatpush.bf16.msra.mxu0 %v68
  %90 = vmatpush.bf16.msra.mxu0 %v67
  %91 = vmatmul.bf16.gmra.mxu0 %v17
  %v92 = vpop.f32.mrf.mxu0
  %v93 = vadd.f32 0.0, %v92
  %v94 = vpop.f32.mrf.mxu0
  %95 = vdwg.mxu0
  %v96 = vadd.f32 %v18, %v93
  %vm97 = vcmask 7168
  %98 = vst.msk [vmem:[#allocation2] sm:$0xff] %vm97, %v96
  // Predicated region
  $region14: #{discriminator_forward.17} parent=0 // pred_check
    %p99 = pneg %p11
  $region15: #{discriminator_forward.17} parent=0 // pred_check_branch
    %101 = sbr.rel (%p99) target = $region17
  $region16: #{discriminator_forward.17} parent=0 // pred_region
    %v102 = vld [vmem:[#allocation2] sm:$0xff]
    %103 = vst.msk [vmem:[%s2] sm:$0xff] %vm97, %v102
  $region17: #{discriminator_forward.17} parent=0 // pred_fallthru
    _
  // Predicated region
  $region18: #{discriminator_forward.17} parent=0 // pred_check
    _
  $region19: #{discriminator_forward.17} parent=0 // pred_check_branch
    %105 = sbr.rel (0) target = $region21
  $region20: #{discriminator_forward.17} parent=0 // pred_region
    _
  $region21: #{discriminator_forward.17} parent=0 // pred_fallthru
    _
  // Predicated region
  $region22: #{discriminator_forward.17} parent=0 // pred_check
    _
  $region23: #{discriminator_forward.17} parent=0 // pred_check_branch
    %107 = sbr.rel (0) target = $region25
  $region24: #{discriminator_forward.17} parent=0 // pred_region
    _
  $region25: #{discriminator_forward.17} parent=0 // pred_fallthru
    _

</llo_original>
